<compile_context>
chip_gen: v6e
topology: v6e:2x2x1
jax: 0.10.0
libtpu: 0.0.40
codegen_flags: <defaults>
</compile_context>

<pallas_src>
import functools

import jax
import jax.numpy as jnp
from jax.experimental import pallas as pl
from jax.experimental.pallas import tpu as pltpu


_LANE_TILE = 512  # lane tile over the flattened B*Ho*Wo dimension


def _round_up(x, m):
    return ((x + m - 1) // m) * m


# ---------------------------------------------------------------------------
# Fused im2col-GEMM + (bias/BatchNorm folded) scale/shift + activation kernel
# ---------------------------------------------------------------------------
def _fused_conv_gemm_kernel(p_ref, w_ref, scale_ref, shift_ref, out_ref, *, act):
    """out = act( (W @ P) * scale + shift )

    p_ref:     (K, TN)         im2col patch tile     (K = kh*kw*Cin)
    w_ref:     (Cpad, K)       conv weights as GEMM matrix (resident)
    scale_ref: (Cpad, 1)       folded BatchNorm scale
    shift_ref: (Cpad, 1)       folded conv-bias + BatchNorm shift
    out_ref:   (Cpad, TN)      lane-dense output tile
    """
    # (Cpad, K) @ (K, TN): contraction feeds the MXU with no in-kernel transpose.
    acc = jnp.dot(w_ref[...], p_ref[...], preferred_element_type=jnp.float32)
    y = acc * scale_ref[...] + shift_ref[...]
    if act == "silu":
        y = y * (1.0 / (1.0 + jnp.exp(-y)))
    elif act == "sigmoid":
        y = 1.0 / (1.0 + jnp.exp(-y))
    out_ref[...] = y.astype(out_ref.dtype)


# ---------------------------------------------------------------------------
# Conv2d (VALID, stride s) + eval-BatchNorm + activation, via the Pallas kernel
# ---------------------------------------------------------------------------
def _conv2d_bn_act(x, w, b, bn, *, stride, act):
    """x: (B,Cin,H,W); w: (Cout,Cin,kh,kw) [PyTorch Conv2d layout]; b: (Cout,)
    bn: None or (gamma, beta, running_mean, running_var, eps)."""
    B, Cin, H, W = x.shape
    Cout, _, kh, kw = w.shape
    Ho = (H - kh) // stride + 1
    Wo = (W - kw) // stride + 1

    # --- im2col: wrapper-side layout plumbing (pure data movement, no FLOPs) ---
    cols = []
    for dy in range(kh):
        for dx in range(kw):
            cols.append(
                x[:, :,
                  dy:dy + stride * (Ho - 1) + 1:stride,
                  dx:dx + stride * (Wo - 1) + 1:stride])
    # (kh*kw, Cin, B, Ho, Wo) -> (K, N): the big flattened B*Ho*Wo axis is last (lanes).
    patches = jnp.stack(cols, axis=0).transpose(0, 2, 1, 3, 4)
    K = kh * kw * Cin
    N = B * Ho * Wo
    P = patches.reshape(K, N)

    tn = _LANE_TILE
    n_pad = _round_up(N, tn)
    P = jnp.pad(P, ((0, 0), (0, n_pad - N)))

    # GEMM weight (Cout, K), row-padded to a sublane multiple of 8.
    c_pad = _round_up(Cout, 8)
    w_mat = w.transpose(0, 2, 3, 1).reshape(Cout, K)
    w_mat = jnp.pad(w_mat, ((0, c_pad - Cout), (0, 0)))

    # Fold conv bias + eval-mode BatchNorm into a single scale/shift pair.
    if bn is None:
        scale = jnp.ones((Cout,), x.dtype)
        shift = b
    else:
        gamma, beta, mean, var, eps = bn
        scale = gamma / jnp.sqrt(var + eps)
        shift = (b - mean) * scale + beta
    scale = jnp.pad(scale, (0, c_pad - Cout)).reshape(c_pad, 1).astype(x.dtype)
    shift = jnp.pad(shift, (0, c_pad - Cout)).reshape(c_pad, 1).astype(x.dtype)

    out = pl.pallas_call(
        functools.partial(_fused_conv_gemm_kernel, act=act),
        out_shape=jax.ShapeDtypeStruct((c_pad, n_pad), x.dtype),
        grid_spec=pltpu.PrefetchScalarGridSpec(
            num_scalar_prefetch=0,
            grid=(n_pad // tn,),
            in_specs=[
                pl.BlockSpec((K, tn), lambda n: (0, n)),      # patch tile (streams)
                pl.BlockSpec((c_pad, K), lambda n: (0, 0)),   # weights (resident)
                pl.BlockSpec((c_pad, 1), lambda n: (0, 0)),   # scale (resident)
                pl.BlockSpec((c_pad, 1), lambda n: (0, 0)),   # shift (resident)
            ],
            out_specs=pl.BlockSpec((c_pad, tn), lambda n: (0, n)),
        ),
        compiler_params=pltpu.CompilerParams(
            dimension_semantics=("parallel",),
        ),
    )(P, w_mat, scale, shift)

    # Un-pad and restore NCHW.
    y = out[:Cout, :N].reshape(Cout, B, Ho, Wo).transpose(1, 0, 2, 3)
    return y


# ---------------------------------------------------------------------------
# ConvTranspose2d (padding=0) expressed as zero-dilate + pad + stride-1 conv
# with the flipped / channel-swapped kernel (same fused Pallas kernel).
# ---------------------------------------------------------------------------
def _convT2d_bn_act(x, w, b, bn, *, stride, output_padding, act):
    """x: (B,Cin,H,W); w: (Cin,Cout,kh,kw) [PyTorch ConvTranspose2d layout]."""
    B, Cin, H, W = x.shape
    kh, kw = w.shape[2], w.shape[3]
    if stride > 1:
        hd = (H - 1) * stride + 1
        wd = (W - 1) * stride + 1
        xd = jnp.zeros((B, Cin, hd, wd), x.dtype)
        xd = xd.at[:, :, ::stride, ::stride].set(x)
    else:
        xd = x
    xp = jnp.pad(
        xd,
        ((0, 0), (0, 0),
         (kh - 1, kh - 1 + output_padding),
         (kw - 1, kw - 1 + output_padding)))
    w_eq = jnp.flip(w, axis=(2, 3)).transpose(1, 0, 2, 3)   # (Cout, Cin, kh, kw)
    return _conv2d_bn_act(xp, w_eq, b, bn, stride=1, act=act)


# ---------------------------------------------------------------------------
# AutoEncoder forward
# ---------------------------------------------------------------------------
def autoencoder_forward(params, x):
    # Encoder
    h = _conv2d_bn_act(x, params["enc1_w"], params["enc1_b"], params["bn1"],
                       stride=1, act="silu")
    h = _conv2d_bn_act(h, params["enc2_w"], params["enc2_b"], params["bn2"],
                       stride=2, act="silu")
    h = _conv2d_bn_act(h, params["enc3_w"], params["enc3_b"], params["bn3"],
                       stride=1, act="none")
    # Decoder
    h = _convT2d_bn_act(h, params["dec1_w"], params["dec1_b"], params["bn4"],
                        stride=1, output_padding=0, act="silu")
    h = _convT2d_bn_act(h, params["dec2_w"], params["dec2_b"], params["bn5"],
                        stride=2, output_padding=1, act="silu")
    h = _convT2d_bn_act(h, params["dec3_w"], params["dec3_b"], None,
                        stride=1, output_padding=0, act="sigmoid")
    return h


# ---------------------------------------------------------------------------
# Pure-JAX reference (XLA convolutions) for correctness checking
# ---------------------------------------------------------------------------
def _ref_conv(x, w, b, stride):
    y = jax.lax.conv_general_dilated(
        x, w, window_strides=(stride, stride), padding="VALID",
        dimension_numbers=("NCHW", "OIHW", "NCHW"),
        precision=jax.lax.Precision.HIGHEST)
    return y + b[None, :, None, None]


def _ref_convT(x, w, b, stride, output_padding):
    kh, kw = w.shape[2], w.shape[3]
    w_eq = jnp.flip(w, axis=(2, 3)).transpose(1, 0, 2, 3)
    y = jax.lax.conv_general_dilated(
        x, w_eq, window_strides=(1, 1),
        padding=((kh - 1, kh - 1 + output_padding),
                 (kw - 1, kw - 1 + output_padding)),
        lhs_dilation=(stride, stride),
        dimension_numbers=("NCHW", "OIHW", "NCHW"),
        precision=jax.lax.Precision.HIGHEST)
    return y + b[None, :, None, None]


def _ref_bn(x, bn):
    gamma, beta, mean, var, eps = bn
    inv = 1.0 / jnp.sqrt(var + eps)
    return ((x - mean[None, :, None, None]) * inv[None, :, None, None]
            * gamma[None, :, None, None] + beta[None, :, None, None])


def _ref_silu(x):
    return x * jax.nn.sigmoid(x)


def _reference_forward(params, x):
    h = _ref_silu(_ref_bn(_ref_conv(x, params["enc1_w"], params["enc1_b"], 1), params["bn1"]))
    h = _ref_silu(_ref_bn(_ref_conv(h, params["enc2_w"], params["enc2_b"], 2), params["bn2"]))
    h = _ref_bn(_ref_conv(h, params["enc3_w"], params["enc3_b"], 1), params["bn3"])
    h = _ref_silu(_ref_bn(_ref_convT(h, params["dec1_w"], params["dec1_b"], 1, 0), params["bn4"]))
    h = _ref_silu(_ref_bn(_ref_convT(h, params["dec2_w"], params["dec2_b"], 2, 1), params["bn5"]))
    h = jax.nn.sigmoid(_ref_convT(h, params["dec3_w"], params["dec3_b"], 1, 0))
    return h


# ---------------------------------------------------------------------------
# Deterministic parameter init (PyTorch-Linear-style uniform; eval-mode BN stats)
# ---------------------------------------------------------------------------
def _init_params(key):
    channels = [4, 8, 32]

    def conv_init(k, cout, cin, ks):
        k1, k2 = jax.random.split(k)
        bound = 1.0 / (cin * ks * ks) ** 0.5
        w = jax.random.uniform(k1, (cout, cin, ks, ks), jnp.float32, -bound, bound)
        b = jax.random.uniform(k2, (cout,), jnp.float32, -bound, bound)
        return w, b

    def convT_init(k, cin, cout, ks):
        k1, k2 = jax.random.split(k)
        bound = 1.0 / (cout * ks * ks) ** 0.5
        w = jax.random.uniform(k1, (cin, cout, ks, ks), jnp.float32, -bound, bound)
        b = jax.random.uniform(k2, (cout,), jnp.float32, -bound, bound)
        return w, b

    def bn_init(k, c):
        k1, k2, k3, k4 = jax.random.split(k, 4)
        gamma = jax.random.uniform(k1, (c,), jnp.float32, 0.5, 1.5)
        beta = jax.random.uniform(k2, (c,), jnp.float32, -0.2, 0.2)
        mean = jax.random.uniform(k3, (c,), jnp.float32, -0.2, 0.2)
        var = jax.random.uniform(k4, (c,), jnp.float32, 0.5, 1.5)
        return (gamma, beta, mean, var, jnp.float32(1e-5))

    ks = jax.random.split(key, 11)
    p = {}
    p["enc1_w"], p["enc1_b"] = conv_init(ks[0], channels[0], 1, 3)
    p["bn1"] = bn_init(ks[1], channels[0])
    p["enc2_w"], p["enc2_b"] = conv_init(ks[2], channels[1], channels[0], 3)
    p["bn2"] = bn_init(ks[3], channels[1])
    p["enc3_w"], p["enc3_b"] = conv_init(ks[4], channels[2], channels[1], 3)
    p["bn3"] = bn_init(ks[5], channels[2])
    p["dec1_w"], p["dec1_b"] = convT_init(ks[6], channels[2], channels[1], 3)
    p["bn4"] = bn_init(ks[7], channels[1])
    p["dec2_w"], p["dec2_b"] = convT_init(ks[8], channels[1], channels[0], 3)
    p["bn5"] = bn_init(ks[9], channels[0])
    p["dec3_w"], p["dec3_b"] = convT_init(ks[10], channels[0], 1, 3)
    return p


if __name__ == "__main__":
    key = jax.random.PRNGKey(0)
    k_params, k_x = jax.random.split(key)
    params = _init_params(k_params)

    # MNIST-sized input, consistent with sdiff.py usage of this module.
    B, H, W = 2, 28, 28
    x = jax.random.normal(k_x, (B, 1, H, W), dtype=jnp.float32)

    fwd = jax.jit(autoencoder_forward)
    out = jax.block_until_ready(fwd(params, x))

    ref = jax.block_until_ready(_reference_forward(params, x))
    assert out.shape == (B, 1, H, W), out.shape
    max_err = float(jnp.max(jnp.abs(out - ref)))
    assert jnp.allclose(out, ref, atol=5e-3, rtol=5e-3), f"mismatch vs reference: {max_err}"

    print("KERNEL_OK")
</pallas_src>

<mosaic_0001>
module attributes {stable_mosaic.version = 11 : i64} {
  func.func @_fused_conv_gemm_kernel(%arg0: i32, %arg1: memref<9x512xf32, #tpu.memory_space<vmem>>, %arg2: memref<8x9xf32, #tpu.memory_space<vmem>>, %arg3: memref<8x1xf32, #tpu.memory_space<vmem>>, %arg4: memref<8x1xf32, #tpu.memory_space<vmem>>, %arg5: memref<8x512xf32, #tpu.memory_space<vmem>>) attributes {dimension_semantics = [#tpu.dimension_semantics<parallel>], iteration_bounds = array<i64: 3>, scalar_prefetch = 0 : i64, scratch_operands = 0 : i64, tpu.core_type = #tpu.core_type<tc>, window_params = [{transform_indices = @transform_0, window_bounds = array<i64: 9, 512>}, {pipeline_mode = #tpu.pipeline_mode<synchronous>, transform_indices = @transform_1, window_bounds = array<i64: 8, 9>}, {pipeline_mode = #tpu.pipeline_mode<synchronous>, transform_indices = @transform_2, window_bounds = array<i64: 8, 1>}, {pipeline_mode = #tpu.pipeline_mode<synchronous>, transform_indices = @transform_3, window_bounds = array<i64: 8, 1>}, {transform_indices = @transform_4, window_bounds = array<i64: 8, 512>}]} {
    %c0 = arith.constant 0 : index
    %c0_0 = arith.constant 0 : index
    %0 = vector.load %arg2[%c0, %c0_0] : memref<8x9xf32, #tpu.memory_space<vmem>>, vector<8x9xf32>
    %c0_1 = arith.constant 0 : index
    %c0_2 = arith.constant 0 : index
    %1 = vector.load %arg1[%c0_1, %c0_2] : memref<9x512xf32, #tpu.memory_space<vmem>>, vector<9x512xf32>
    %cst = arith.constant dense<0.000000e+00> : vector<8x512xf32>
    %2 = tpu.matmul %0, %1, %cst {dimension_numbers = #tpu.dot_dimension_numbers<[1], [0], [0], [1], [0, 0, 1, 1], [], []>} : vector<8x9xf32>, vector<9x512xf32>, vector<8x512xf32> -> vector<8x512xf32>
    %c0_3 = arith.constant 0 : index
    %c0_4 = arith.constant 0 : index
    %3 = vector.load %arg3[%c0_3, %c0_4] : memref<8x1xf32, #tpu.memory_space<vmem>>, vector<8x1xf32>
    %4 = vector.broadcast %3 : vector<8x1xf32> to vector<8x512xf32>
    %5 = arith.mulf %2, %4 : vector<8x512xf32>
    %c0_5 = arith.constant 0 : index
    %c0_6 = arith.constant 0 : index
    %6 = vector.load %arg4[%c0_5, %c0_6] : memref<8x1xf32, #tpu.memory_space<vmem>>, vector<8x1xf32>
    %7 = vector.broadcast %6 : vector<8x1xf32> to vector<8x512xf32>
    %8 = arith.addf %5, %7 : vector<8x512xf32>
    %cst_7 = arith.constant 0.000000e+00 : f32
    %9 = vector.broadcast %cst_7 : f32 to vector<8x512xf32>
    %10 = arith.subf %9, %8 : vector<8x512xf32>
    %11 = math.exp %10 : vector<8x512xf32>
    %cst_8 = arith.constant 1.000000e+00 : f32
    %12 = vector.broadcast %cst_8 : f32 to vector<8x512xf32>
    %13 = arith.addf %12, %11 : vector<8x512xf32>
    %cst_9 = arith.constant 1.000000e+00 : f32
    %14 = vector.broadcast %cst_9 : f32 to vector<8x512xf32>
    %15 = arith.divf %14, %13 : vector<8x512xf32>
    %16 = arith.mulf %8, %15 : vector<8x512xf32>
    %c0_10 = arith.constant 0 : index
    %c0_11 = arith.constant 0 : index
    %17 = vector.load %arg5[%c0_10, %c0_11] : memref<8x512xf32, #tpu.memory_space<vmem>>, vector<8x512xf32>
    tpu.vector_store %arg5[%c0_10, %c0_11], %16 {strides = array<i32>} : memref<8x512xf32, #tpu.memory_space<vmem>>, vector<8x512xf32>,
    return
  }
  func.func @transform_0(%arg0: i32) -> (i32, i32) {
    %c0_i32 = arith.constant 0 : i32
    %c0_i32_0 = arith.constant 0 : i32
    return %c0_i32, %arg0 : i32, i32
  }
  func.func @transform_1(%arg0: i32) -> (i32, i32) {
    %c0_i32 = arith.constant 0 : i32
    %c0_i32_0 = arith.constant 0 : i32
    %c0_i32_1 = arith.constant 0 : i32
    return %c0_i32, %c0_i32_0 : i32, i32
  }
  func.func @transform_2(%arg0: i32) -> (i32, i32) {
    %c0_i32 = arith.constant 0 : i32
    %c0_i32_0 = arith.constant 0 : i32
    %c0_i32_1 = arith.constant 0 : i32
    return %c0_i32, %c0_i32_0 : i32, i32
  }
  func.func @transform_3(%arg0: i32) -> (i32, i32) {
    %c0_i32 = arith.constant 0 : i32
    %c0_i32_0 = arith.constant 0 : i32
    %c0_i32_1 = arith.constant 0 : i32
    return %c0_i32, %c0_i32_0 : i32, i32
  }
  func.func @transform_4(%arg0: i32) -> (i32, i32) {
    %c0_i32 = arith.constant 0 : i32
    %c0_i32_0 = arith.constant 0 : i32
    return %c0_i32, %arg0 : i32, i32
  }
}

module attributes {stable_mosaic.version = 11 : i64} {
  func.func @_fused_conv_gemm_kernel(%arg0: i32, %arg1: memref<36x512xf32, #tpu.memory_space<vmem>>, %arg2: memref<8x36xf32, #tpu.memory_space<vmem>>, %arg3: memref<8x1xf32, #tpu.memory_space<vmem>>, %arg4: memref<8x1xf32, #tpu.memory_space<vmem>>, %arg5: memref<8x512xf32, #tpu.memory_space<vmem>>) attributes {dimension_semantics = [#tpu.dimension_semantics<parallel>], iteration_bounds = array<i64: 1>, scalar_prefetch = 0 : i64, scratch_operands = 0 : i64, tpu.core_type = #tpu.core_type<tc>, window_params = [{transform_indices = @transform_0, window_bounds = array<i64: 36, 512>}, {pipeline_mode = #tpu.pipeline_mode<synchronous>, transform_indices = @transform_1, window_bounds = array<i64: 8, 36>}, {pipeline_mode = #tpu.pipeline_mode<synchronous>, transform_indices = @transform_2, window_bounds = array<i64: 8, 1>}, {pipeline_mode = #tpu.pipeline_mode<synchronous>, transform_indices = @transform_3, window_bounds = array<i64: 8, 1>}, {transform_indices = @transform_4, window_bounds = array<i64: 8, 512>}]} {
    %c0 = arith.constant 0 : index
    %c0_0 = arith.constant 0 : index
    %0 = vector.load %arg2[%c0, %c0_0] : memref<8x36xf32, #tpu.memory_space<vmem>>, vector<8x36xf32>
    %c0_1 = arith.constant 0 : index
    %c0_2 = arith.constant 0 : index
    %1 = vector.load %arg1[%c0_1, %c0_2] : memref<36x512xf32, #tpu.memory_space<vmem>>, vector<36x512xf32>
    %cst = arith.constant dense<0.000000e+00> : vector<8x512xf32>
    %2 = tpu.matmul %0, %1, %cst {dimension_numbers = #tpu.dot_dimension_numbers<[1], [0], [0], [1], [0, 0, 1, 1], [], []>} : vector<8x36xf32>, vector<36x512xf32>, vector<8x512xf32> -> vector<8x512xf32>
    %c0_3 = arith.constant 0 : index
    %c0_4 = arith.constant 0 : index
    %3 = vector.load %arg3[%c0_3, %c0_4] : memref<8x1xf32, #tpu.memory_space<vmem>>, vector<8x1xf32>
    %4 = vector.broadcast %3 : vector<8x1xf32> to vector<8x512xf32>
    %5 = arith.mulf %2, %4 : vector<8x512xf32>
    %c0_5 = arith.constant 0 : index
    %c0_6 = arith.constant 0 : index
    %6 = vector.load %arg4[%c0_5, %c0_6] : memref<8x1xf32, #tpu.memory_space<vmem>>, vector<8x1xf32>
    %7 = vector.broadcast %6 : vector<8x1xf32> to vector<8x512xf32>
    %8 = arith.addf %5, %7 : vector<8x512xf32>
    %cst_7 = arith.constant 0.000000e+00 : f32
    %9 = vector.broadcast %cst_7 : f32 to vector<8x512xf32>
    %10 = arith.subf %9, %8 : vector<8x512xf32>
    %11 = math.exp %10 : vector<8x512xf32>
    %cst_8 = arith.constant 1.000000e+00 : f32
    %12 = vector.broadcast %cst_8 : f32 to vector<8x512xf32>
    %13 = arith.addf %12, %11 : vector<8x512xf32>
    %cst_9 = arith.constant 1.000000e+00 : f32
    %14 = vector.broadcast %cst_9 : f32 to vector<8x512xf32>
    %15 = arith.divf %14, %13 : vector<8x512xf32>
    %16 = arith.mulf %8, %15 : vector<8x512xf32>
    %c0_10 = arith.constant 0 : index
    %c0_11 = arith.constant 0 : index
    %17 = vector.load %arg5[%c0_10, %c0_11] : memref<8x512xf32, #tpu.memory_space<vmem>>, vector<8x512xf32>
    tpu.vector_store %arg5[%c0_10, %c0_11], %16 {strides = array<i32>} : memref<8x512xf32, #tpu.memory_space<vmem>>, vector<8x512xf32>,
    return
  }
  func.func @transform_0(%arg0: i32) -> (i32, i32) {
    %c0_i32 = arith.constant 0 : i32
    %c0_i32_0 = arith.constant 0 : i32
    return %c0_i32, %arg0 : i32, i32
  }
  func.func @transform_1(%arg0: i32) -> (i32, i32) {
    %c0_i32 = arith.constant 0 : i32
    %c0_i32_0 = arith.constant 0 : i32
    %c0_i32_1 = arith.constant 0 : i32
    return %c0_i32, %c0_i32_0 : i32, i32
  }
  func.func @transform_2(%arg0: i32) -> (i32, i32) {
    %c0_i32 = arith.constant 0 : i32
    %c0_i32_0 = arith.constant 0 : i32
    %c0_i32_1 = arith.constant 0 : i32
    return %c0_i32, %c0_i32_0 : i32, i32
  }
  func.func @transform_3(%arg0: i32) -> (i32, i32) {
    %c0_i32 = arith.constant 0 : i32
    %c0_i32_0 = arith.constant 0 : i32
    %c0_i32_1 = arith.constant 0 : i32
    return %c0_i32, %c0_i32_0 : i32, i32
  }
  func.func @transform_4(%arg0: i32) -> (i32, i32) {
    %c0_i32 = arith.constant 0 : i32
    %c0_i32_0 = arith.constant 0 : i32
    return %c0_i32, %arg0 : i32, i32
  }
}

module attributes {stable_mosaic.version = 11 : i64} {
  func.func @_fused_conv_gemm_kernel(%arg0: i32, %arg1: memref<72x512xf32, #tpu.memory_space<vmem>>, %arg2: memref<32x72xf32, #tpu.memory_space<vmem>>, %arg3: memref<32x1xf32, #tpu.memory_space<vmem>>, %arg4: memref<32x1xf32, #tpu.memory_space<vmem>>, %arg5: memref<32x512xf32, #tpu.memory_space<vmem>>) attributes {dimension_semantics = [#tpu.dimension_semantics<parallel>], iteration_bounds = array<i64: 1>, scalar_prefetch = 0 : i64, scratch_operands = 0 : i64, tpu.core_type = #tpu.core_type<tc>, window_params = [{transform_indices = @transform_0, window_bounds = array<i64: 72, 512>}, {pipeline_mode = #tpu.pipeline_mode<synchronous>, transform_indices = @transform_1, window_bounds = array<i64: 32, 72>}, {pipeline_mode = #tpu.pipeline_mode<synchronous>, transform_indices = @transform_2, window_bounds = array<i64: 32, 1>}, {pipeline_mode = #tpu.pipeline_mode<synchronous>, transform_indices = @transform_3, window_bounds = array<i64: 32, 1>}, {transform_indices = @transform_4, window_bounds = array<i64: 32, 512>}]} {
    %c0 = arith.constant 0 : index
    %c0_0 = arith.constant 0 : index
    %0 = vector.load %arg2[%c0, %c0_0] : memref<32x72xf32, #tpu.memory_space<vmem>>, vector<32x72xf32>
    %c0_1 = arith.constant 0 : index
    %c0_2 = arith.constant 0 : index
    %1 = vector.load %arg1[%c0_1, %c0_2] : memref<72x512xf32, #tpu.memory_space<vmem>>, vector<72x512xf32>
    %cst = arith.constant dense<0.000000e+00> : vector<32x512xf32>
    %2 = tpu.matmul %0, %1, %cst {dimension_numbers = #tpu.dot_dimension_numbers<[1], [0], [0], [1], [0, 0, 1, 1], [], []>} : vector<32x72xf32>, vector<72x512xf32>, vector<32x512xf32> -> vector<32x512xf32>
    %c0_3 = arith.constant 0 : index
    %c0_4 = arith.constant 0 : index
    %3 = vector.load %arg3[%c0_3, %c0_4] : memref<32x1xf32, #tpu.memory_space<vmem>>, vector<32x1xf32>
    %4 = vector.broadcast %3 : vector<32x1xf32> to vector<32x512xf32>
    %5 = arith.mulf %2, %4 : vector<32x512xf32>
    %c0_5 = arith.constant 0 : index
    %c0_6 = arith.constant 0 : index
    %6 = vector.load %arg4[%c0_5, %c0_6] : memref<32x1xf32, #tpu.memory_space<vmem>>, vector<32x1xf32>
    %7 = vector.broadcast %6 : vector<32x1xf32> to vector<32x512xf32>
    %8 = arith.addf %5, %7 : vector<32x512xf32>
    %c0_7 = arith.constant 0 : index
    %c0_8 = arith.constant 0 : index
    %9 = vector.load %arg5[%c0_7, %c0_8] : memref<32x512xf32, #tpu.memory_space<vmem>>, vector<32x512xf32>
    tpu.vector_store %arg5[%c0_7, %c0_8], %8 {strides = array<i32>} : memref<32x512xf32, #tpu.memory_space<vmem>>, vector<32x512xf32>,
    return
  }
  func.func @transform_0(%arg0: i32) -> (i32, i32) {
    %c0_i32 = arith.constant 0 : i32
    %c0_i32_0 = arith.constant 0 : i32
    return %c0_i32, %arg0 : i32, i32
  }
  func.func @transform_1(%arg0: i32) -> (i32, i32) {
    %c0_i32 = arith.constant 0 : i32
    %c0_i32_0 = arith.constant 0 : i32
    %c0_i32_1 = arith.constant 0 : i32
    return %c0_i32, %c0_i32_0 : i32, i32
  }
  func.func @transform_2(%arg0: i32) -> (i32, i32) {
    %c0_i32 = arith.constant 0 : i32
    %c0_i32_0 = arith.constant 0 : i32
    %c0_i32_1 = arith.constant 0 : i32
    return %c0_i32, %c0_i32_0 : i32, i32
  }
  func.func @transform_3(%arg0: i32) -> (i32, i32) {
    %c0_i32 = arith.constant 0 : i32
    %c0_i32_0 = arith.constant 0 : i32
    %c0_i32_1 = arith.constant 0 : i32
    return %c0_i32, %c0_i32_0 : i32, i32
  }
  func.func @transform_4(%arg0: i32) -> (i32, i32) {
    %c0_i32 = arith.constant 0 : i32
    %c0_i32_0 = arith.constant 0 : i32
    return %c0_i32, %arg0 : i32, i32
  }
}

module attributes {stable_mosaic.version = 11 : i64} {
  func.func @_fused_conv_gemm_kernel(%arg0: i32, %arg1: memref<288x512xf32, #tpu.memory_space<vmem>>, %arg2: memref<8x288xf32, #tpu.memory_space<vmem>>, %arg3: memref<8x1xf32, #tpu.memory_space<vmem>>, %arg4: memref<8x1xf32, #tpu.memory_space<vmem>>, %arg5: memref<8x512xf32, #tpu.memory_space<vmem>>) attributes {dimension_semantics = [#tpu.dimension_semantics<parallel>], iteration_bounds = array<i64: 1>, scalar_prefetch = 0 : i64, scratch_operands = 0 : i64, tpu.core_type = #tpu.core_type<tc>, window_params = [{transform_indices = @transform_0, window_bounds = array<i64: 288, 512>}, {pipeline_mode = #tpu.pipeline_mode<synchronous>, transform_indices = @transform_1, window_bounds = array<i64: 8, 288>}, {pipeline_mode = #tpu.pipeline_mode<synchronous>, transform_indices = @transform_2, window_bounds = array<i64: 8, 1>}, {pipeline_mode = #tpu.pipeline_mode<synchronous>, transform_indices = @transform_3, window_bounds = array<i64: 8, 1>}, {transform_indices = @transform_4, window_bounds = array<i64: 8, 512>}]} {
    %c0 = arith.constant 0 : index
    %c0_0 = arith.constant 0 : index
    %0 = vector.load %arg2[%c0, %c0_0] : memref<8x288xf32, #tpu.memory_space<vmem>>, vector<8x288xf32>
    %c0_1 = arith.constant 0 : index
    %c0_2 = arith.constant 0 : index
    %1 = vector.load %arg1[%c0_1, %c0_2] : memref<288x512xf32, #tpu.memory_space<vmem>>, vector<288x512xf32>
    %cst = arith.constant dense<0.000000e+00> : vector<8x512xf32>
    %2 = tpu.matmul %0, %1, %cst {dimension_numbers = #tpu.dot_dimension_numbers<[1], [0], [0], [1], [0, 0, 1, 1], [], []>} : vector<8x288xf32>, vector<288x512xf32>, vector<8x512xf32> -> vector<8x512xf32>
    %c0_3 = arith.constant 0 : index
    %c0_4 = arith.constant 0 : index
    %3 = vector.load %arg3[%c0_3, %c0_4] : memref<8x1xf32, #tpu.memory_space<vmem>>, vector<8x1xf32>
    %4 = vector.broadcast %3 : vector<8x1xf32> to vector<8x512xf32>
    %5 = arith.mulf %2, %4 : vector<8x512xf32>
    %c0_5 = arith.constant 0 : index
    %c0_6 = arith.constant 0 : index
    %6 = vector.load %arg4[%c0_5, %c0_6] : memref<8x1xf32, #tpu.memory_space<vmem>>, vector<8x1xf32>
    %7 = vector.broadcast %6 : vector<8x1xf32> to vector<8x512xf32>
    %8 = arith.addf %5, %7 : vector<8x512xf32>
    %cst_7 = arith.constant 0.000000e+00 : f32
    %9 = vector.broadcast %cst_7 : f32 to vector<8x512xf32>
    %10 = arith.subf %9, %8 : vector<8x512xf32>
    %11 = math.exp %10 : vector<8x512xf32>
    %cst_8 = arith.constant 1.000000e+00 : f32
    %12 = vector.broadcast %cst_8 : f32 to vector<8x512xf32>
    %13 = arith.addf %12, %11 : vector<8x512xf32>
    %cst_9 = arith.constant 1.000000e+00 : f32
    %14 = vector.broadcast %cst_9 : f32 to vector<8x512xf32>
    %15 = arith.divf %14, %13 : vector<8x512xf32>
    %16 = arith.mulf %8, %15 : vector<8x512xf32>
    %c0_10 = arith.constant 0 : index
    %c0_11 = arith.constant 0 : index
    %17 = vector.load %arg5[%c0_10, %c0_11] : memref<8x512xf32, #tpu.memory_space<vmem>>, vector<8x512xf32>
    tpu.vector_store %arg5[%c0_10, %c0_11], %16 {strides = array<i32>} : memref<8x512xf32, #tpu.memory_space<vmem>>, vector<8x512xf32>,
    return
  }
  func.func @transform_0(%arg0: i32) -> (i32, i32) {
    %c0_i32 = arith.constant 0 : i32
    %c0_i32_0 = arith.constant 0 : i32
    return %c0_i32, %arg0 : i32, i32
  }
  func.func @transform_1(%arg0: i32) -> (i32, i32) {
    %c0_i32 = arith.constant 0 : i32
    %c0_i32_0 = arith.constant 0 : i32
    %c0_i32_1 = arith.constant 0 : i32
    return %c0_i32, %c0_i32_0 : i32, i32
  }
  func.func @transform_2(%arg0: i32) -> (i32, i32) {
    %c0_i32 = arith.constant 0 : i32
    %c0_i32_0 = arith.constant 0 : i32
    %c0_i32_1 = arith.constant 0 : i32
    return %c0_i32, %c0_i32_0 : i32, i32
  }
  func.func @transform_3(%arg0: i32) -> (i32, i32) {
    %c0_i32 = arith.constant 0 : i32
    %c0_i32_0 = arith.constant 0 : i32
    %c0_i32_1 = arith.constant 0 : i32
    return %c0_i32, %c0_i32_0 : i32, i32
  }
  func.func @transform_4(%arg0: i32) -> (i32, i32) {
    %c0_i32 = arith.constant 0 : i32
    %c0_i32_0 = arith.constant 0 : i32
    return %c0_i32, %arg0 : i32, i32
  }
}

module attributes {stable_mosaic.version = 11 : i64} {
  func.func @_fused_conv_gemm_kernel(%arg0: i32, %arg1: memref<72x512xf32, #tpu.memory_space<vmem>>, %arg2: memref<8x72xf32, #tpu.memory_space<vmem>>, %arg3: memref<8x1xf32, #tpu.memory_space<vmem>>, %arg4: memref<8x1xf32, #tpu.memory_space<vmem>>, %arg5: memref<8x512xf32, #tpu.memory_space<vmem>>) attributes {dimension_semantics = [#tpu.dimension_semantics<parallel>], iteration_bounds = array<i64: 3>, scalar_prefetch = 0 : i64, scratch_operands = 0 : i64, tpu.core_type = #tpu.core_type<tc>, window_params = [{transform_indices = @transform_0, window_bounds = array<i64: 72, 512>}, {pipeline_mode = #tpu.pipeline_mode<synchronous>, transform_indices = @transform_1, window_bounds = array<i64: 8, 72>}, {pipeline_mode = #tpu.pipeline_mode<synchronous>, transform_indices = @transform_2, window_bounds = array<i64: 8, 1>}, {pipeline_mode = #tpu.pipeline_mode<synchronous>, transform_indices = @transform_3, window_bounds = array<i64: 8, 1>}, {transform_indices = @transform_4, window_bounds = array<i64: 8, 512>}]} {
    %c0 = arith.constant 0 : index
    %c0_0 = arith.constant 0 : index
    %0 = vector.load %arg2[%c0, %c0_0] : memref<8x72xf32, #tpu.memory_space<vmem>>, vector<8x72xf32>
    %c0_1 = arith.constant 0 : index
    %c0_2 = arith.constant 0 : index
    %1 = vector.load %arg1[%c0_1, %c0_2] : memref<72x512xf32, #tpu.memory_space<vmem>>, vector<72x512xf32>
    %cst = arith.constant dense<0.000000e+00> : vector<8x512xf32>
    %2 = tpu.matmul %0, %1, %cst {dimension_numbers = #tpu.dot_dimension_numbers<[1], [0], [0], [1], [0, 0, 1, 1], [], []>} : vector<8x72xf32>, vector<72x512xf32>, vector<8x512xf32> -> vector<8x512xf32>
    %c0_3 = arith.constant 0 : index
    %c0_4 = arith.constant 0 : index
    %3 = vector.load %arg3[%c0_3, %c0_4] : memref<8x1xf32, #tpu.memory_space<vmem>>, vector<8x1xf32>
    %4 = vector.broadcast %3 : vector<8x1xf32> to vector<8x512xf32>
    %5 = arith.mulf %2, %4 : vector<8x512xf32>
    %c0_5 = arith.constant 0 : index
    %c0_6 = arith.constant 0 : index
    %6 = vector.load %arg4[%c0_5, %c0_6] : memref<8x1xf32, #tpu.memory_space<vmem>>, vector<8x1xf32>
    %7 = vector.broadcast %6 : vector<8x1xf32> to vector<8x512xf32>
    %8 = arith.addf %5, %7 : vector<8x512xf32>
    %cst_7 = arith.constant 0.000000e+00 : f32
    %9 = vector.broadcast %cst_7 : f32 to vector<8x512xf32>
    %10 = arith.subf %9, %8 : vector<8x512xf32>
    %11 = math.exp %10 : vector<8x512xf32>
    %cst_8 = arith.constant 1.000000e+00 : f32
    %12 = vector.broadcast %cst_8 : f32 to vector<8x512xf32>
    %13 = arith.addf %12, %11 : vector<8x512xf32>
    %cst_9 = arith.constant 1.000000e+00 : f32
    %14 = vector.broadcast %cst_9 : f32 to vector<8x512xf32>
    %15 = arith.divf %14, %13 : vector<8x512xf32>
    %16 = arith.mulf %8, %15 : vector<8x512xf32>
    %c0_10 = arith.constant 0 : index
    %c0_11 = arith.constant 0 : index
    %17 = vector.load %arg5[%c0_10, %c0_11] : memref<8x512xf32, #tpu.memory_space<vmem>>, vector<8x512xf32>
    tpu.vector_store %arg5[%c0_10, %c0_11], %16 {strides = array<i32>} : memref<8x512xf32, #tpu.memory_space<vmem>>, vector<8x512xf32>,
    return
  }
  func.func @transform_0(%arg0: i32) -> (i32, i32) {
    %c0_i32 = arith.constant 0 : i32
    %c0_i32_0 = arith.constant 0 : i32
    return %c0_i32, %arg0 : i32, i32
  }
  func.func @transform_1(%arg0: i32) -> (i32, i32) {
    %c0_i32 = arith.constant 0 : i32
    %c0_i32_0 = arith.constant 0 : i32
    %c0_i32_1 = arith.constant 0 : i32
    return %c0_i32, %c0_i32_0 : i32, i32
  }
  func.func @transform_2(%arg0: i32) -> (i32, i32) {
    %c0_i32 = arith.constant 0 : i32
    %c0_i32_0 = arith.constant 0 : i32
    %c0_i32_1 = arith.constant 0 : i32
    return %c0_i32, %c0_i32_0 : i32, i32
  }
  func.func @transform_3(%arg0: i32) -> (i32, i32) {
    %c0_i32 = arith.constant 0 : i32
    %c0_i32_0 = arith.constant 0 : i32
    %c0_i32_1 = arith.constant 0 : i32
    return %c0_i32, %c0_i32_0 : i32, i32
  }
  func.func @transform_4(%arg0: i32) -> (i32, i32) {
    %c0_i32 = arith.constant 0 : i32
    %c0_i32_0 = arith.constant 0 : i32
    return %c0_i32, %arg0 : i32, i32
  }
}

module attributes {stable_mosaic.version = 11 : i64} {
  func.func @_fused_conv_gemm_kernel(%arg0: i32, %arg1: memref<36x512xf32, #tpu.memory_space<vmem>>, %arg2: memref<8x36xf32, #tpu.memory_space<vmem>>, %arg3: memref<8x1xf32, #tpu.memory_space<vmem>>, %arg4: memref<8x1xf32, #tpu.memory_space<vmem>>, %arg5: memref<8x512xf32, #tpu.memory_space<vmem>>) attributes {dimension_semantics = [#tpu.dimension_semantics<parallel>], iteration_bounds = array<i64: 4>, scalar_prefetch = 0 : i64, scratch_operands = 0 : i64, tpu.core_type = #tpu.core_type<tc>, window_params = [{transform_indices = @transform_0, window_bounds = array<i64: 36, 512>}, {pipeline_mode = #tpu.pipeline_mode<synchronous>, transform_indices = @transform_1, window_bounds = array<i64: 8, 36>}, {pipeline_mode = #tpu.pipeline_mode<synchronous>, transform_indices = @transform_2, window_bounds = array<i64: 8, 1>}, {pipeline_mode = #tpu.pipeline_mode<synchronous>, transform_indices = @transform_3, window_bounds = array<i64: 8, 1>}, {transform_indices = @transform_4, window_bounds = array<i64: 8, 512>}]} {
    %c0 = arith.constant 0 : index
    %c0_0 = arith.constant 0 : index
    %0 = vector.load %arg2[%c0, %c0_0] : memref<8x36xf32, #tpu.memory_space<vmem>>, vector<8x36xf32>
    %c0_1 = arith.constant 0 : index
    %c0_2 = arith.constant 0 : index
    %1 = vector.load %arg1[%c0_1, %c0_2] : memref<36x512xf32, #tpu.memory_space<vmem>>, vector<36x512xf32>
    %cst = arith.constant dense<0.000000e+00> : vector<8x512xf32>
    %2 = tpu.matmul %0, %1, %cst {dimension_numbers = #tpu.dot_dimension_numbers<[1], [0], [0], [1], [0, 0, 1, 1], [], []>} : vector<8x36xf32>, vector<36x512xf32>, vector<8x512xf32> -> vector<8x512xf32>
    %c0_3 = arith.constant 0 : index
    %c0_4 = arith.constant 0 : index
    %3 = vector.load %arg3[%c0_3, %c0_4] : memref<8x1xf32, #tpu.memory_space<vmem>>, vector<8x1xf32>
    %4 = vector.broadcast %3 : vector<8x1xf32> to vector<8x512xf32>
    %5 = arith.mulf %2, %4 : vector<8x512xf32>
    %c0_5 = arith.constant 0 : index
    %c0_6 = arith.constant 0 : index
    %6 = vector.load %arg4[%c0_5, %c0_6] : memref<8x1xf32, #tpu.memory_space<vmem>>, vector<8x1xf32>
    %7 = vector.broadcast %6 : vector<8x1xf32> to vector<8x512xf32>
    %8 = arith.addf %5, %7 : vector<8x512xf32>
    %cst_7 = arith.constant 0.000000e+00 : f32
    %9 = vector.broadcast %cst_7 : f32 to vector<8x512xf32>
    %10 = arith.subf %9, %8 : vector<8x512xf32>
    %11 = math.exp %10 : vector<8x512xf32>
    %cst_8 = arith.constant 1.000000e+00 : f32
    %12 = vector.broadcast %cst_8 : f32 to vector<8x512xf32>
    %13 = arith.addf %12, %11 : vector<8x512xf32>
    %cst_9 = arith.constant 1.000000e+00 : f32
    %14 = vector.broadcast %cst_9 : f32 to vector<8x512xf32>
    %15 = arith.divf %14, %13 : vector<8x512xf32>
    %c0_10 = arith.constant 0 : index
    %c0_11 = arith.constant 0 : index
    %16 = vector.load %arg5[%c0_10, %c0_11] : memref<8x512xf32, #tpu.memory_space<vmem>>, vector<8x512xf32>
    tpu.vector_store %arg5[%c0_10, %c0_11], %15 {strides = array<i32>} : memref<8x512xf32, #tpu.memory_space<vmem>>, vector<8x512xf32>,
    return
  }
  func.func @transform_0(%arg0: i32) -> (i32, i32) {
    %c0_i32 = arith.constant 0 : i32
    %c0_i32_0 = arith.constant 0 : i32
    return %c0_i32, %arg0 : i32, i32
  }
  func.func @transform_1(%arg0: i32) -> (i32, i32) {
    %c0_i32 = arith.constant 0 : i32
    %c0_i32_0 = arith.constant 0 : i32
    %c0_i32_1 = arith.constant 0 : i32
    return %c0_i32, %c0_i32_0 : i32, i32
  }
  func.func @transform_2(%arg0: i32) -> (i32, i32) {
    %c0_i32 = arith.constant 0 : i32
    %c0_i32_0 = arith.constant 0 : i32
    %c0_i32_1 = arith.constant 0 : i32
    return %c0_i32, %c0_i32_0 : i32, i32
  }
  func.func @transform_3(%arg0: i32) -> (i32, i32) {
    %c0_i32 = arith.constant 0 : i32
    %c0_i32_0 = arith.constant 0 : i32
    %c0_i32_1 = arith.constant 0 : i32
    return %c0_i32, %c0_i32_0 : i32, i32
  }
  func.func @transform_4(%arg0: i32) -> (i32, i32) {
    %c0_i32 = arith.constant 0 : i32
    %c0_i32_0 = arith.constant 0 : i32
    return %c0_i32, %arg0 : i32, i32
  }
}

</mosaic_0001>

<llo_original>
// kernel: autoencoder_forward.6
$region0: #{autoencoder_forward.6}
  #allocation0 [shape = 'u32[]', space=smem, size = 0x4, offset = 0x4, fixed_abs, tag = 'smem constant byte address 0x4 - core index']
  #allocation1 [shape = 'u32[144,128]{1,0:T(1,128)}', space=vmem, size = 0x12000, scoped, tag = 'internal scratch']
  %s0 = inlined_call_operand.vmem [shape: f32[9,1536], index: 0, kind: input, shape index: {}]
  %s1 = inlined_call_operand.vmem [shape: f32[8,9], index: 1, kind: input, shape index: {}]
  %s2 = inlined_call_operand.vmem [shape: f32[8,1], index: 2, kind: input, shape index: {}]
  %s3 = inlined_call_operand.vmem [shape: f32[8,1], index: 3, kind: input, shape index: {}]
  %s4 = inlined_call_operand.vmem [shape: f32[8,1536], index: 4, kind: output, shape index: {}]
  %s5 = sld [smem:[#allocation0]]
  $region72: #{autoencoder_forward.6} parent=0
    _
  %s7 = ssub.s32 1, %s5
  %s8 = scalar_select 0, %s7, %s5
  $region1: #{autoencoder_forward.6} parent=0
    #allocation2 [shape = 'u8[65536]{0}', space=vmem, size = 0x10000, scoped, tag = 'input window, operand 0']
    loop: start=0, step=1, limit=5
    $region2: #{autoencoder_forward.6} parent=1 // loop_pre_header
      _
    $region3: #{autoencoder_forward.6} parent=1 // loop_header
      %s10 = sphi 0, %s14
      %p11 = scmp.ge.s32.totalorder %s10, 5
      %s20 = sphi 0, %s22
      %s23 = sphi 0, %s20
      %s24 = sphi 0, %s23
      %s40 = sphi 0, %s24
      %s44 = sphi 0, %s44
      %s46 = sphi 0, %s44
      %s47 = sphi 0, %s46
      %s61 = sphi 0, %s47
      %s65 = sphi 0, %s65
      %s67 = sphi 0, %s65
      %s68 = sphi 0, %s67
      %s82 = sphi 0, %s68
      %s86 = sphi 0, %s86
      %s88 = sphi 0, %s86
      %s89 = sphi 0, %s88
      %s103 = sphi 0, %s89
      %s109 = sphi 0, %s111
      %s112 = sphi 0, %s109
      %s113 = sphi 0, %s112
      %s129 = sphi 0, %s113
    $region4: #{autoencoder_forward.6} parent=1 // loop_header_branch
      %13 = sbr.rel (%p11) target = $region8
    $region5: #{autoencoder_forward.6} parent=1 // loop_body
      %s15 = ssub.s32 %s10, 1
      %s16 = ssub.s32 %s10, 2
      %s17 = sadd.s32 %s10, 1
      %s18 = ssub.s32 %s10, %s17
      %p19 = scmp.eq.s32.totalorder %s18, 0
      %s21 = sadd.s32 %s20, 1
      %s22 = scalar_select %p19, %s20, %s21
      %p25 = pneg %p19
      %p26 = scmp.eq.s32.totalorder %s10, 2
      %p27 = por %p25, %p26
      %p28 = scmp.ne.s32.totalorder %s20, %s23
      %p29 = scmp.eq.s32.totalorder %s10, 0
      %p30 = por %p28, %p29
      %p31 = scmp.ne.s32.totalorder %s20, %s23
      %p32 = scmp.eq.s32.totalorder %s15, 2
      %p33 = por %p31, %p32
      %p34 = scmp.ne.s32.totalorder %s23, %s24
      %p35 = scmp.eq.s32.totalorder %s15, 0
      %p36 = por %p34, %p35
      %p37 = scmp.ne.s32.totalorder %s23, %s24
      %p38 = scmp.eq.s32.totalorder %s16, 2
      %p39 = por %p37, %p38
      %p41 = scmp.ne.s32.totalorder %s24, %s40
      %p42 = scmp.eq.s32.totalorder %s16, 0
      %p43 = por %p41, %p42
      %s45 = sadd.s32 %s44, 1
      %p48 = scmp.eq.s32.totalorder %s10, 2
      %p49 = scmp.ne.s32.totalorder %s44, %s46
      %p50 = scmp.eq.s32.totalorder %s10, 0
      %p51 = por %p49, %p50
      %p52 = scmp.ne.s32.totalorder %s44, %s46
      %p53 = scmp.eq.s32.totalorder %s15, 2
      %p54 = por %p52, %p53
      %p55 = scmp.ne.s32.totalorder %s46, %s47
      %p56 = scmp.eq.s32.totalorder %s15, 0
      %p57 = por %p55, %p56
      %p58 = scmp.ne.s32.totalorder %s46, %s47
      %p59 = scmp.eq.s32.totalorder %s16, 2
      %p60 = por %p58, %p59
      %p62 = scmp.ne.s32.totalorder %s47, %s61
      %p63 = scmp.eq.s32.totalorder %s16, 0
      %p64 = por %p62, %p63
      %s66 = sadd.s32 %s65, 1
      %p69 = scmp.eq.s32.totalorder %s10, 2
      %p70 = scmp.ne.s32.totalorder %s65, %s67
      %p71 = scmp.eq.s32.totalorder %s10, 0
      %p72 = por %p70, %p71
      %p73 = scmp.ne.s32.totalorder %s65, %s67
      %p74 = scmp.eq.s32.totalorder %s15, 2
      %p75 = por %p73, %p74
      %p76 = scmp.ne.s32.totalorder %s67, %s68
      %p77 = scmp.eq.s32.totalorder %s15, 0
      %p78 = por %p76, %p77
      %p79 = scmp.ne.s32.totalorder %s67, %s68
      %p80 = scmp.eq.s32.totalorder %s16, 2
      %p81 = por %p79, %p80
      %p83 = scmp.ne.s32.totalorder %s68, %s82
      %p84 = scmp.eq.s32.totalorder %s16, 0
      %p85 = por %p83, %p84
      %s87 = sadd.s32 %s86, 1
      %p90 = scmp.eq.s32.totalorder %s10, 2
      %p91 = scmp.ne.s32.totalorder %s86, %s88
      %p92 = scmp.eq.s32.totalorder %s10, 0
      %p93 = por %p91, %p92
      %p94 = scmp.ne.s32.totalorder %s86, %s88
      %p95 = scmp.eq.s32.totalorder %s15, 2
      %p96 = por %p94, %p95
      %p97 = scmp.ne.s32.totalorder %s88, %s89
      %p98 = scmp.eq.s32.totalorder %s15, 0
      %p99 = por %p97, %p98
      %p100 = scmp.ne.s32.totalorder %s88, %s89
      %p101 = scmp.eq.s32.totalorder %s16, 2
      %p102 = por %p100, %p101
      %p104 = scmp.ne.s32.totalorder %s89, %s103
      %p105 = scmp.eq.s32.totalorder %s16, 0
      %p106 = por %p104, %p105
      %s107 = ssub.s32 %s10, %s17
      %p108 = scmp.eq.s32.totalorder %s107, 0
      %s110 = sadd.s32 %s109, 1
      %s111 = scalar_select %p108, %s109, %s110
      %p114 = pneg %p108
      %p115 = scmp.eq.s32.totalorder %s10, 2
      %p116 = por %p114, %p115
      %p117 = scmp.ne.s32.totalorder %s109, %s112
      %p118 = scmp.eq.s32.totalorder %s10, 0
      %p119 = por %p117, %p118
      %p120 = scmp.ne.s32.totalorder %s109, %s112
      %p121 = scmp.eq.s32.totalorder %s15, 2
      %p122 = por %p120, %p121
      %p123 = scmp.ne.s32.totalorder %s112, %s113
      %p124 = scmp.eq.s32.totalorder %s15, 0
      %p125 = por %p123, %p124
      %p126 = scmp.ne.s32.totalorder %s112, %s113
      %p127 = scmp.eq.s32.totalorder %s16, 2
      %p128 = por %p126, %p127
      %p130 = scmp.ne.s32.totalorder %s113, %s129
      %p131 = scmp.eq.s32.totalorder %s16, 0
      %p132 = por %p130, %p131
      %p133 = scmp.le.s32.totalorder 1, %s10
      %p134 = scmp.lt.s32.totalorder %s10, 4
      %p135 = pnand %p133, %p134
      %p136 = pneg %p135
      // Predicated region
      $region9: #{autoencoder_forward.6} parent=5 // pred_check
        _
      $region10: #{autoencoder_forward.6} parent=5 // pred_check_branch
        %138 = sbr.rel (%p135) target = $region12
      $region11: #{autoencoder_forward.6} parent=5 // pred_region
        %s139 = ssub.s32 %s10, 1
        // Predicated region
        $region13: #{autoencoder_forward.6} parent=11 // pred_check
          %p140 = pneg %p57
        $region14: #{autoencoder_forward.6} parent=11 // pred_check_branch
          %142 = sbr.rel (%p140) target = $region16
        $region15: #{autoencoder_forward.6} parent=11 // pred_region
          _
        $region16: #{autoencoder_forward.6} parent=11 // pred_fallthru
          _
        // Predicated region
        $region17: #{autoencoder_forward.6} parent=11 // pred_check
          %p143 = pneg %p78
        $region18: #{autoencoder_forward.6} parent=11 // pred_check_branch
          %145 = sbr.rel (%p143) target = $region20
        $region19: #{autoencoder_forward.6} parent=11 // pred_region
          _
        $region20: #{autoencoder_forward.6} parent=11 // pred_fallthru
          _
        // Predicated region
        $region21: #{autoencoder_forward.6} parent=11 // pred_check
          %p146 = pneg %p99
        $region22: #{autoencoder_forward.6} parent=11 // pred_check_branch
          %148 = sbr.rel (%p146) target = $region24
        $region23: #{autoencoder_forward.6} parent=11 // pred_region
          _
        $region24: #{autoencoder_forward.6} parent=11 // pred_fallthru
          _
      $region12: #{autoencoder_forward.6} parent=5 // pred_fallthru
        _
      %p149 = scmp.lt.s32.totalorder %s10, 3
      // Predicated region
      $region25: #{autoencoder_forward.6} parent=5 // pred_check
        %p150 = pneg %p149
      $region26: #{autoencoder_forward.6} parent=5 // pred_check_branch
        %152 = sbr.rel (%p150) target = $region28
      $region27: #{autoencoder_forward.6} parent=5 // pred_region
        // Predicated region
        $region29: #{autoencoder_forward.6} parent=27 // pred_check
          %p153 = pneg %p30
        $region30: #{autoencoder_forward.6} parent=27 // pred_check_branch
          %155 = sbr.rel (%p153) target = $region32
        $region31: #{autoencoder_forward.6} parent=27 // pred_region
          %s156 = sand.u32 %s20, 1
          %s157 = sand.u32 %s20, 1
          %s158 = smul.addr %s157, 64
          %s159 = scalar_lea.vmem [#allocation2], %s158
          %s160 = smul.u32 4, %s10
          %s161 = smul.addr %s160, 8
          %s162 = scalar_lea.vmem %s0, %s161
          // Predicated region
          $region33: #{autoencoder_forward.6} parent=31 // pred_check
            _
          $region34: #{autoencoder_forward.6} parent=31 // pred_check_branch
            %164 = sbr.rel (0) target = $region36
          $region35: #{autoencoder_forward.6} parent=31 // pred_region
            // Predicated region
            $region37: #{autoencoder_forward.6} parent=35 // pred_check
              _
            $region38: #{autoencoder_forward.6} parent=35 // pred_check_branch
              %166 = sbr.rel (0) target = $region40
            $region39: #{autoencoder_forward.6} parent=35 // pred_region
              loop: start=0, step=1, limit=1
              $region41: #{autoencoder_forward.6} parent=39 // loop_pre_header
                _
              $region42: #{autoencoder_forward.6} parent=39 // loop_header
                %s168 = sphi 0, %s172
                %p169 = scmp.ge.s32.totalorder %s168, 1
                %s173 = sphi %s162, %s162
                %s174 = sphi %s159, %s159
              $region43: #{autoencoder_forward.6} parent=39 // loop_header_branch
                %171 = sbr.rel (%p169) target = $region47
              $region44: #{autoencoder_forward.6} parent=39 // loop_body
                %v175 = vld [vmem:[%s173] sm:$0xff]
                %176 = vst [vmem:[%s174] sm:$0xff] %v175
                %v177 = vld [vmem:[%s173 + $0x8] sm:$0xff]
                %178 = vst [vmem:[%s174 + $0x8] sm:$0xff] %v177
                %v179 = vld [vmem:[%s173 + $0x10] sm:$0xff]
                %180 = vst [vmem:[%s174 + $0x10] sm:$0xff] %v179
                %v181 = vld [vmem:[%s173 + $0x18] sm:$0xff]
                %182 = vst [vmem:[%s174 + $0x18] sm:$0xff] %v181
                %v183 = vld [vmem:[%s173 + $0x60] sm:$0xff]
                %184 = vst [vmem:[%s174 + $0x20] sm:$0xff] %v183
                %v185 = vld [vmem:[%s173 + $0x68] sm:$0xff]
                %186 = vst [vmem:[%s174 + $0x28] sm:$0xff] %v185
                %v187 = vld [vmem:[%s173 + $0x70] sm:$0xff]
                %188 = vst [vmem:[%s174 + $0x30] sm:$0xff] %v187
                %v189 = vld [vmem:[%s173 + $0x78] sm:$0xff]
                %190 = vst [vmem:[%s174 + $0x38] sm:$0xff] %v189
              $region45: #{autoencoder_forward.6} parent=39 // loop_footer
                %s172 = sadd.s32 1, %s168
              $region46: #{autoencoder_forward.6} parent=39 // loop_footer_branch
                %167 = sbr.rel target = $region42
              $region47: #{autoencoder_forward.6} parent=39 // loop_exit
                _
            $region40: #{autoencoder_forward.6} parent=35 // pred_fallthru
              _
            // Predicated region
            $region48: #{autoencoder_forward.6} parent=35 // pred_check
              _
            $region49: #{autoencoder_forward.6} parent=35 // pred_check_branch
              %192 = sbr.rel target = $region51
            $region50: #{autoencoder_forward.6} parent=35 // pred_region
              _
            $region51: #{autoencoder_forward.6} parent=35 // pred_fallthru
              _
          $region36: #{autoencoder_forward.6} parent=31 // pred_fallthru
            _
          %193 = vnop
        $region32: #{autoencoder_forward.6} parent=27 // pred_fallthru
          _
      $region28: #{autoencoder_forward.6} parent=5 // pred_fallthru
        _
      %p194 = scmp.le.s32.totalorder 1, %s10
      %p195 = scmp.lt.s32.totalorder %s10, 4
      %p196 = pnand %p194, %p195
      %p197 = pneg %p196
      // Predicated region
      $region52: #{autoencoder_forward.6} parent=5 // pred_check
        _
      $region53: #{autoencoder_forward.6} parent=5 // pred_check_branch
        %199 = sbr.rel (%p196) target = $region55
      $region54: #{autoencoder_forward.6} parent=5 // pred_region
        %s200 = ssub.s32 %s10, 1
        %s201 = sand.u32 %s23, 1
        %s202 = sand.u32 %s23, 1
        %s203 = smul.addr %s202, 64
        %s204 = scalar_lea.vmem [#allocation2], %s203
        // Predicated region
        $region56: #{autoencoder_forward.6} parent=54 // pred_check
          %p205 = pneg %p36
        $region57: #{autoencoder_forward.6} parent=54 // pred_check_branch
          %207 = sbr.rel (%p205) target = $region59
        $region58: #{autoencoder_forward.6} parent=54 // pred_region
          _
        $region59: #{autoencoder_forward.6} parent=54 // pred_fallthru
          _
        %s208 = sand.u32 %s23, 1
        %s209 = sand.u32 %s23, 1
        %s210 = smul.addr %s209, 64
        %s211 = scalar_lea.vmem [#allocation2], %s210
        %p212 = pneg %p36
        %p213 = pneg %p33
        %p214 = pneg %p57
        %p215 = pneg %p54
        %p216 = pneg %p78
        %p217 = pneg %p75
        %p218 = pneg %p99
        %p219 = pneg %p96
        %p220 = pneg %p125
        %p221 = pneg %p122
        %s222 = smul.u32 4, %s15
        %p223 = scmp.lt.s32.totalorder %s222, 11
        %s224 = scalar_select %p223, %s222, 11
        %s225 = smul.addr %s224, 8
        %s226 = scalar_lea.vmem %s4, %s225
        %s227 = smul.u32 4, %s15
        %s228 = smul.u32 4, %s15
        %p229 = scmp.lt.s32.totalorder %s228, 11
        %s230 = scalar_select %p229, %s228, 11
        %s231 = smul.addr %s230, 8
        %s232 = scalar_lea.vmem %s4, %s231
        %s233 = smul.u32 4, %s15
        %v234 = vld [vmem:[%s1] sm:$0xff]
        %v235 = vld [vmem:[%s204] sm:$0xff]
        %v236 = vld [vmem:[%s204 + $0x8] sm:$0xff]
        %v237 = vld [vmem:[%s204 + $0x10] sm:$0xff]
        %v238 = vld [vmem:[%s204 + $0x18] sm:$0xff]
        %v239 = vld [vmem:[%s204 + $0x20] sm:$0x1]
        %v240 = vld [vmem:[%s204 + $0x28] sm:$0x1]
        %v241 = vld [vmem:[%s204 + $0x30] sm:$0x1]
        %v242 = vld [vmem:[%s204 + $0x38] sm:$0x1]
        %vm243 = vcmask 72704
        %v245 = vsel %vm243, %v234, 0
        %vm247 = vcmask 1040384
        %v249 = vsel %vm247, %v239, 0
        %v252 = vsel %vm247, %v240, 0
        %v255 = vsel %vm247, %v241, 0
        %v258 = vsel %vm247, %v242, 0
        %260 = vmatprep.subr.mxu0 0.0
        %261 = vmatpush1.msra.mxu0 0.0
        %262 = vmatprep.subr.mxu0 0.0
        %263 = vmatpush1.msra.mxu0 0.0
        %264 = vmatprep.subr.mxu0 0.0
        %265 = vmatpush1.msra.mxu0 0.0
        %266 = vmatprep.subr.mxu0 0.0
        %267 = vmatpush1.msra.mxu0 0.0
        %268 = vmatprep.subr.mxu0 0.0
        %269 = vmatpush1.msra.mxu0 0.0
        %270 = vmatprep.subr.mxu0 0.0
        %271 = vmatpush1.msra.mxu0 0.0
        %272 = vmatprep.subr.mxu0 0.0
        %273 = vmatpush1.msra.mxu0 0.0
        %274 = vmatprep.subr.mxu0 0.0
        %275 = vmatpush1.msra.mxu0 0.0
        %276 = vmatprep.subr.mxu0 0.0
        %277 = vmatpush1.msra.mxu0 0.0
        %278 = vmatprep.subr.mxu0 0.0
        %279 = vmatpush1.msra.mxu0 0.0
        %280 = vmatprep.subr.mxu0 0.0
        %281 = vmatpush1.msra.mxu0 0.0
        %282 = vmatprep.subr.mxu0 0.0
        %283 = vmatpush1.msra.mxu0 0.0
        %284 = vmatprep.subr.mxu0 0.0
        %285 = vmatpush1.msra.mxu0 0.0
        %286 = vmatprep.subr.mxu0 0.0
        %287 = vmatpush1.msra.mxu0 0.0
        %288 = vmatprep.subr.mxu0 %v252
        %289 = vmatpush1.msra.mxu0 %v249
        %290 = vmatprep.subr.mxu0 %v236
        %291 = vmatpush1.msra.mxu0 %v235
        %292 = vmatprep.subr.mxu0 0.0
        %293 = vmatpush2.msra.mxu0 0.0
        %294 = vmatprep.subr.mxu0 0.0
        %295 = vmatpush2.msra.mxu0 0.0
        %296 = vmatprep.subr.mxu0 0.0
        %297 = vmatpush2.msra.mxu0 0.0
        %298 = vmatprep.subr.mxu0 0.0
        %299 = vmatpush2.msra.mxu0 0.0
        %300 = vmatprep.subr.mxu0 0.0
        %301 = vmatpush2.msra.mxu0 0.0
        %302 = vmatprep.subr.mxu0 0.0
        %303 = vmatpush2.msra.mxu0 0.0
        %304 = vmatprep.subr.mxu0 0.0
        %305 = vmatpush2.msra.mxu0 0.0
        %306 = vmatprep.subr.mxu0 0.0
        %307 = vmatpush2.msra.mxu0 0.0
        %308 = vmatprep.subr.mxu0 0.0
        %309 = vmatpush2.msra.mxu0 0.0
        %310 = vmatprep.subr.mxu0 0.0
        %311 = vmatpush2.msra.mxu0 0.0
        %312 = vmatprep.subr.mxu0 0.0
        %313 = vmatpush2.msra.mxu0 0.0
        %314 = vmatprep.subr.mxu0 0.0
        %315 = vmatpush2.msra.mxu0 0.0
        %316 = vmatprep.subr.mxu0 0.0
        %317 = vmatpush2.msra.mxu0 0.0
        %318 = vmatprep.subr.mxu0 0.0
        %319 = vmatpush2.msra.mxu0 0.0
        %320 = vmatprep.subr.mxu0 0.0
        %321 = vmatpush2.msra.mxu0 0.0
        %322 = vmatprep.subr.mxu0 0.0
        %323 = vmatpush2.msra.mxu0 0.0
        %324 = vmatprep.mubr.f32.mxu0 0.0
        %325 = vmatmul.mubr.f32.gmra.mxu0 %v245
        %v326 = vpop.f32.mrf.mxu0
        %v327 = vadd.f32 0.0, %v326
        %v328 = vpop.f32.mrf.mxu0
        %v329 = vadd.f32 0.0, %v328
        %330 = vdwg.mxu0
        %331 = vmatprep.subr.mxu0 0.0
        %332 = vmatpush1.msra.mxu0 0.0
        %333 = vmatprep.subr.mxu0 0.0
        %334 = vmatpush1.msra.mxu0 0.0
        %335 = vmatprep.subr.mxu0 0.0
        %336 = vmatpush1.msra.mxu0 0.0
        %337 = vmatprep.subr.mxu0 0.0
        %338 = vmatpush1.msra.mxu0 0.0
        %339 = vmatprep.subr.mxu0 0.0
        %340 = vmatpush1.msra.mxu0 0.0
        %341 = vmatprep.subr.mxu0 0.0
        %342 = vmatpush1.msra.mxu0 0.0
        %343 = vmatprep.subr.mxu0 0.0
        %344 = vmatpush1.msra.mxu0 0.0
        %345 = vmatprep.subr.mxu0 0.0
        %346 = vmatpush1.msra.mxu0 0.0
        %347 = vmatprep.subr.mxu0 0.0
        %348 = vmatpush1.msra.mxu0 0.0
        %349 = vmatprep.subr.mxu0 0.0
        %350 = vmatpush1.msra.mxu0 0.0
        %351 = vmatprep.subr.mxu0 0.0
        %352 = vmatpush1.msra.mxu0 0.0
        %353 = vmatprep.subr.mxu0 0.0
        %354 = vmatpush1.msra.mxu0 0.0
        %355 = vmatprep.subr.mxu0 0.0
        %356 = vmatpush1.msra.mxu0 0.0
        %357 = vmatprep.subr.mxu0 0.0
        %358 = vmatpush1.msra.mxu0 0.0
        %359 = vmatprep.subr.mxu0 %v258
        %360 = vmatpush1.msra.mxu0 %v255
        %361 = vmatprep.subr.mxu0 %v238
        %362 = vmatpush1.msra.mxu0 %v237
        %363 = vmatprep.subr.mxu0 0.0
        %364 = vmatpush2.msra.mxu0 0.0
        %365 = vmatprep.subr.mxu0 0.0
        %366 = vmatpush2.msra.mxu0 0.0
        %367 = vmatprep.subr.mxu0 0.0
        %368 = vmatpush2.msra.mxu0 0.0
        %369 = vmatprep.subr.mxu0 0.0
        %370 = vmatpush2.msra.mxu0 0.0
        %371 = vmatprep.subr.mxu0 0.0
        %372 = vmatpush2.msra.mxu0 0.0
        %373 = vmatprep.subr.mxu0 0.0
        %374 = vmatpush2.msra.mxu0 0.0
        %375 = vmatprep.subr.mxu0 0.0
        %376 = vmatpush2.msra.mxu0 0.0
        %377 = vmatprep.subr.mxu0 0.0
        %378 = vmatpush2.msra.mxu0 0.0
        %379 = vmatprep.subr.mxu0 0.0
        %380 = vmatpush2.msra.mxu0 0.0
        %381 = vmatprep.subr.mxu0 0.0
        %382 = vmatpush2.msra.mxu0 0.0
        %383 = vmatprep.subr.mxu0 0.0
        %384 = vmatpush2.msra.mxu0 0.0
        %385 = vmatprep.subr.mxu0 0.0
        %386 = vmatpush2.msra.mxu0 0.0
        %387 = vmatprep.subr.mxu0 0.0
        %388 = vmatpush2.msra.mxu0 0.0
        %389 = vmatprep.subr.mxu0 0.0
        %390 = vmatpush2.msra.mxu0 0.0
        %391 = vmatprep.subr.mxu0 0.0
        %392 = vmatpush2.msra.mxu0 0.0
        %393 = vmatprep.subr.mxu0 0.0
        %394 = vmatpush2.msra.mxu0 0.0
        %395 = vmatprep.mubr.f32.mxu0 0.0
        %396 = vmatmul.mubr.f32.gmra.mxu0 %v245
        %v397 = vpop.f32.mrf.mxu0
        %v398 = vadd.f32 0.0, %v397
        %v399 = vpop.f32.mrf.mxu0
        %v400 = vadd.f32 0.0, %v399
        %401 = vdwg.mxu0
        %v402 = vld [vmem:[%s2] sm:$0xff]
        %404 = vset.pattern.permute.xlu0 0
        %405 = vperm.xlu0 %404, %v402
        %v406 = vpop.permute.xlu0 %405
        %v408 = vmul.f32 %v327, %v406
        %v409 = vmul.f32 %v329, %v406
        %v410 = vmul.f32 %v398, %v406
        %v411 = vmul.f32 %v400, %v406
        %v412 = vld [vmem:[%s3] sm:$0xff]
        %414 = vset.pattern.permute.xlu0 0
        %415 = vperm.xlu0 %414, %v412
        %v416 = vpop.permute.xlu0 %415
        %v418 = vadd.f32 %v408, %v416
        %v419 = vadd.f32 %v409, %v416
        %v420 = vadd.f32 %v410, %v416
        %v421 = vadd.f32 %v411, %v416
        %v422 = vsub.f32 0.0, %v418
        %v423 = vsub.f32 0.0, %v419
        %v424 = vsub.f32 0.0, %v420
        %v425 = vsub.f32 0.0, %v421
        %v426 = vmul.f32 %v422, 1.442695
        %v427 = vpow.pop %v426
        %v428 = vmul.f32 %v423, 1.442695
        %v429 = vpow.pop %v428
        %v430 = vmul.f32 %v424, 1.442695
        %v431 = vpow.pop %v430
        %v432 = vmul.f32 %v425, 1.442695
        %v433 = vpow.pop %v432
        %v434 = vadd.f32 %v427, 1.0
        %v435 = vadd.f32 %v429, 1.0
        %v436 = vadd.f32 %v431, 1.0
        %v437 = vadd.f32 %v433, 1.0
        %v438 = vrcp.pop %v434
        %v439 = vmul.f32 1.0, %v438
        %v440 = vrcp.pop %v435
        %v441 = vmul.f32 1.0, %v440
        %v442 = vrcp.pop %v436
        %v443 = vmul.f32 1.0, %v442
        %v444 = vrcp.pop %v437
        %v445 = vmul.f32 1.0, %v444
        %v446 = vmul.f32 %v418, %v439
        %v447 = vmul.f32 %v419, %v441
        %v448 = vmul.f32 %v420, %v443
        %v449 = vmul.f32 %v421, %v445
        %450 = vst [vmem:[%s232] sm:$0xff] %v446
        %451 = vst [vmem:[%s232 + $0x8] sm:$0xff] %v447
        %452 = vst [vmem:[%s232 + $0x10] sm:$0xff] %v448
        %453 = vst [vmem:[%s232 + $0x18] sm:$0xff] %v449
        %s454 = smul.u32 4, %s15
        %p455 = scmp.lt.s32.totalorder %s454, 11
        %s456 = scalar_select %p455, %s454, 11
        %s457 = smul.addr %s456, 8
        %s458 = scalar_lea.vmem %s4, %s457
        // Predicated region
        $region60: #{autoencoder_forward.6} parent=54 // pred_check
          %p459 = pneg %p122
        $region61: #{autoencoder_forward.6} parent=54 // pred_check_branch
          %461 = sbr.rel (%p459) target = $region63
        $region62: #{autoencoder_forward.6} parent=54 // pred_region
          %s462 = smul.u32 4, %s15
        $region63: #{autoencoder_forward.6} parent=54 // pred_fallthru
          _
      $region55: #{autoencoder_forward.6} parent=5 // pred_fallthru
        _
      %p463 = scmp.le.s32.totalorder 2, %s10
      // Predicated region
      $region64: #{autoencoder_forward.6} parent=5 // pred_check
        %p464 = pneg %p463
      $region65: #{autoencoder_forward.6} parent=5 // pred_check_branch
        %466 = sbr.rel (%p464) target = $region67
      $region66: #{autoencoder_forward.6} parent=5 // pred_region
        %s467 = ssub.s32 %s10, 2
        // Predicated region
        $region68: #{autoencoder_forward.6} parent=66 // pred_check
          %p468 = pneg %p128
        $region69: #{autoencoder_forward.6} parent=66 // pred_check_branch
          %470 = sbr.rel (%p468) target = $region71
        $region70: #{autoencoder_forward.6} parent=66 // pred_region
          %s471 = smul.u32 4, %s16
          %p472 = scmp.lt.s32.totalorder %s471, 11
          %s473 = scalar_select %p472, %s471, 11
          %s474 = smul.addr %s473, 8
          %s475 = scalar_lea.vmem %s4, %s474
        $region71: #{autoencoder_forward.6} parent=66 // pred_fallthru
          _
      $region67: #{autoencoder_forward.6} parent=5 // pred_fallthru
        _
    $region6: #{autoencoder_forward.6} parent=1 // loop_footer
      %s14 = sadd.s32 1, %s10
    $region7: #{autoencoder_forward.6} parent=1 // loop_footer_branch
      %9 = sbr.rel target = $region3
    $region8: #{autoencoder_forward.6} parent=1 // loop_exit
      _

// kernel: autoencoder_forward.7
$region0: #{autoencoder_forward.7}
  #allocation0 [shape = 'u32[]', space=smem, size = 0x4, offset = 0x4, fixed_abs, tag = 'smem constant byte address 0x4 - core index']
  #allocation1 [shape = 'u32[144,128]{1,0:T(1,128)}', space=vmem, size = 0x12000, scoped, tag = 'internal scratch']
  %s0 = inlined_call_operand.vmem [shape: f32[36,512], index: 0, kind: input, shape index: {}]
  %s1 = inlined_call_operand.vmem [shape: f32[8,36], index: 1, kind: input, shape index: {}]
  %s2 = inlined_call_operand.vmem [shape: f32[8,1], index: 2, kind: input, shape index: {}]
  %s3 = inlined_call_operand.vmem [shape: f32[8,1], index: 3, kind: input, shape index: {}]
  %s4 = inlined_call_operand.vmem [shape: f32[8,512], index: 4, kind: output, shape index: {}]
  %s5 = sld [smem:[#allocation0]]
  $region26: #{autoencoder_forward.7} parent=0
    _
  %s7 = ssub.s32 1, %s5
  %s8 = scalar_select 0, %s7, %s5
  // Predicated region
  $region2: #{autoencoder_forward.7} parent=0 // pred_check
    _
  $region3: #{autoencoder_forward.7} parent=0 // pred_check_branch
    %10 = sbr.rel (0) target = $region5
  $region4: #{autoencoder_forward.7} parent=0 // pred_region
    _
  $region5: #{autoencoder_forward.7} parent=0 // pred_fallthru
    _
  // Predicated region
  $region6: #{autoencoder_forward.7} parent=0 // pred_check
    _
  $region7: #{autoencoder_forward.7} parent=0 // pred_check_branch
    %12 = sbr.rel (0) target = $region9
  $region8: #{autoencoder_forward.7} parent=0 // pred_region
    _
  $region9: #{autoencoder_forward.7} parent=0 // pred_fallthru
    _
  // Predicated region
  $region10: #{autoencoder_forward.7} parent=0 // pred_check
    _
  $region11: #{autoencoder_forward.7} parent=0 // pred_check_branch
    %14 = sbr.rel (0) target = $region13
  $region12: #{autoencoder_forward.7} parent=0 // pred_region
    _
  $region13: #{autoencoder_forward.7} parent=0 // pred_fallthru
    _
  // Predicated region
  $region14: #{autoencoder_forward.7} parent=0 // pred_check
    _
  $region15: #{autoencoder_forward.7} parent=0 // pred_check_branch
    %16 = sbr.rel (0) target = $region17
  $region16: #{autoencoder_forward.7} parent=0 // pred_region
    _
  $region17: #{autoencoder_forward.7} parent=0 // pred_fallthru
    _
  %v17 = vld [vmem:[%s1] sm:$0xff]
  %v18 = vld [vmem:[%s0] sm:$0xff]
  %v19 = vld [vmem:[%s0 + $0x8] sm:$0xff]
  %v20 = vld [vmem:[%s0 + $0x10] sm:$0xff]
  %v21 = vld [vmem:[%s0 + $0x18] sm:$0xff]
  %v22 = vld [vmem:[%s0 + $0x20] sm:$0xff]
  %v23 = vld [vmem:[%s0 + $0x28] sm:$0xff]
  %v24 = vld [vmem:[%s0 + $0x30] sm:$0xff]
  %v25 = vld [vmem:[%s0 + $0x38] sm:$0xff]
  %v26 = vld [vmem:[%s0 + $0x40] sm:$0xff]
  %v27 = vld [vmem:[%s0 + $0x48] sm:$0xff]
  %v28 = vld [vmem:[%s0 + $0x50] sm:$0xff]
  %v29 = vld [vmem:[%s0 + $0x58] sm:$0xff]
  %v30 = vld [vmem:[%s0 + $0x60] sm:$0xff]
  %v31 = vld [vmem:[%s0 + $0x68] sm:$0xff]
  %v32 = vld [vmem:[%s0 + $0x70] sm:$0xff]
  %v33 = vld [vmem:[%s0 + $0x78] sm:$0xff]
  %v34 = vld [vmem:[%s0 + $0x80] sm:$0xf]
  %v35 = vld [vmem:[%s0 + $0x88] sm:$0xf]
  %v36 = vld [vmem:[%s0 + $0x90] sm:$0xf]
  %v37 = vld [vmem:[%s0 + $0x98] sm:$0xf]
  %vm38 = vcmask 293888
  %v40 = vsel %vm38, %v17, 0
  %vm42 = vcmask 1043456
  %v44 = vsel %vm42, %v34, 0
  %v47 = vsel %vm42, %v35, 0
  %v50 = vsel %vm42, %v36, 0
  %v53 = vsel %vm42, %v37, 0
  %55 = vmatprep.subr.mxu0 0.0
  %56 = vmatpush1.msra.mxu0 0.0
  %57 = vmatprep.subr.mxu0 0.0
  %58 = vmatpush1.msra.mxu0 0.0
  %59 = vmatprep.subr.mxu0 0.0
  %60 = vmatpush1.msra.mxu0 0.0
  %61 = vmatprep.subr.mxu0 0.0
  %62 = vmatpush1.msra.mxu0 0.0
  %63 = vmatprep.subr.mxu0 0.0
  %64 = vmatpush1.msra.mxu0 0.0
  %65 = vmatprep.subr.mxu0 0.0
  %66 = vmatpush1.msra.mxu0 0.0
  %67 = vmatprep.subr.mxu0 0.0
  %68 = vmatpush1.msra.mxu0 0.0
  %69 = vmatprep.subr.mxu0 0.0
  %70 = vmatpush1.msra.mxu0 0.0
  %71 = vmatprep.subr.mxu0 0.0
  %72 = vmatpush1.msra.mxu0 0.0
  %73 = vmatprep.subr.mxu0 0.0
  %74 = vmatpush1.msra.mxu0 0.0
  %75 = vmatprep.subr.mxu0 0.0
  %76 = vmatpush1.msra.mxu0 0.0
  %77 = vmatprep.subr.mxu0 %v47
  %78 = vmatpush1.msra.mxu0 %v44
  %79 = vmatprep.subr.mxu0 %v31
  %80 = vmatpush1.msra.mxu0 %v30
  %81 = vmatprep.subr.mxu0 %v27
  %82 = vmatpush1.msra.mxu0 %v26
  %83 = vmatprep.subr.mxu0 %v23
  %84 = vmatpush1.msra.mxu0 %v22
  %85 = vmatprep.subr.mxu0 %v19
  %86 = vmatpush1.msra.mxu0 %v18
  %87 = vmatprep.subr.mxu0 0.0
  %88 = vmatpush2.msra.mxu0 0.0
  %89 = vmatprep.subr.mxu0 0.0
  %90 = vmatpush2.msra.mxu0 0.0
  %91 = vmatprep.subr.mxu0 0.0
  %92 = vmatpush2.msra.mxu0 0.0
  %93 = vmatprep.subr.mxu0 0.0
  %94 = vmatpush2.msra.mxu0 0.0
  %95 = vmatprep.subr.mxu0 0.0
  %96 = vmatpush2.msra.mxu0 0.0
  %97 = vmatprep.subr.mxu0 0.0
  %98 = vmatpush2.msra.mxu0 0.0
  %99 = vmatprep.subr.mxu0 0.0
  %100 = vmatpush2.msra.mxu0 0.0
  %101 = vmatprep.subr.mxu0 0.0
  %102 = vmatpush2.msra.mxu0 0.0
  %103 = vmatprep.subr.mxu0 0.0
  %104 = vmatpush2.msra.mxu0 0.0
  %105 = vmatprep.subr.mxu0 0.0
  %106 = vmatpush2.msra.mxu0 0.0
  %107 = vmatprep.subr.mxu0 0.0
  %108 = vmatpush2.msra.mxu0 0.0
  %109 = vmatprep.subr.mxu0 0.0
  %110 = vmatpush2.msra.mxu0 0.0
  %111 = vmatprep.subr.mxu0 0.0
  %112 = vmatpush2.msra.mxu0 0.0
  %113 = vmatprep.subr.mxu0 0.0
  %114 = vmatpush2.msra.mxu0 0.0
  %115 = vmatprep.subr.mxu0 0.0
  %116 = vmatpush2.msra.mxu0 0.0
  %117 = vmatprep.subr.mxu0 0.0
  %118 = vmatpush2.msra.mxu0 0.0
  %119 = vmatprep.mubr.f32.mxu0 0.0
  %120 = vmatmul.mubr.f32.gmra.mxu0 %v40
  %v121 = vpop.f32.mrf.mxu0
  %v122 = vadd.f32 0.0, %v121
  %v123 = vpop.f32.mrf.mxu0
  %v124 = vadd.f32 0.0, %v123
  %125 = vdwg.mxu0
  %126 = vmatprep.subr.mxu0 0.0
  %127 = vmatpush1.msra.mxu0 0.0
  %128 = vmatprep.subr.mxu0 0.0
  %129 = vmatpush1.msra.mxu0 0.0
  %130 = vmatprep.subr.mxu0 0.0
  %131 = vmatpush1.msra.mxu0 0.0
  %132 = vmatprep.subr.mxu0 0.0
  %133 = vmatpush1.msra.mxu0 0.0
  %134 = vmatprep.subr.mxu0 0.0
  %135 = vmatpush1.msra.mxu0 0.0
  %136 = vmatprep.subr.mxu0 0.0
  %137 = vmatpush1.msra.mxu0 0.0
  %138 = vmatprep.subr.mxu0 0.0
  %139 = vmatpush1.msra.mxu0 0.0
  %140 = vmatprep.subr.mxu0 0.0
  %141 = vmatpush1.msra.mxu0 0.0
  %142 = vmatprep.subr.mxu0 0.0
  %143 = vmatpush1.msra.mxu0 0.0
  %144 = vmatprep.subr.mxu0 0.0
  %145 = vmatpush1.msra.mxu0 0.0
  %146 = vmatprep.subr.mxu0 0.0
  %147 = vmatpush1.msra.mxu0 0.0
  %148 = vmatprep.subr.mxu0 %v53
  %149 = vmatpush1.msra.mxu0 %v50
  %150 = vmatprep.subr.mxu0 %v33
  %151 = vmatpush1.msra.mxu0 %v32
  %152 = vmatprep.subr.mxu0 %v29
  %153 = vmatpush1.msra.mxu0 %v28
  %154 = vmatprep.subr.mxu0 %v25
  %155 = vmatpush1.msra.mxu0 %v24
  %156 = vmatprep.subr.mxu0 %v21
  %157 = vmatpush1.msra.mxu0 %v20
  %158 = vmatprep.subr.mxu0 0.0
  %159 = vmatpush2.msra.mxu0 0.0
  %160 = vmatprep.subr.mxu0 0.0
  %161 = vmatpush2.msra.mxu0 0.0
  %162 = vmatprep.subr.mxu0 0.0
  %163 = vmatpush2.msra.mxu0 0.0
  %164 = vmatprep.subr.mxu0 0.0
  %165 = vmatpush2.msra.mxu0 0.0
  %166 = vmatprep.subr.mxu0 0.0
  %167 = vmatpush2.msra.mxu0 0.0
  %168 = vmatprep.subr.mxu0 0.0
  %169 = vmatpush2.msra.mxu0 0.0
  %170 = vmatprep.subr.mxu0 0.0
  %171 = vmatpush2.msra.mxu0 0.0
  %172 = vmatprep.subr.mxu0 0.0
  %173 = vmatpush2.msra.mxu0 0.0
  %174 = vmatprep.subr.mxu0 0.0
  %175 = vmatpush2.msra.mxu0 0.0
  %176 = vmatprep.subr.mxu0 0.0
  %177 = vmatpush2.msra.mxu0 0.0
  %178 = vmatprep.subr.mxu0 0.0
  %179 = vmatpush2.msra.mxu0 0.0
  %180 = vmatprep.subr.mxu0 0.0
  %181 = vmatpush2.msra.mxu0 0.0
  %182 = vmatprep.subr.mxu0 0.0
  %183 = vmatpush2.msra.mxu0 0.0
  %184 = vmatprep.subr.mxu0 0.0
  %185 = vmatpush2.msra.mxu0 0.0
  %186 = vmatprep.subr.mxu0 0.0
  %187 = vmatpush2.msra.mxu0 0.0
  %188 = vmatprep.subr.mxu0 0.0
  %189 = vmatpush2.msra.mxu0 0.0
  %190 = vmatprep.mubr.f32.mxu0 0.0
  %191 = vmatmul.mubr.f32.gmra.mxu0 %v40
  %v192 = vpop.f32.mrf.mxu0
  %v193 = vadd.f32 0.0, %v192
  %v194 = vpop.f32.mrf.mxu0
  %v195 = vadd.f32 0.0, %v194
  %196 = vdwg.mxu0
  %v197 = vld [vmem:[%s2] sm:$0xff]
  %199 = vset.pattern.permute.xlu0 0
  %200 = vperm.xlu0 %199, %v197
  %v201 = vpop.permute.xlu0 %200
  %v203 = vmul.f32 %v122, %v201
  %v204 = vmul.f32 %v124, %v201
  %v205 = vmul.f32 %v193, %v201
  %v206 = vmul.f32 %v195, %v201
  %v207 = vld [vmem:[%s3] sm:$0xff]
  %209 = vset.pattern.permute.xlu0 0
  %210 = vperm.xlu0 %209, %v207
  %v211 = vpop.permute.xlu0 %210
  %v213 = vadd.f32 %v203, %v211
  %v214 = vadd.f32 %v204, %v211
  %v215 = vadd.f32 %v205, %v211
  %v216 = vadd.f32 %v206, %v211
  %v217 = vsub.f32 0.0, %v213
  %v218 = vsub.f32 0.0, %v214
  %v219 = vsub.f32 0.0, %v215
  %v220 = vsub.f32 0.0, %v216
  %v221 = vmul.f32 %v217, 1.442695
  %v222 = vpow.pop %v221
  %v223 = vmul.f32 %v218, 1.442695
  %v224 = vpow.pop %v223
  %v225 = vmul.f32 %v219, 1.442695
  %v226 = vpow.pop %v225
  %v227 = vmul.f32 %v220, 1.442695
  %v228 = vpow.pop %v227
  %v229 = vadd.f32 %v222, 1.0
  %v230 = vadd.f32 %v224, 1.0
  %v231 = vadd.f32 %v226, 1.0
  %v232 = vadd.f32 %v228, 1.0
  %v233 = vrcp.pop %v229
  %v234 = vmul.f32 1.0, %v233
  %v235 = vrcp.pop %v230
  %v236 = vmul.f32 1.0, %v235
  %v237 = vrcp.pop %v231
  %v238 = vmul.f32 1.0, %v237
  %v239 = vrcp.pop %v232
  %v240 = vmul.f32 1.0, %v239
  %v241 = vmul.f32 %v213, %v234
  %v242 = vmul.f32 %v214, %v236
  %v243 = vmul.f32 %v215, %v238
  %v244 = vmul.f32 %v216, %v240
  %245 = vst [vmem:[%s4] sm:$0xff] %v241
  %246 = vst [vmem:[%s4 + $0x8] sm:$0xff] %v242
  %247 = vst [vmem:[%s4 + $0x10] sm:$0xff] %v243
  %248 = vst [vmem:[%s4 + $0x18] sm:$0xff] %v244
  // Predicated region
  $region18: #{autoencoder_forward.7} parent=0 // pred_check
    _
  $region19: #{autoencoder_forward.7} parent=0 // pred_check_branch
    %250 = sbr.rel (0) target = $region21
  $region20: #{autoencoder_forward.7} parent=0 // pred_region
    _
  $region21: #{autoencoder_forward.7} parent=0 // pred_fallthru
    _
  // Predicated region
  $region22: #{autoencoder_forward.7} parent=0 // pred_check
    _
  $region23: #{autoencoder_forward.7} parent=0 // pred_check_branch
    %252 = sbr.rel (0) target = $region25
  $region24: #{autoencoder_forward.7} parent=0 // pred_region
    _
  $region25: #{autoencoder_forward.7} parent=0 // pred_fallthru
    _

// kernel: autoencoder_forward.8
$region0: #{autoencoder_forward.8}
  #allocation0 [shape = 'u32[]', space=smem, size = 0x4, offset = 0x4, fixed_abs, tag = 'smem constant byte address 0x4 - core index']
  #allocation1 [shape = 'u32[144,128]{1,0:T(1,128)}', space=vmem, size = 0x12000, scoped, tag = 'internal scratch']
  %s0 = inlined_call_operand.vmem [shape: f32[72,512], index: 0, kind: input, shape index: {}]
  %s1 = inlined_call_operand.vmem [shape: f32[32,72], index: 1, kind: input, shape index: {}]
  %s2 = inlined_call_operand.vmem [shape: f32[32,1], index: 2, kind: input, shape index: {}]
  %s3 = inlined_call_operand.vmem [shape: f32[32,1], index: 3, kind: input, shape index: {}]
  %s4 = inlined_call_operand.vmem [shape: f32[32,512], index: 4, kind: output, shape index: {}]
  %s5 = sld [smem:[#allocation0]]
  $region26: #{autoencoder_forward.8} parent=0
    _
  %s7 = ssub.s32 1, %s5
  %s8 = scalar_select 0, %s7, %s5
  // Predicated region
  $region2: #{autoencoder_forward.8} parent=0 // pred_check
    _
  $region3: #{autoencoder_forward.8} parent=0 // pred_check_branch
    %10 = sbr.rel (0) target = $region5
  $region4: #{autoencoder_forward.8} parent=0 // pred_region
    _
  $region5: #{autoencoder_forward.8} parent=0 // pred_fallthru
    _
  // Predicated region
  $region6: #{autoencoder_forward.8} parent=0 // pred_check
    _
  $region7: #{autoencoder_forward.8} parent=0 // pred_check_branch
    %12 = sbr.rel (0) target = $region9
  $region8: #{autoencoder_forward.8} parent=0 // pred_region
    _
  $region9: #{autoencoder_forward.8} parent=0 // pred_fallthru
    _
  // Predicated region
  $region10: #{autoencoder_forward.8} parent=0 // pred_check
    _
  $region11: #{autoencoder_forward.8} parent=0 // pred_check_branch
    %14 = sbr.rel (0) target = $region13
  $region12: #{autoencoder_forward.8} parent=0 // pred_region
    _
  $region13: #{autoencoder_forward.8} parent=0 // pred_fallthru
    _
  // Predicated region
  $region14: #{autoencoder_forward.8} parent=0 // pred_check
    _
  $region15: #{autoencoder_forward.8} parent=0 // pred_check_branch
    %16 = sbr.rel (0) target = $region17
  $region16: #{autoencoder_forward.8} parent=0 // pred_region
    _
  $region17: #{autoencoder_forward.8} parent=0 // pred_fallthru
    _
  %v17 = vld [vmem:[%s1] sm:$0xff]
  %v18 = vld [vmem:[%s1 + $0x8] sm:$0xff]
  %v19 = vld [vmem:[%s1 + $0x10] sm:$0xff]
  %v20 = vld [vmem:[%s1 + $0x18] sm:$0xff]
  %v21 = vld [vmem:[%s0] sm:$0xff]
  %v22 = vld [vmem:[%s0 + $0x8] sm:$0xff]
  %v23 = vld [vmem:[%s0 + $0x10] sm:$0xff]
  %v24 = vld [vmem:[%s0 + $0x18] sm:$0xff]
  %v25 = vld [vmem:[%s0 + $0x20] sm:$0xff]
  %v26 = vld [vmem:[%s0 + $0x28] sm:$0xff]
  %v27 = vld [vmem:[%s0 + $0x30] sm:$0xff]
  %v28 = vld [vmem:[%s0 + $0x38] sm:$0xff]
  %v29 = vld [vmem:[%s0 + $0x40] sm:$0xff]
  %v30 = vld [vmem:[%s0 + $0x48] sm:$0xff]
  %v31 = vld [vmem:[%s0 + $0x50] sm:$0xff]
  %v32 = vld [vmem:[%s0 + $0x58] sm:$0xff]
  %v33 = vld [vmem:[%s0 + $0x60] sm:$0xff]
  %v34 = vld [vmem:[%s0 + $0x68] sm:$0xff]
  %v35 = vld [vmem:[%s0 + $0x70] sm:$0xff]
  %v36 = vld [vmem:[%s0 + $0x78] sm:$0xff]
  %v37 = vld [vmem:[%s0 + $0x80] sm:$0xff]
  %v38 = vld [vmem:[%s0 + $0x88] sm:$0xff]
  %v39 = vld [vmem:[%s0 + $0x90] sm:$0xff]
  %v40 = vld [vmem:[%s0 + $0x98] sm:$0xff]
  %v41 = vld [vmem:[%s0 + $0xa0] sm:$0xff]
  %v42 = vld [vmem:[%s0 + $0xa8] sm:$0xff]
  %v43 = vld [vmem:[%s0 + $0xb0] sm:$0xff]
  %v44 = vld [vmem:[%s0 + $0xb8] sm:$0xff]
  %v45 = vld [vmem:[%s0 + $0xc0] sm:$0xff]
  %v46 = vld [vmem:[%s0 + $0xc8] sm:$0xff]
  %v47 = vld [vmem:[%s0 + $0xd0] sm:$0xff]
  %v48 = vld [vmem:[%s0 + $0xd8] sm:$0xff]
  %v49 = vld [vmem:[%s0 + $0xe0] sm:$0xff]
  %v50 = vld [vmem:[%s0 + $0xe8] sm:$0xff]
  %v51 = vld [vmem:[%s0 + $0xf0] sm:$0xff]
  %v52 = vld [vmem:[%s0 + $0xf8] sm:$0xff]
  %v53 = vld [vmem:[%s0 + $0x100] sm:$0xff]
  %v54 = vld [vmem:[%s0 + $0x108] sm:$0xff]
  %v55 = vld [vmem:[%s0 + $0x110] sm:$0xff]
  %v56 = vld [vmem:[%s0 + $0x118] sm:$0xff]
  %vm57 = vcmask 588800
  %v59 = vsel %vm57, %v17, 0
  %v62 = vsel %vm57, %v18, 0
  %v65 = vsel %vm57, %v19, 0
  %v68 = vsel %vm57, %v20, 0
  %70 = vmatprep.subr.mxu0 0.0
  %71 = vmatpush1.msra.mxu0 0.0
  %72 = vmatprep.subr.mxu0 0.0
  %73 = vmatpush1.msra.mxu0 0.0
  %74 = vmatprep.subr.mxu0 0.0
  %75 = vmatpush1.msra.mxu0 0.0
  %76 = vmatprep.subr.mxu0 0.0
  %77 = vmatpush1.msra.mxu0 0.0
  %78 = vmatprep.subr.mxu0 0.0
  %79 = vmatpush1.msra.mxu0 0.0
  %80 = vmatprep.subr.mxu0 0.0
  %81 = vmatpush1.msra.mxu0 0.0
  %82 = vmatprep.subr.mxu0 0.0
  %83 = vmatpush1.msra.mxu0 0.0
  %84 = vmatprep.subr.mxu0 %v54
  %85 = vmatpush1.msra.mxu0 %v53
  %86 = vmatprep.subr.mxu0 %v50
  %87 = vmatpush1.msra.mxu0 %v49
  %88 = vmatprep.subr.mxu0 %v46
  %89 = vmatpush1.msra.mxu0 %v45
  %90 = vmatprep.subr.mxu0 %v42
  %91 = vmatpush1.msra.mxu0 %v41
  %92 = vmatprep.subr.mxu0 %v38
  %93 = vmatpush1.msra.mxu0 %v37
  %94 = vmatprep.subr.mxu0 %v34
  %95 = vmatpush1.msra.mxu0 %v33
  %96 = vmatprep.subr.mxu0 %v30
  %97 = vmatpush1.msra.mxu0 %v29
  %98 = vmatprep.subr.mxu0 %v26
  %99 = vmatpush1.msra.mxu0 %v25
  %100 = vmatprep.subr.mxu0 %v22
  %101 = vmatpush1.msra.mxu0 %v21
  %102 = vmatprep.subr.mxu0 0.0
  %103 = vmatpush2.msra.mxu0 0.0
  %104 = vmatprep.subr.mxu0 0.0
  %105 = vmatpush2.msra.mxu0 0.0
  %106 = vmatprep.subr.mxu0 0.0
  %107 = vmatpush2.msra.mxu0 0.0
  %108 = vmatprep.subr.mxu0 0.0
  %109 = vmatpush2.msra.mxu0 0.0
  %110 = vmatprep.subr.mxu0 0.0
  %111 = vmatpush2.msra.mxu0 0.0
  %112 = vmatprep.subr.mxu0 0.0
  %113 = vmatpush2.msra.mxu0 0.0
  %114 = vmatprep.subr.mxu0 0.0
  %115 = vmatpush2.msra.mxu0 0.0
  %116 = vmatprep.subr.mxu0 0.0
  %117 = vmatpush2.msra.mxu0 0.0
  %118 = vmatprep.subr.mxu0 0.0
  %119 = vmatpush2.msra.mxu0 0.0
  %120 = vmatprep.subr.mxu0 0.0
  %121 = vmatpush2.msra.mxu0 0.0
  %122 = vmatprep.subr.mxu0 0.0
  %123 = vmatpush2.msra.mxu0 0.0
  %124 = vmatprep.subr.mxu0 0.0
  %125 = vmatpush2.msra.mxu0 0.0
  %126 = vmatprep.subr.mxu0 0.0
  %127 = vmatpush2.msra.mxu0 0.0
  %128 = vmatprep.subr.mxu0 0.0
  %129 = vmatpush2.msra.mxu0 0.0
  %130 = vmatprep.subr.mxu0 0.0
  %131 = vmatpush2.msra.mxu0 0.0
  %132 = vmatprep.subr.mxu0 0.0
  %133 = vmatpush2.msra.mxu0 0.0
  %134 = vmatprep.mubr.f32.mxu0 0.0
  %135 = vmatmul.mubr.f32.gmra.mxu0 %v59
  %v136 = vpop.f32.mrf.mxu0
  %v137 = vadd.f32 0.0, %v136
  %v138 = vpop.f32.mrf.mxu0
  %v139 = vadd.f32 0.0, %v138
  %140 = vmatprep.mubr.f32.mxu0 0.0
  %141 = vmatmul.mubr.f32.gmra.mxu0 %v62
  %v142 = vpop.f32.mrf.mxu0
  %v143 = vadd.f32 0.0, %v142
  %v144 = vpop.f32.mrf.mxu0
  %v145 = vadd.f32 0.0, %v144
  %146 = vmatprep.mubr.f32.mxu0 0.0
  %147 = vmatmul.mubr.f32.gmra.mxu0 %v65
  %v148 = vpop.f32.mrf.mxu0
  %v149 = vadd.f32 0.0, %v148
  %v150 = vpop.f32.mrf.mxu0
  %v151 = vadd.f32 0.0, %v150
  %152 = vmatprep.mubr.f32.mxu0 0.0
  %153 = vmatmul.mubr.f32.gmra.mxu0 %v68
  %v154 = vpop.f32.mrf.mxu0
  %v155 = vadd.f32 0.0, %v154
  %v156 = vpop.f32.mrf.mxu0
  %v157 = vadd.f32 0.0, %v156
  %158 = vdwg.mxu0
  %159 = vmatprep.subr.mxu0 0.0
  %160 = vmatpush1.msra.mxu0 0.0
  %161 = vmatprep.subr.mxu0 0.0
  %162 = vmatpush1.msra.mxu0 0.0
  %163 = vmatprep.subr.mxu0 0.0
  %164 = vmatpush1.msra.mxu0 0.0
  %165 = vmatprep.subr.mxu0 0.0
  %166 = vmatpush1.msra.mxu0 0.0
  %167 = vmatprep.subr.mxu0 0.0
  %168 = vmatpush1.msra.mxu0 0.0
  %169 = vmatprep.subr.mxu0 0.0
  %170 = vmatpush1.msra.mxu0 0.0
  %171 = vmatprep.subr.mxu0 0.0
  %172 = vmatpush1.msra.mxu0 0.0
  %173 = vmatprep.subr.mxu0 %v56
  %174 = vmatpush1.msra.mxu0 %v55
  %175 = vmatprep.subr.mxu0 %v52
  %176 = vmatpush1.msra.mxu0 %v51
  %177 = vmatprep.subr.mxu0 %v48
  %178 = vmatpush1.msra.mxu0 %v47
  %179 = vmatprep.subr.mxu0 %v44
  %180 = vmatpush1.msra.mxu0 %v43
  %181 = vmatprep.subr.mxu0 %v40
  %182 = vmatpush1.msra.mxu0 %v39
  %183 = vmatprep.subr.mxu0 %v36
  %184 = vmatpush1.msra.mxu0 %v35
  %185 = vmatprep.subr.mxu0 %v32
  %186 = vmatpush1.msra.mxu0 %v31
  %187 = vmatprep.subr.mxu0 %v28
  %188 = vmatpush1.msra.mxu0 %v27
  %189 = vmatprep.subr.mxu0 %v24
  %190 = vmatpush1.msra.mxu0 %v23
  %191 = vmatprep.subr.mxu0 0.0
  %192 = vmatpush2.msra.mxu0 0.0
  %193 = vmatprep.subr.mxu0 0.0
  %194 = vmatpush2.msra.mxu0 0.0
  %195 = vmatprep.subr.mxu0 0.0
  %196 = vmatpush2.msra.mxu0 0.0
  %197 = vmatprep.subr.mxu0 0.0
  %198 = vmatpush2.msra.mxu0 0.0
  %199 = vmatprep.subr.mxu0 0.0
  %200 = vmatpush2.msra.mxu0 0.0
  %201 = vmatprep.subr.mxu0 0.0
  %202 = vmatpush2.msra.mxu0 0.0
  %203 = vmatprep.subr.mxu0 0.0
  %204 = vmatpush2.msra.mxu0 0.0
  %205 = vmatprep.subr.mxu0 0.0
  %206 = vmatpush2.msra.mxu0 0.0
  %207 = vmatprep.subr.mxu0 0.0
  %208 = vmatpush2.msra.mxu0 0.0
  %209 = vmatprep.subr.mxu0 0.0
  %210 = vmatpush2.msra.mxu0 0.0
  %211 = vmatprep.subr.mxu0 0.0
  %212 = vmatpush2.msra.mxu0 0.0
  %213 = vmatprep.subr.mxu0 0.0
  %214 = vmatpush2.msra.mxu0 0.0
  %215 = vmatprep.subr.mxu0 0.0
  %216 = vmatpush2.msra.mxu0 0.0
  %217 = vmatprep.subr.mxu0 0.0
  %218 = vmatpush2.msra.mxu0 0.0
  %219 = vmatprep.subr.mxu0 0.0
  %220 = vmatpush2.msra.mxu0 0.0
  %221 = vmatprep.subr.mxu0 0.0
  %222 = vmatpush2.msra.mxu0 0.0
  %223 = vmatprep.mubr.f32.mxu0 0.0
  %224 = vmatmul.mubr.f32.gmra.mxu0 %v59
  %v225 = vpop.f32.mrf.mxu0
  %v226 = vadd.f32 0.0, %v225
  %v227 = vpop.f32.mrf.mxu0
  %v228 = vadd.f32 0.0, %v227
  %229 = vmatprep.mubr.f32.mxu0 0.0
  %230 = vmatmul.mubr.f32.gmra.mxu0 %v62
  %v231 = vpop.f32.mrf.mxu0
  %v232 = vadd.f32 0.0, %v231
  %v233 = vpop.f32.mrf.mxu0
  %v234 = vadd.f32 0.0, %v233
  %235 = vmatprep.mubr.f32.mxu0 0.0
  %236 = vmatmul.mubr.f32.gmra.mxu0 %v65
  %v237 = vpop.f32.mrf.mxu0
  %v238 = vadd.f32 0.0, %v237
  %v239 = vpop.f32.mrf.mxu0
  %v240 = vadd.f32 0.0, %v239
  %241 = vmatprep.mubr.f32.mxu0 0.0
  %242 = vmatmul.mubr.f32.gmra.mxu0 %v68
  %v243 = vpop.f32.mrf.mxu0
  %v244 = vadd.f32 0.0, %v243
  %v245 = vpop.f32.mrf.mxu0
  %v246 = vadd.f32 0.0, %v245
  %247 = vdwg.mxu0
  %v248 = vld [vmem:[%s2] sm:$0xff]
  %v249 = vld [vmem:[%s2 + $0x8] sm:$0xff]
  %v250 = vld [vmem:[%s2 + $0x10] sm:$0xff]
  %v251 = vld [vmem:[%s2 + $0x18] sm:$0xff]
  %253 = vset.pattern.permute.xlu0 0
  %254 = vperm.xlu0 %253, %v248
  %v255 = vpop.permute.xlu0 %254
  %258 = vset.pattern.permute.xlu0 0
  %259 = vperm.xlu0 %258, %v249
  %v260 = vpop.permute.xlu0 %259
  %263 = vset.pattern.permute.xlu0 0
  %264 = vperm.xlu0 %263, %v250
  %v265 = vpop.permute.xlu0 %264
  %268 = vset.pattern.permute.xlu0 0
  %269 = vperm.xlu0 %268, %v251
  %v270 = vpop.permute.xlu0 %269
  %v272 = vmul.f32 %v137, %v255
  %v273 = vmul.f32 %v139, %v255
  %v274 = vmul.f32 %v226, %v255
  %v275 = vmul.f32 %v228, %v255
  %v276 = vmul.f32 %v143, %v260
  %v277 = vmul.f32 %v145, %v260
  %v278 = vmul.f32 %v232, %v260
  %v279 = vmul.f32 %v234, %v260
  %v280 = vmul.f32 %v149, %v265
  %v281 = vmul.f32 %v151, %v265
  %v282 = vmul.f32 %v238, %v265
  %v283 = vmul.f32 %v240, %v265
  %v284 = vmul.f32 %v155, %v270
  %v285 = vmul.f32 %v157, %v270
  %v286 = vmul.f32 %v244, %v270
  %v287 = vmul.f32 %v246, %v270
  %v288 = vld [vmem:[%s3] sm:$0xff]
  %v289 = vld [vmem:[%s3 + $0x8] sm:$0xff]
  %v290 = vld [vmem:[%s3 + $0x10] sm:$0xff]
  %v291 = vld [vmem:[%s3 + $0x18] sm:$0xff]
  %293 = vset.pattern.permute.xlu0 0
  %294 = vperm.xlu0 %293, %v288
  %v295 = vpop.permute.xlu0 %294
  %298 = vset.pattern.permute.xlu0 0
  %299 = vperm.xlu0 %298, %v289
  %v300 = vpop.permute.xlu0 %299
  %303 = vset.pattern.permute.xlu0 0
  %304 = vperm.xlu0 %303, %v290
  %v305 = vpop.permute.xlu0 %304
  %308 = vset.pattern.permute.xlu0 0
  %309 = vperm.xlu0 %308, %v291
  %v310 = vpop.permute.xlu0 %309
  %v312 = vadd.f32 %v272, %v295
  %v313 = vadd.f32 %v273, %v295
  %v314 = vadd.f32 %v274, %v295
  %v315 = vadd.f32 %v275, %v295
  %v316 = vadd.f32 %v276, %v300
  %v317 = vadd.f32 %v277, %v300
  %v318 = vadd.f32 %v278, %v300
  %v319 = vadd.f32 %v279, %v300
  %v320 = vadd.f32 %v280, %v305
  %v321 = vadd.f32 %v281, %v305
  %v322 = vadd.f32 %v282, %v305
  %v323 = vadd.f32 %v283, %v305
  %v324 = vadd.f32 %v284, %v310
  %v325 = vadd.f32 %v285, %v310
  %v326 = vadd.f32 %v286, %v310
  %v327 = vadd.f32 %v287, %v310
  %328 = vst [vmem:[%s4] sm:$0xff] %v312
  %329 = vst [vmem:[%s4 + $0x8] sm:$0xff] %v313
  %330 = vst [vmem:[%s4 + $0x10] sm:$0xff] %v314
  %331 = vst [vmem:[%s4 + $0x18] sm:$0xff] %v315
  %332 = vst [vmem:[%s4 + $0x20] sm:$0xff] %v316
  %333 = vst [vmem:[%s4 + $0x28] sm:$0xff] %v317
  %334 = vst [vmem:[%s4 + $0x30] sm:$0xff] %v318
  %335 = vst [vmem:[%s4 + $0x38] sm:$0xff] %v319
  %336 = vst [vmem:[%s4 + $0x40] sm:$0xff] %v320
  %337 = vst [vmem:[%s4 + $0x48] sm:$0xff] %v321
  %338 = vst [vmem:[%s4 + $0x50] sm:$0xff] %v322
  %339 = vst [vmem:[%s4 + $0x58] sm:$0xff] %v323
  %340 = vst [vmem:[%s4 + $0x60] sm:$0xff] %v324
  %341 = vst [vmem:[%s4 + $0x68] sm:$0xff] %v325
  %342 = vst [vmem:[%s4 + $0x70] sm:$0xff] %v326
  %343 = vst [vmem:[%s4 + $0x78] sm:$0xff] %v327
  // Predicated region
  $region18: #{autoencoder_forward.8} parent=0 // pred_check
    _
  $region19: #{autoencoder_forward.8} parent=0 // pred_check_branch
    %345 = sbr.rel (0) target = $region21
  $region20: #{autoencoder_forward.8} parent=0 // pred_region
    _
  $region21: #{autoencoder_forward.8} parent=0 // pred_fallthru
    _
  // Predicated region
  $region22: #{autoencoder_forward.8} parent=0 // pred_check
    _
  $region23: #{autoencoder_forward.8} parent=0 // pred_check_branch
    %347 = sbr.rel (0) target = $region25
  $region24: #{autoencoder_forward.8} parent=0 // pred_region
    _
  $region25: #{autoencoder_forward.8} parent=0 // pred_fallthru
    _

// kernel: autoencoder_forward.9
$region0: #{autoencoder_forward.9}
  #allocation0 [shape = 'u32[]', space=smem, size = 0x4, offset = 0x4, fixed_abs, tag = 'smem constant byte address 0x4 - core index']
  #allocation1 [shape = 'u32[144,128]{1,0:T(1,128)}', space=vmem, size = 0x12000, scoped, tag = 'internal scratch']
  %s0 = inlined_call_operand.vmem [shape: f32[288,512], index: 0, kind: input, shape index: {}]
  %s1 = inlined_call_operand.vmem [shape: f32[8,288], index: 1, kind: input, shape index: {}]
  %s2 = inlined_call_operand.vmem [shape: f32[8,1], index: 2, kind: input, shape index: {}]
  %s3 = inlined_call_operand.vmem [shape: f32[8,1], index: 3, kind: input, shape index: {}]
  %s4 = inlined_call_operand.vmem [shape: f32[8,512], index: 4, kind: output, shape index: {}]
  %s5 = sld [smem:[#allocation0]]
  $region26: #{autoencoder_forward.9} parent=0
    _
  %s7 = ssub.s32 1, %s5
  %s8 = scalar_select 0, %s7, %s5
  // Predicated region
  $region2: #{autoencoder_forward.9} parent=0 // pred_check
    _
  $region3: #{autoencoder_forward.9} parent=0 // pred_check_branch
    %10 = sbr.rel (0) target = $region5
  $region4: #{autoencoder_forward.9} parent=0 // pred_region
    _
  $region5: #{autoencoder_forward.9} parent=0 // pred_fallthru
    _
  // Predicated region
  $region6: #{autoencoder_forward.9} parent=0 // pred_check
    _
  $region7: #{autoencoder_forward.9} parent=0 // pred_check_branch
    %12 = sbr.rel (0) target = $region9
  $region8: #{autoencoder_forward.9} parent=0 // pred_region
    _
  $region9: #{autoencoder_forward.9} parent=0 // pred_fallthru
    _
  // Predicated region
  $region10: #{autoencoder_forward.9} parent=0 // pred_check
    _
  $region11: #{autoencoder_forward.9} parent=0 // pred_check_branch
    %14 = sbr.rel (0) target = $region13
  $region12: #{autoencoder_forward.9} parent=0 // pred_region
    _
  $region13: #{autoencoder_forward.9} parent=0 // pred_fallthru
    _
  // Predicated region
  $region14: #{autoencoder_forward.9} parent=0 // pred_check
    _
  $region15: #{autoencoder_forward.9} parent=0 // pred_check_branch
    %16 = sbr.rel (0) target = $region17
  $region16: #{autoencoder_forward.9} parent=0 // pred_region
    _
  $region17: #{autoencoder_forward.9} parent=0 // pred_fallthru
    _
  %v17 = vld [vmem:[%s1] sm:$0xff]
  %v18 = vld [vmem:[%s1 + $0x8] sm:$0xff]
  %v19 = vld [vmem:[%s1 + $0x10] sm:$0xff]
  %v20 = vld [vmem:[%s0] sm:$0xff]
  %v21 = vld [vmem:[%s0 + $0x8] sm:$0xff]
  %v22 = vld [vmem:[%s0 + $0x10] sm:$0xff]
  %v23 = vld [vmem:[%s0 + $0x18] sm:$0xff]
  %v24 = vld [vmem:[%s0 + $0x20] sm:$0xff]
  %v25 = vld [vmem:[%s0 + $0x28] sm:$0xff]
  %v26 = vld [vmem:[%s0 + $0x30] sm:$0xff]
  %v27 = vld [vmem:[%s0 + $0x38] sm:$0xff]
  %v28 = vld [vmem:[%s0 + $0x40] sm:$0xff]
  %v29 = vld [vmem:[%s0 + $0x48] sm:$0xff]
  %v30 = vld [vmem:[%s0 + $0x50] sm:$0xff]
  %v31 = vld [vmem:[%s0 + $0x58] sm:$0xff]
  %v32 = vld [vmem:[%s0 + $0x60] sm:$0xff]
  %v33 = vld [vmem:[%s0 + $0x68] sm:$0xff]
  %v34 = vld [vmem:[%s0 + $0x70] sm:$0xff]
  %v35 = vld [vmem:[%s0 + $0x78] sm:$0xff]
  %v36 = vld [vmem:[%s0 + $0x80] sm:$0xff]
  %v37 = vld [vmem:[%s0 + $0x88] sm:$0xff]
  %v38 = vld [vmem:[%s0 + $0x90] sm:$0xff]
  %v39 = vld [vmem:[%s0 + $0x98] sm:$0xff]
  %v40 = vld [vmem:[%s0 + $0xa0] sm:$0xff]
  %v41 = vld [vmem:[%s0 + $0xa8] sm:$0xff]
  %v42 = vld [vmem:[%s0 + $0xb0] sm:$0xff]
  %v43 = vld [vmem:[%s0 + $0xb8] sm:$0xff]
  %v44 = vld [vmem:[%s0 + $0xc0] sm:$0xff]
  %v45 = vld [vmem:[%s0 + $0xc8] sm:$0xff]
  %v46 = vld [vmem:[%s0 + $0xd0] sm:$0xff]
  %v47 = vld [vmem:[%s0 + $0xd8] sm:$0xff]
  %v48 = vld [vmem:[%s0 + $0xe0] sm:$0xff]
  %v49 = vld [vmem:[%s0 + $0xe8] sm:$0xff]
  %v50 = vld [vmem:[%s0 + $0xf0] sm:$0xff]
  %v51 = vld [vmem:[%s0 + $0xf8] sm:$0xff]
  %v52 = vld [vmem:[%s0 + $0x100] sm:$0xff]
  %v53 = vld [vmem:[%s0 + $0x108] sm:$0xff]
  %v54 = vld [vmem:[%s0 + $0x110] sm:$0xff]
  %v55 = vld [vmem:[%s0 + $0x118] sm:$0xff]
  %v56 = vld [vmem:[%s0 + $0x120] sm:$0xff]
  %v57 = vld [vmem:[%s0 + $0x128] sm:$0xff]
  %v58 = vld [vmem:[%s0 + $0x130] sm:$0xff]
  %v59 = vld [vmem:[%s0 + $0x138] sm:$0xff]
  %v60 = vld [vmem:[%s0 + $0x140] sm:$0xff]
  %v61 = vld [vmem:[%s0 + $0x148] sm:$0xff]
  %v62 = vld [vmem:[%s0 + $0x150] sm:$0xff]
  %v63 = vld [vmem:[%s0 + $0x158] sm:$0xff]
  %v64 = vld [vmem:[%s0 + $0x160] sm:$0xff]
  %v65 = vld [vmem:[%s0 + $0x168] sm:$0xff]
  %v66 = vld [vmem:[%s0 + $0x170] sm:$0xff]
  %v67 = vld [vmem:[%s0 + $0x178] sm:$0xff]
  %v68 = vld [vmem:[%s0 + $0x180] sm:$0xff]
  %v69 = vld [vmem:[%s0 + $0x188] sm:$0xff]
  %v70 = vld [vmem:[%s0 + $0x190] sm:$0xff]
  %v71 = vld [vmem:[%s0 + $0x198] sm:$0xff]
  %v72 = vld [vmem:[%s0 + $0x1a0] sm:$0xff]
  %v73 = vld [vmem:[%s0 + $0x1a8] sm:$0xff]
  %v74 = vld [vmem:[%s0 + $0x1b0] sm:$0xff]
  %v75 = vld [vmem:[%s0 + $0x1b8] sm:$0xff]
  %v76 = vld [vmem:[%s0 + $0x1c0] sm:$0xff]
  %v77 = vld [vmem:[%s0 + $0x1c8] sm:$0xff]
  %v78 = vld [vmem:[%s0 + $0x1d0] sm:$0xff]
  %v79 = vld [vmem:[%s0 + $0x1d8] sm:$0xff]
  %v80 = vld [vmem:[%s0 + $0x1e0] sm:$0xff]
  %v81 = vld [vmem:[%s0 + $0x1e8] sm:$0xff]
  %v82 = vld [vmem:[%s0 + $0x1f0] sm:$0xff]
  %v83 = vld [vmem:[%s0 + $0x1f8] sm:$0xff]
  %v84 = vld [vmem:[%s0 + $0x200] sm:$0xff]
  %v85 = vld [vmem:[%s0 + $0x208] sm:$0xff]
  %v86 = vld [vmem:[%s0 + $0x210] sm:$0xff]
  %v87 = vld [vmem:[%s0 + $0x218] sm:$0xff]
  %v88 = vld [vmem:[%s0 + $0x220] sm:$0xff]
  %v89 = vld [vmem:[%s0 + $0x228] sm:$0xff]
  %v90 = vld [vmem:[%s0 + $0x230] sm:$0xff]
  %v91 = vld [vmem:[%s0 + $0x238] sm:$0xff]
  %v92 = vld [vmem:[%s0 + $0x240] sm:$0xff]
  %v93 = vld [vmem:[%s0 + $0x248] sm:$0xff]
  %v94 = vld [vmem:[%s0 + $0x250] sm:$0xff]
  %v95 = vld [vmem:[%s0 + $0x258] sm:$0xff]
  %v96 = vld [vmem:[%s0 + $0x260] sm:$0xff]
  %v97 = vld [vmem:[%s0 + $0x268] sm:$0xff]
  %v98 = vld [vmem:[%s0 + $0x270] sm:$0xff]
  %v99 = vld [vmem:[%s0 + $0x278] sm:$0xff]
  %v100 = vld [vmem:[%s0 + $0x280] sm:$0xff]
  %v101 = vld [vmem:[%s0 + $0x288] sm:$0xff]
  %v102 = vld [vmem:[%s0 + $0x290] sm:$0xff]
  %v103 = vld [vmem:[%s0 + $0x298] sm:$0xff]
  %v104 = vld [vmem:[%s0 + $0x2a0] sm:$0xff]
  %v105 = vld [vmem:[%s0 + $0x2a8] sm:$0xff]
  %v106 = vld [vmem:[%s0 + $0x2b0] sm:$0xff]
  %v107 = vld [vmem:[%s0 + $0x2b8] sm:$0xff]
  %v108 = vld [vmem:[%s0 + $0x2c0] sm:$0xff]
  %v109 = vld [vmem:[%s0 + $0x2c8] sm:$0xff]
  %v110 = vld [vmem:[%s0 + $0x2d0] sm:$0xff]
  %v111 = vld [vmem:[%s0 + $0x2d8] sm:$0xff]
  %v112 = vld [vmem:[%s0 + $0x2e0] sm:$0xff]
  %v113 = vld [vmem:[%s0 + $0x2e8] sm:$0xff]
  %v114 = vld [vmem:[%s0 + $0x2f0] sm:$0xff]
  %v115 = vld [vmem:[%s0 + $0x2f8] sm:$0xff]
  %v116 = vld [vmem:[%s0 + $0x300] sm:$0xff]
  %v117 = vld [vmem:[%s0 + $0x308] sm:$0xff]
  %v118 = vld [vmem:[%s0 + $0x310] sm:$0xff]
  %v119 = vld [vmem:[%s0 + $0x318] sm:$0xff]
  %v120 = vld [vmem:[%s0 + $0x320] sm:$0xff]
  %v121 = vld [vmem:[%s0 + $0x328] sm:$0xff]
  %v122 = vld [vmem:[%s0 + $0x330] sm:$0xff]
  %v123 = vld [vmem:[%s0 + $0x338] sm:$0xff]
  %v124 = vld [vmem:[%s0 + $0x340] sm:$0xff]
  %v125 = vld [vmem:[%s0 + $0x348] sm:$0xff]
  %v126 = vld [vmem:[%s0 + $0x350] sm:$0xff]
  %v127 = vld [vmem:[%s0 + $0x358] sm:$0xff]
  %v128 = vld [vmem:[%s0 + $0x360] sm:$0xff]
  %v129 = vld [vmem:[%s0 + $0x368] sm:$0xff]
  %v130 = vld [vmem:[%s0 + $0x370] sm:$0xff]
  %v131 = vld [vmem:[%s0 + $0x378] sm:$0xff]
  %v132 = vld [vmem:[%s0 + $0x380] sm:$0xff]
  %v133 = vld [vmem:[%s0 + $0x388] sm:$0xff]
  %v134 = vld [vmem:[%s0 + $0x390] sm:$0xff]
  %v135 = vld [vmem:[%s0 + $0x398] sm:$0xff]
  %v136 = vld [vmem:[%s0 + $0x3a0] sm:$0xff]
  %v137 = vld [vmem:[%s0 + $0x3a8] sm:$0xff]
  %v138 = vld [vmem:[%s0 + $0x3b0] sm:$0xff]
  %v139 = vld [vmem:[%s0 + $0x3b8] sm:$0xff]
  %v140 = vld [vmem:[%s0 + $0x3c0] sm:$0xff]
  %v141 = vld [vmem:[%s0 + $0x3c8] sm:$0xff]
  %v142 = vld [vmem:[%s0 + $0x3d0] sm:$0xff]
  %v143 = vld [vmem:[%s0 + $0x3d8] sm:$0xff]
  %v144 = vld [vmem:[%s0 + $0x3e0] sm:$0xff]
  %v145 = vld [vmem:[%s0 + $0x3e8] sm:$0xff]
  %v146 = vld [vmem:[%s0 + $0x3f0] sm:$0xff]
  %v147 = vld [vmem:[%s0 + $0x3f8] sm:$0xff]
  %v148 = vld [vmem:[%s0 + $0x400] sm:$0xff]
  %v149 = vld [vmem:[%s0 + $0x408] sm:$0xff]
  %v150 = vld [vmem:[%s0 + $0x410] sm:$0xff]
  %v151 = vld [vmem:[%s0 + $0x418] sm:$0xff]
  %v152 = vld [vmem:[%s0 + $0x420] sm:$0xff]
  %v153 = vld [vmem:[%s0 + $0x428] sm:$0xff]
  %v154 = vld [vmem:[%s0 + $0x430] sm:$0xff]
  %v155 = vld [vmem:[%s0 + $0x438] sm:$0xff]
  %v156 = vld [vmem:[%s0 + $0x440] sm:$0xff]
  %v157 = vld [vmem:[%s0 + $0x448] sm:$0xff]
  %v158 = vld [vmem:[%s0 + $0x450] sm:$0xff]
  %v159 = vld [vmem:[%s0 + $0x458] sm:$0xff]
  %v160 = vld [vmem:[%s0 + $0x460] sm:$0xff]
  %v161 = vld [vmem:[%s0 + $0x468] sm:$0xff]
  %v162 = vld [vmem:[%s0 + $0x470] sm:$0xff]
  %v163 = vld [vmem:[%s0 + $0x478] sm:$0xff]
  %vm164 = vcmask 261120
  %v166 = vsel %vm164, %v19, 0
  %168 = vmatprep.subr.mxu0 %v81
  %169 = vmatpush1.msra.mxu0 %v80
  %170 = vmatprep.subr.mxu0 %v77
  %171 = vmatpush1.msra.mxu0 %v76
  %172 = vmatprep.subr.mxu0 %v73
  %173 = vmatpush1.msra.mxu0 %v72
  %174 = vmatprep.subr.mxu0 %v69
  %175 = vmatpush1.msra.mxu0 %v68
  %176 = vmatprep.subr.mxu0 %v65
  %177 = vmatpush1.msra.mxu0 %v64
  %178 = vmatprep.subr.mxu0 %v61
  %179 = vmatpush1.msra.mxu0 %v60
  %180 = vmatprep.subr.mxu0 %v57
  %181 = vmatpush1.msra.mxu0 %v56
  %182 = vmatprep.subr.mxu0 %v53
  %183 = vmatpush1.msra.mxu0 %v52
  %184 = vmatprep.subr.mxu0 %v49
  %185 = vmatpush1.msra.mxu0 %v48
  %186 = vmatprep.subr.mxu0 %v45
  %187 = vmatpush1.msra.mxu0 %v44
  %188 = vmatprep.subr.mxu0 %v41
  %189 = vmatpush1.msra.mxu0 %v40
  %190 = vmatprep.subr.mxu0 %v37
  %191 = vmatpush1.msra.mxu0 %v36
  %192 = vmatprep.subr.mxu0 %v33
  %193 = vmatpush1.msra.mxu0 %v32
  %194 = vmatprep.subr.mxu0 %v29
  %195 = vmatpush1.msra.mxu0 %v28
  %196 = vmatprep.subr.mxu0 %v25
  %197 = vmatpush1.msra.mxu0 %v24
  %198 = vmatprep.subr.mxu0 %v21
  %199 = vmatpush1.msra.mxu0 %v20
  %200 = vmatprep.subr.mxu0 %v145
  %201 = vmatpush2.msra.mxu0 %v144
  %202 = vmatprep.subr.mxu0 %v141
  %203 = vmatpush2.msra.mxu0 %v140
  %204 = vmatprep.subr.mxu0 %v137
  %205 = vmatpush2.msra.mxu0 %v136
  %206 = vmatprep.subr.mxu0 %v133
  %207 = vmatpush2.msra.mxu0 %v132
  %208 = vmatprep.subr.mxu0 %v129
  %209 = vmatpush2.msra.mxu0 %v128
  %210 = vmatprep.subr.mxu0 %v125
  %211 = vmatpush2.msra.mxu0 %v124
  %212 = vmatprep.subr.mxu0 %v121
  %213 = vmatpush2.msra.mxu0 %v120
  %214 = vmatprep.subr.mxu0 %v117
  %215 = vmatpush2.msra.mxu0 %v116
  %216 = vmatprep.subr.mxu0 %v113
  %217 = vmatpush2.msra.mxu0 %v112
  %218 = vmatprep.subr.mxu0 %v109
  %219 = vmatpush2.msra.mxu0 %v108
  %220 = vmatprep.subr.mxu0 %v105
  %221 = vmatpush2.msra.mxu0 %v104
  %222 = vmatprep.subr.mxu0 %v101
  %223 = vmatpush2.msra.mxu0 %v100
  %224 = vmatprep.subr.mxu0 %v97
  %225 = vmatpush2.msra.mxu0 %v96
  %226 = vmatprep.subr.mxu0 %v93
  %227 = vmatpush2.msra.mxu0 %v92
  %228 = vmatprep.subr.mxu0 %v89
  %229 = vmatpush2.msra.mxu0 %v88
  %230 = vmatprep.subr.mxu0 %v85
  %231 = vmatpush2.msra.mxu0 %v84
  %232 = vmatprep.mubr.f32.mxu0 %v18
  %233 = vmatmul.mubr.f32.gmra.mxu0 %v17
  %v234 = vpop.f32.mrf.mxu0
  %v235 = vadd.f32 0.0, %v234
  %v236 = vpop.f32.mrf.mxu0
  %v237 = vadd.f32 0.0, %v236
  %238 = vdwg.mxu0
  %239 = vmatprep.subr.mxu0 0.0
  %240 = vmatpush1.msra.mxu0 0.0
  %241 = vmatprep.subr.mxu0 0.0
  %242 = vmatpush1.msra.mxu0 0.0
  %243 = vmatprep.subr.mxu0 0.0
  %244 = vmatpush1.msra.mxu0 0.0
  %245 = vmatprep.subr.mxu0 0.0
  %246 = vmatpush1.msra.mxu0 0.0
  %247 = vmatprep.subr.mxu0 0.0
  %248 = vmatpush1.msra.mxu0 0.0
  %249 = vmatprep.subr.mxu0 0.0
  %250 = vmatpush1.msra.mxu0 0.0
  %251 = vmatprep.subr.mxu0 0.0
  %252 = vmatpush1.msra.mxu0 0.0
  %253 = vmatprep.subr.mxu0 0.0
  %254 = vmatpush1.msra.mxu0 0.0
  %255 = vmatprep.subr.mxu0 0.0
  %256 = vmatpush1.msra.mxu0 0.0
  %257 = vmatprep.subr.mxu0 0.0
  %258 = vmatpush1.msra.mxu0 0.0
  %259 = vmatprep.subr.mxu0 0.0
  %260 = vmatpush1.msra.mxu0 0.0
  %261 = vmatprep.subr.mxu0 0.0
  %262 = vmatpush1.msra.mxu0 0.0
  %263 = vmatprep.subr.mxu0 %v161
  %264 = vmatpush1.msra.mxu0 %v160
  %265 = vmatprep.subr.mxu0 %v157
  %266 = vmatpush1.msra.mxu0 %v156
  %267 = vmatprep.subr.mxu0 %v153
  %268 = vmatpush1.msra.mxu0 %v152
  %269 = vmatprep.subr.mxu0 %v149
  %270 = vmatpush1.msra.mxu0 %v148
  %271 = vmatprep.subr.mxu0 0.0
  %272 = vmatpush2.msra.mxu0 0.0
  %273 = vmatprep.subr.mxu0 0.0
  %274 = vmatpush2.msra.mxu0 0.0
  %275 = vmatprep.subr.mxu0 0.0
  %276 = vmatpush2.msra.mxu0 0.0
  %277 = vmatprep.subr.mxu0 0.0
  %278 = vmatpush2.msra.mxu0 0.0
  %279 = vmatprep.subr.mxu0 0.0
  %280 = vmatpush2.msra.mxu0 0.0
  %281 = vmatprep.subr.mxu0 0.0
  %282 = vmatpush2.msra.mxu0 0.0
  %283 = vmatprep.subr.mxu0 0.0
  %284 = vmatpush2.msra.mxu0 0.0
  %285 = vmatprep.subr.mxu0 0.0
  %286 = vmatpush2.msra.mxu0 0.0
  %287 = vmatprep.subr.mxu0 0.0
  %288 = vmatpush2.msra.mxu0 0.0
  %289 = vmatprep.subr.mxu0 0.0
  %290 = vmatpush2.msra.mxu0 0.0
  %291 = vmatprep.subr.mxu0 0.0
  %292 = vmatpush2.msra.mxu0 0.0
  %293 = vmatprep.subr.mxu0 0.0
  %294 = vmatpush2.msra.mxu0 0.0
  %295 = vmatprep.subr.mxu0 0.0
  %296 = vmatpush2.msra.mxu0 0.0
  %297 = vmatprep.subr.mxu0 0.0
  %298 = vmatpush2.msra.mxu0 0.0
  %299 = vmatprep.subr.mxu0 0.0
  %300 = vmatpush2.msra.mxu0 0.0
  %301 = vmatprep.subr.mxu0 0.0
  %302 = vmatpush2.msra.mxu0 0.0
  %303 = vmatprep.mubr.f32.mxu0 0.0
  %304 = vmatmul.mubr.f32.gmra.mxu0 %v166
  %v305 = vpop.f32.mrf.mxu0
  %v306 = vadd.f32 %v235, %v305
  %v307 = vpop.f32.mrf.mxu0
  %v308 = vadd.f32 %v237, %v307
  %309 = vdwg.mxu0
  %310 = vmatprep.subr.mxu0 %v83
  %311 = vmatpush1.msra.mxu0 %v82
  %312 = vmatprep.subr.mxu0 %v79
  %313 = vmatpush1.msra.mxu0 %v78
  %314 = vmatprep.subr.mxu0 %v75
  %315 = vmatpush1.msra.mxu0 %v74
  %316 = vmatprep.subr.mxu0 %v71
  %317 = vmatpush1.msra.mxu0 %v70
  %318 = vmatprep.subr.mxu0 %v67
  %319 = vmatpush1.msra.mxu0 %v66
  %320 = vmatprep.subr.mxu0 %v63
  %321 = vmatpush1.msra.mxu0 %v62
  %322 = vmatprep.subr.mxu0 %v59
  %323 = vmatpush1.msra.mxu0 %v58
  %324 = vmatprep.subr.mxu0 %v55
  %325 = vmatpush1.msra.mxu0 %v54
  %326 = vmatprep.subr.mxu0 %v51
  %327 = vmatpush1.msra.mxu0 %v50
  %328 = vmatprep.subr.mxu0 %v47
  %329 = vmatpush1.msra.mxu0 %v46
  %330 = vmatprep.subr.mxu0 %v43
  %331 = vmatpush1.msra.mxu0 %v42
  %332 = vmatprep.subr.mxu0 %v39
  %333 = vmatpush1.msra.mxu0 %v38
  %334 = vmatprep.subr.mxu0 %v35
  %335 = vmatpush1.msra.mxu0 %v34
  %336 = vmatprep.subr.mxu0 %v31
  %337 = vmatpush1.msra.mxu0 %v30
  %338 = vmatprep.subr.mxu0 %v27
  %339 = vmatpush1.msra.mxu0 %v26
  %340 = vmatprep.subr.mxu0 %v23
  %341 = vmatpush1.msra.mxu0 %v22
  %342 = vmatprep.subr.mxu0 %v147
  %343 = vmatpush2.msra.mxu0 %v146
  %344 = vmatprep.subr.mxu0 %v143
  %345 = vmatpush2.msra.mxu0 %v142
  %346 = vmatprep.subr.mxu0 %v139
  %347 = vmatpush2.msra.mxu0 %v138
  %348 = vmatprep.subr.mxu0 %v135
  %349 = vmatpush2.msra.mxu0 %v134
  %350 = vmatprep.subr.mxu0 %v131
  %351 = vmatpush2.msra.mxu0 %v130
  %352 = vmatprep.subr.mxu0 %v127
  %353 = vmatpush2.msra.mxu0 %v126
  %354 = vmatprep.subr.mxu0 %v123
  %355 = vmatpush2.msra.mxu0 %v122
  %356 = vmatprep.subr.mxu0 %v119
  %357 = vmatpush2.msra.mxu0 %v118
  %358 = vmatprep.subr.mxu0 %v115
  %359 = vmatpush2.msra.mxu0 %v114
  %360 = vmatprep.subr.mxu0 %v111
  %361 = vmatpush2.msra.mxu0 %v110
  %362 = vmatprep.subr.mxu0 %v107
  %363 = vmatpush2.msra.mxu0 %v106
  %364 = vmatprep.subr.mxu0 %v103
  %365 = vmatpush2.msra.mxu0 %v102
  %366 = vmatprep.subr.mxu0 %v99
  %367 = vmatpush2.msra.mxu0 %v98
  %368 = vmatprep.subr.mxu0 %v95
  %369 = vmatpush2.msra.mxu0 %v94
  %370 = vmatprep.subr.mxu0 %v91
  %371 = vmatpush2.msra.mxu0 %v90
  %372 = vmatprep.subr.mxu0 %v87
  %373 = vmatpush2.msra.mxu0 %v86
  %374 = vmatprep.mubr.f32.mxu0 %v18
  %375 = vmatmul.mubr.f32.gmra.mxu0 %v17
  %v376 = vpop.f32.mrf.mxu0
  %v377 = vadd.f32 0.0, %v376
  %v378 = vpop.f32.mrf.mxu0
  %v379 = vadd.f32 0.0, %v378
  %380 = vdwg.mxu0
  %381 = vmatprep.subr.mxu0 0.0
  %382 = vmatpush1.msra.mxu0 0.0
  %383 = vmatprep.subr.mxu0 0.0
  %384 = vmatpush1.msra.mxu0 0.0
  %385 = vmatprep.subr.mxu0 0.0
  %386 = vmatpush1.msra.mxu0 0.0
  %387 = vmatprep.subr.mxu0 0.0
  %388 = vmatpush1.msra.mxu0 0.0
  %389 = vmatprep.subr.mxu0 0.0
  %390 = vmatpush1.msra.mxu0 0.0
  %391 = vmatprep.subr.mxu0 0.0
  %392 = vmatpush1.msra.mxu0 0.0
  %393 = vmatprep.subr.mxu0 0.0
  %394 = vmatpush1.msra.mxu0 0.0
  %395 = vmatprep.subr.mxu0 0.0
  %396 = vmatpush1.msra.mxu0 0.0
  %397 = vmatprep.subr.mxu0 0.0
  %398 = vmatpush1.msra.mxu0 0.0
  %399 = vmatprep.subr.mxu0 0.0
  %400 = vmatpush1.msra.mxu0 0.0
  %401 = vmatprep.subr.mxu0 0.0
  %402 = vmatpush1.msra.mxu0 0.0
  %403 = vmatprep.subr.mxu0 0.0
  %404 = vmatpush1.msra.mxu0 0.0
  %405 = vmatprep.subr.mxu0 %v163
  %406 = vmatpush1.msra.mxu0 %v162
  %407 = vmatprep.subr.mxu0 %v159
  %408 = vmatpush1.msra.mxu0 %v158
  %409 = vmatprep.subr.mxu0 %v155
  %410 = vmatpush1.msra.mxu0 %v154
  %411 = vmatprep.subr.mxu0 %v151
  %412 = vmatpush1.msra.mxu0 %v150
  %413 = vmatprep.subr.mxu0 0.0
  %414 = vmatpush2.msra.mxu0 0.0
  %415 = vmatprep.subr.mxu0 0.0
  %416 = vmatpush2.msra.mxu0 0.0
  %417 = vmatprep.subr.mxu0 0.0
  %418 = vmatpush2.msra.mxu0 0.0
  %419 = vmatprep.subr.mxu0 0.0
  %420 = vmatpush2.msra.mxu0 0.0
  %421 = vmatprep.subr.mxu0 0.0
  %422 = vmatpush2.msra.mxu0 0.0
  %423 = vmatprep.subr.mxu0 0.0
  %424 = vmatpush2.msra.mxu0 0.0
  %425 = vmatprep.subr.mxu0 0.0
  %426 = vmatpush2.msra.mxu0 0.0
  %427 = vmatprep.subr.mxu0 0.0
  %428 = vmatpush2.msra.mxu0 0.0
  %429 = vmatprep.subr.mxu0 0.0
  %430 = vmatpush2.msra.mxu0 0.0
  %431 = vmatprep.subr.mxu0 0.0
  %432 = vmatpush2.msra.mxu0 0.0
  %433 = vmatprep.subr.mxu0 0.0
  %434 = vmatpush2.msra.mxu0 0.0
  %435 = vmatprep.subr.mxu0 0.0
  %436 = vmatpush2.msra.mxu0 0.0
  %437 = vmatprep.subr.mxu0 0.0
  %438 = vmatpush2.msra.mxu0 0.0
  %439 = vmatprep.subr.mxu0 0.0
  %440 = vmatpush2.msra.mxu0 0.0
  %441 = vmatprep.subr.mxu0 0.0
  %442 = vmatpush2.msra.mxu0 0.0
  %443 = vmatprep.subr.mxu0 0.0
  %444 = vmatpush2.msra.mxu0 0.0
  %445 = vmatprep.mubr.f32.mxu0 0.0
  %446 = vmatmul.mubr.f32.gmra.mxu0 %v166
  %v447 = vpop.f32.mrf.mxu0
  %v448 = vadd.f32 %v377, %v447
  %v449 = vpop.f32.mrf.mxu0
  %v450 = vadd.f32 %v379, %v449
  %451 = vdwg.mxu0
  %v452 = vld [vmem:[%s2] sm:$0xff]
  %454 = vset.pattern.permute.xlu0 0
  %455 = vperm.xlu0 %454, %v452
  %v456 = vpop.permute.xlu0 %455
  %v458 = vmul.f32 %v306, %v456
  %v459 = vmul.f32 %v308, %v456
  %v460 = vmul.f32 %v448, %v456
  %v461 = vmul.f32 %v450, %v456
  %v462 = vld [vmem:[%s3] sm:$0xff]
  %464 = vset.pattern.permute.xlu0 0
  %465 = vperm.xlu0 %464, %v462
  %v466 = vpop.permute.xlu0 %465
  %v468 = vadd.f32 %v458, %v466
  %v469 = vadd.f32 %v459, %v466
  %v470 = vadd.f32 %v460, %v466
  %v471 = vadd.f32 %v461, %v466
  %v472 = vsub.f32 0.0, %v468
  %v473 = vsub.f32 0.0, %v469
  %v474 = vsub.f32 0.0, %v470
  %v475 = vsub.f32 0.0, %v471
  %v476 = vmul.f32 %v472, 1.442695
  %v477 = vpow.pop %v476
  %v478 = vmul.f32 %v473, 1.442695
  %v479 = vpow.pop %v478
  %v480 = vmul.f32 %v474, 1.442695
  %v481 = vpow.pop %v480
  %v482 = vmul.f32 %v475, 1.442695
  %v483 = vpow.pop %v482
  %v484 = vadd.f32 %v477, 1.0
  %v485 = vadd.f32 %v479, 1.0
  %v486 = vadd.f32 %v481, 1.0
  %v487 = vadd.f32 %v483, 1.0
  %v488 = vrcp.pop %v484
  %v489 = vmul.f32 1.0, %v488
  %v490 = vrcp.pop %v485
  %v491 = vmul.f32 1.0, %v490
  %v492 = vrcp.pop %v486
  %v493 = vmul.f32 1.0, %v492
  %v494 = vrcp.pop %v487
  %v495 = vmul.f32 1.0, %v494
  %v496 = vmul.f32 %v468, %v489
  %v497 = vmul.f32 %v469, %v491
  %v498 = vmul.f32 %v470, %v493
  %v499 = vmul.f32 %v471, %v495
  %500 = vst [vmem:[%s4] sm:$0xff] %v496
  %501 = vst [vmem:[%s4 + $0x8] sm:$0xff] %v497
  %502 = vst [vmem:[%s4 + $0x10] sm:$0xff] %v498
  %503 = vst [vmem:[%s4 + $0x18] sm:$0xff] %v499
  // Predicated region
  $region18: #{autoencoder_forward.9} parent=0 // pred_check
    _
  $region19: #{autoencoder_forward.9} parent=0 // pred_check_branch
    %505 = sbr.rel (0) target = $region21
  $region20: #{autoencoder_forward.9} parent=0 // pred_region
    _
  $region21: #{autoencoder_forward.9} parent=0 // pred_fallthru
    _
  // Predicated region
  $region22: #{autoencoder_forward.9} parent=0 // pred_check
    _
  $region23: #{autoencoder_forward.9} parent=0 // pred_check_branch
    %507 = sbr.rel (0) target = $region25
  $region24: #{autoencoder_forward.9} parent=0 // pred_region
    _
  $region25: #{autoencoder_forward.9} parent=0 // pred_fallthru
    _

// kernel: autoencoder_forward.10
$region0: #{autoencoder_forward.10}
  #allocation0 [shape = 'u32[]', space=smem, size = 0x4, offset = 0x4, fixed_abs, tag = 'smem constant byte address 0x4 - core index']
  #allocation1 [shape = 'u32[144,128]{1,0:T(1,128)}', space=vmem, size = 0x12000, scoped, tag = 'internal scratch']
  %s0 = inlined_call_operand.vmem [shape: f32[72,1536], index: 0, kind: input, shape index: {}]
  %s1 = inlined_call_operand.vmem [shape: f32[8,72], index: 1, kind: input, shape index: {}]
  %s2 = inlined_call_operand.vmem [shape: f32[8,1], index: 2, kind: input, shape index: {}]
  %s3 = inlined_call_operand.vmem [shape: f32[8,1], index: 3, kind: input, shape index: {}]
  %s4 = inlined_call_operand.vmem [shape: f32[8,1536], index: 4, kind: output, shape index: {}]
  %s5 = sld [smem:[#allocation0]]
  $region72: #{autoencoder_forward.10} parent=0
    _
  %s7 = ssub.s32 1, %s5
  %s8 = scalar_select 0, %s7, %s5
  $region1: #{autoencoder_forward.10} parent=0
    #allocation2 [shape = 'u8[294912]{0}', space=vmem, size = 0x48000, scoped, tag = 'input window, operand 0']
    loop: start=0, step=1, limit=5
    $region2: #{autoencoder_forward.10} parent=1 // loop_pre_header
      _
    $region3: #{autoencoder_forward.10} parent=1 // loop_header
      %s10 = sphi 0, %s14
      %p11 = scmp.ge.s32.totalorder %s10, 5
      %s20 = sphi 0, %s22
      %s23 = sphi 0, %s20
      %s24 = sphi 0, %s23
      %s40 = sphi 0, %s24
      %s44 = sphi 0, %s44
      %s46 = sphi 0, %s44
      %s47 = sphi 0, %s46
      %s61 = sphi 0, %s47
      %s65 = sphi 0, %s65
      %s67 = sphi 0, %s65
      %s68 = sphi 0, %s67
      %s82 = sphi 0, %s68
      %s86 = sphi 0, %s86
      %s88 = sphi 0, %s86
      %s89 = sphi 0, %s88
      %s103 = sphi 0, %s89
      %s109 = sphi 0, %s111
      %s112 = sphi 0, %s109
      %s113 = sphi 0, %s112
      %s129 = sphi 0, %s113
    $region4: #{autoencoder_forward.10} parent=1 // loop_header_branch
      %13 = sbr.rel (%p11) target = $region8
    $region5: #{autoencoder_forward.10} parent=1 // loop_body
      %s15 = ssub.s32 %s10, 1
      %s16 = ssub.s32 %s10, 2
      %s17 = sadd.s32 %s10, 1
      %s18 = ssub.s32 %s10, %s17
      %p19 = scmp.eq.s32.totalorder %s18, 0
      %s21 = sadd.s32 %s20, 1
      %s22 = scalar_select %p19, %s20, %s21
      %p25 = pneg %p19
      %p26 = scmp.eq.s32.totalorder %s10, 2
      %p27 = por %p25, %p26
      %p28 = scmp.ne.s32.totalorder %s20, %s23
      %p29 = scmp.eq.s32.totalorder %s10, 0
      %p30 = por %p28, %p29
      %p31 = scmp.ne.s32.totalorder %s20, %s23
      %p32 = scmp.eq.s32.totalorder %s15, 2
      %p33 = por %p31, %p32
      %p34 = scmp.ne.s32.totalorder %s23, %s24
      %p35 = scmp.eq.s32.totalorder %s15, 0
      %p36 = por %p34, %p35
      %p37 = scmp.ne.s32.totalorder %s23, %s24
      %p38 = scmp.eq.s32.totalorder %s16, 2
      %p39 = por %p37, %p38
      %p41 = scmp.ne.s32.totalorder %s24, %s40
      %p42 = scmp.eq.s32.totalorder %s16, 0
      %p43 = por %p41, %p42
      %s45 = sadd.s32 %s44, 1
      %p48 = scmp.eq.s32.totalorder %s10, 2
      %p49 = scmp.ne.s32.totalorder %s44, %s46
      %p50 = scmp.eq.s32.totalorder %s10, 0
      %p51 = por %p49, %p50
      %p52 = scmp.ne.s32.totalorder %s44, %s46
      %p53 = scmp.eq.s32.totalorder %s15, 2
      %p54 = por %p52, %p53
      %p55 = scmp.ne.s32.totalorder %s46, %s47
      %p56 = scmp.eq.s32.totalorder %s15, 0
      %p57 = por %p55, %p56
      %p58 = scmp.ne.s32.totalorder %s46, %s47
      %p59 = scmp.eq.s32.totalorder %s16, 2
      %p60 = por %p58, %p59
      %p62 = scmp.ne.s32.totalorder %s47, %s61
      %p63 = scmp.eq.s32.totalorder %s16, 0
      %p64 = por %p62, %p63
      %s66 = sadd.s32 %s65, 1
      %p69 = scmp.eq.s32.totalorder %s10, 2
      %p70 = scmp.ne.s32.totalorder %s65, %s67
      %p71 = scmp.eq.s32.totalorder %s10, 0
      %p72 = por %p70, %p71
      %p73 = scmp.ne.s32.totalorder %s65, %s67
      %p74 = scmp.eq.s32.totalorder %s15, 2
      %p75 = por %p73, %p74
      %p76 = scmp.ne.s32.totalorder %s67, %s68
      %p77 = scmp.eq.s32.totalorder %s15, 0
      %p78 = por %p76, %p77
      %p79 = scmp.ne.s32.totalorder %s67, %s68
      %p80 = scmp.eq.s32.totalorder %s16, 2
      %p81 = por %p79, %p80
      %p83 = scmp.ne.s32.totalorder %s68, %s82
      %p84 = scmp.eq.s32.totalorder %s16, 0
      %p85 = por %p83, %p84
      %s87 = sadd.s32 %s86, 1
      %p90 = scmp.eq.s32.totalorder %s10, 2
      %p91 = scmp.ne.s32.totalorder %s86, %s88
      %p92 = scmp.eq.s32.totalorder %s10, 0
      %p93 = por %p91, %p92
      %p94 = scmp.ne.s32.totalorder %s86, %s88
      %p95 = scmp.eq.s32.totalorder %s15, 2
      %p96 = por %p94, %p95
      %p97 = scmp.ne.s32.totalorder %s88, %s89
      %p98 = scmp.eq.s32.totalorder %s15, 0
      %p99 = por %p97, %p98
      %p100 = scmp.ne.s32.totalorder %s88, %s89
      %p101 = scmp.eq.s32.totalorder %s16, 2
      %p102 = por %p100, %p101
      %p104 = scmp.ne.s32.totalorder %s89, %s103
      %p105 = scmp.eq.s32.totalorder %s16, 0
      %p106 = por %p104, %p105
      %s107 = ssub.s32 %s10, %s17
      %p108 = scmp.eq.s32.totalorder %s107, 0
      %s110 = sadd.s32 %s109, 1
      %s111 = scalar_select %p108, %s109, %s110
      %p114 = pneg %p108
      %p115 = scmp.eq.s32.totalorder %s10, 2
      %p116 = por %p114, %p115
      %p117 = scmp.ne.s32.totalorder %s109, %s112
      %p118 = scmp.eq.s32.totalorder %s10, 0
      %p119 = por %p117, %p118
      %p120 = scmp.ne.s32.totalorder %s109, %s112
      %p121 = scmp.eq.s32.totalorder %s15, 2
      %p122 = por %p120, %p121
      %p123 = scmp.ne.s32.totalorder %s112, %s113
      %p124 = scmp.eq.s32.totalorder %s15, 0
      %p125 = por %p123, %p124
      %p126 = scmp.ne.s32.totalorder %s112, %s113
      %p127 = scmp.eq.s32.totalorder %s16, 2
      %p128 = por %p126, %p127
      %p130 = scmp.ne.s32.totalorder %s113, %s129
      %p131 = scmp.eq.s32.totalorder %s16, 0
      %p132 = por %p130, %p131
      %p133 = scmp.le.s32.totalorder 1, %s10
      %p134 = scmp.lt.s32.totalorder %s10, 4
      %p135 = pnand %p133, %p134
      %p136 = pneg %p135
      // Predicated region
      $region9: #{autoencoder_forward.10} parent=5 // pred_check
        _
      $region10: #{autoencoder_forward.10} parent=5 // pred_check_branch
        %138 = sbr.rel (%p135) target = $region12
      $region11: #{autoencoder_forward.10} parent=5 // pred_region
        %s139 = ssub.s32 %s10, 1
        // Predicated region
        $region13: #{autoencoder_forward.10} parent=11 // pred_check
          %p140 = pneg %p57
        $region14: #{autoencoder_forward.10} parent=11 // pred_check_branch
          %142 = sbr.rel (%p140) target = $region16
        $region15: #{autoencoder_forward.10} parent=11 // pred_region
          _
        $region16: #{autoencoder_forward.10} parent=11 // pred_fallthru
          _
        // Predicated region
        $region17: #{autoencoder_forward.10} parent=11 // pred_check
          %p143 = pneg %p78
        $region18: #{autoencoder_forward.10} parent=11 // pred_check_branch
          %145 = sbr.rel (%p143) target = $region20
        $region19: #{autoencoder_forward.10} parent=11 // pred_region
          _
        $region20: #{autoencoder_forward.10} parent=11 // pred_fallthru
          _
        // Predicated region
        $region21: #{autoencoder_forward.10} parent=11 // pred_check
          %p146 = pneg %p99
        $region22: #{autoencoder_forward.10} parent=11 // pred_check_branch
          %148 = sbr.rel (%p146) target = $region24
        $region23: #{autoencoder_forward.10} parent=11 // pred_region
          _
        $region24: #{autoencoder_forward.10} parent=11 // pred_fallthru
          _
      $region12: #{autoencoder_forward.10} parent=5 // pred_fallthru
        _
      %p149 = scmp.lt.s32.totalorder %s10, 3
      // Predicated region
      $region25: #{autoencoder_forward.10} parent=5 // pred_check
        %p150 = pneg %p149
      $region26: #{autoencoder_forward.10} parent=5 // pred_check_branch
        %152 = sbr.rel (%p150) target = $region28
      $region27: #{autoencoder_forward.10} parent=5 // pred_region
        // Predicated region
        $region29: #{autoencoder_forward.10} parent=27 // pred_check
          %p153 = pneg %p30
        $region30: #{autoencoder_forward.10} parent=27 // pred_check_branch
          %155 = sbr.rel (%p153) target = $region32
        $region31: #{autoencoder_forward.10} parent=27 // pred_region
          %s156 = sand.u32 %s20, 1
          %s157 = sand.u32 %s20, 1
          %s158 = smul.addr %s157, 288
          %s159 = scalar_lea.vmem [#allocation2], %s158
          %s160 = smul.u32 4, %s10
          %s161 = smul.addr %s160, 8
          %s162 = scalar_lea.vmem %s0, %s161
          // Predicated region
          $region33: #{autoencoder_forward.10} parent=31 // pred_check
            _
          $region34: #{autoencoder_forward.10} parent=31 // pred_check_branch
            %164 = sbr.rel (0) target = $region36
          $region35: #{autoencoder_forward.10} parent=31 // pred_region
            // Predicated region
            $region37: #{autoencoder_forward.10} parent=35 // pred_check
              _
            $region38: #{autoencoder_forward.10} parent=35 // pred_check_branch
              %166 = sbr.rel (0) target = $region40
            $region39: #{autoencoder_forward.10} parent=35 // pred_region
              loop: start=0, step=1, limit=1
              $region41: #{autoencoder_forward.10} parent=39 // loop_pre_header
                _
              $region42: #{autoencoder_forward.10} parent=39 // loop_header
                %s168 = sphi 0, %s172
                %p169 = scmp.ge.s32.totalorder %s168, 1
                %s173 = sphi %s162, %s162
                %s174 = sphi %s159, %s159
              $region43: #{autoencoder_forward.10} parent=39 // loop_header_branch
                %171 = sbr.rel (%p169) target = $region47
              $region44: #{autoencoder_forward.10} parent=39 // loop_body
                %v175 = vld [vmem:[%s173] sm:$0xff]
                %176 = vst [vmem:[%s174] sm:$0xff] %v175
                %v177 = vld [vmem:[%s173 + $0x8] sm:$0xff]
                %178 = vst [vmem:[%s174 + $0x8] sm:$0xff] %v177
                %v179 = vld [vmem:[%s173 + $0x10] sm:$0xff]
                %180 = vst [vmem:[%s174 + $0x10] sm:$0xff] %v179
                %v181 = vld [vmem:[%s173 + $0x18] sm:$0xff]
                %182 = vst [vmem:[%s174 + $0x18] sm:$0xff] %v181
                %v183 = vld [vmem:[%s173 + $0x60] sm:$0xff]
                %184 = vst [vmem:[%s174 + $0x20] sm:$0xff] %v183
                %v185 = vld [vmem:[%s173 + $0x68] sm:$0xff]
                %186 = vst [vmem:[%s174 + $0x28] sm:$0xff] %v185
                %v187 = vld [vmem:[%s173 + $0x70] sm:$0xff]
                %188 = vst [vmem:[%s174 + $0x30] sm:$0xff] %v187
                %v189 = vld [vmem:[%s173 + $0x78] sm:$0xff]
                %190 = vst [vmem:[%s174 + $0x38] sm:$0xff] %v189
                %v191 = vld [vmem:[%s173 + $0xc0] sm:$0xff]
                %192 = vst [vmem:[%s174 + $0x40] sm:$0xff] %v191
                %v193 = vld [vmem:[%s173 + $0xc8] sm:$0xff]
                %194 = vst [vmem:[%s174 + $0x48] sm:$0xff] %v193
                %v195 = vld [vmem:[%s173 + $0xd0] sm:$0xff]
                %196 = vst [vmem:[%s174 + $0x50] sm:$0xff] %v195
                %v197 = vld [vmem:[%s173 + $0xd8] sm:$0xff]
                %198 = vst [vmem:[%s174 + $0x58] sm:$0xff] %v197
                %v199 = vld [vmem:[%s173 + $0x120] sm:$0xff]
                %200 = vst [vmem:[%s174 + $0x60] sm:$0xff] %v199
                %v201 = vld [vmem:[%s173 + $0x128] sm:$0xff]
                %202 = vst [vmem:[%s174 + $0x68] sm:$0xff] %v201
                %v203 = vld [vmem:[%s173 + $0x130] sm:$0xff]
                %204 = vst [vmem:[%s174 + $0x70] sm:$0xff] %v203
                %v205 = vld [vmem:[%s173 + $0x138] sm:$0xff]
                %206 = vst [vmem:[%s174 + $0x78] sm:$0xff] %v205
                %v207 = vld [vmem:[%s173 + $0x180] sm:$0xff]
                %208 = vst [vmem:[%s174 + $0x80] sm:$0xff] %v207
                %v209 = vld [vmem:[%s173 + $0x188] sm:$0xff]
                %210 = vst [vmem:[%s174 + $0x88] sm:$0xff] %v209
                %v211 = vld [vmem:[%s173 + $0x190] sm:$0xff]
                %212 = vst [vmem:[%s174 + $0x90] sm:$0xff] %v211
                %v213 = vld [vmem:[%s173 + $0x198] sm:$0xff]
                %214 = vst [vmem:[%s174 + $0x98] sm:$0xff] %v213
                %v215 = vld [vmem:[%s173 + $0x1e0] sm:$0xff]
                %216 = vst [vmem:[%s174 + $0xa0] sm:$0xff] %v215
                %v217 = vld [vmem:[%s173 + $0x1e8] sm:$0xff]
                %218 = vst [vmem:[%s174 + $0xa8] sm:$0xff] %v217
                %v219 = vld [vmem:[%s173 + $0x1f0] sm:$0xff]
                %220 = vst [vmem:[%s174 + $0xb0] sm:$0xff] %v219
                %v221 = vld [vmem:[%s173 + $0x1f8] sm:$0xff]
                %222 = vst [vmem:[%s174 + $0xb8] sm:$0xff] %v221
                %v223 = vld [vmem:[%s173 + $0x240] sm:$0xff]
                %224 = vst [vmem:[%s174 + $0xc0] sm:$0xff] %v223
                %v225 = vld [vmem:[%s173 + $0x248] sm:$0xff]
                %226 = vst [vmem:[%s174 + $0xc8] sm:$0xff] %v225
                %v227 = vld [vmem:[%s173 + $0x250] sm:$0xff]
                %228 = vst [vmem:[%s174 + $0xd0] sm:$0xff] %v227
                %v229 = vld [vmem:[%s173 + $0x258] sm:$0xff]
                %230 = vst [vmem:[%s174 + $0xd8] sm:$0xff] %v229
                %v231 = vld [vmem:[%s173 + $0x2a0] sm:$0xff]
                %232 = vst [vmem:[%s174 + $0xe0] sm:$0xff] %v231
                %v233 = vld [vmem:[%s173 + $0x2a8] sm:$0xff]
                %234 = vst [vmem:[%s174 + $0xe8] sm:$0xff] %v233
                %v235 = vld [vmem:[%s173 + $0x2b0] sm:$0xff]
                %236 = vst [vmem:[%s174 + $0xf0] sm:$0xff] %v235
                %v237 = vld [vmem:[%s173 + $0x2b8] sm:$0xff]
                %238 = vst [vmem:[%s174 + $0xf8] sm:$0xff] %v237
                %v239 = vld [vmem:[%s173 + $0x300] sm:$0xff]
                %240 = vst [vmem:[%s174 + $0x100] sm:$0xff] %v239
                %v241 = vld [vmem:[%s173 + $0x308] sm:$0xff]
                %242 = vst [vmem:[%s174 + $0x108] sm:$0xff] %v241
                %v243 = vld [vmem:[%s173 + $0x310] sm:$0xff]
                %244 = vst [vmem:[%s174 + $0x110] sm:$0xff] %v243
                %v245 = vld [vmem:[%s173 + $0x318] sm:$0xff]
                %246 = vst [vmem:[%s174 + $0x118] sm:$0xff] %v245
              $region45: #{autoencoder_forward.10} parent=39 // loop_footer
                %s172 = sadd.s32 1, %s168
              $region46: #{autoencoder_forward.10} parent=39 // loop_footer_branch
                %167 = sbr.rel target = $region42
              $region47: #{autoencoder_forward.10} parent=39 // loop_exit
                _
            $region40: #{autoencoder_forward.10} parent=35 // pred_fallthru
              _
            // Predicated region
            $region48: #{autoencoder_forward.10} parent=35 // pred_check
              _
            $region49: #{autoencoder_forward.10} parent=35 // pred_check_branch
              %248 = sbr.rel target = $region51
            $region50: #{autoencoder_forward.10} parent=35 // pred_region
              _
            $region51: #{autoencoder_forward.10} parent=35 // pred_fallthru
              _
          $region36: #{autoencoder_forward.10} parent=31 // pred_fallthru
            _
          %249 = vnop
        $region32: #{autoencoder_forward.10} parent=27 // pred_fallthru
          _
      $region28: #{autoencoder_forward.10} parent=5 // pred_fallthru
        _
      %p250 = scmp.le.s32.totalorder 1, %s10
      %p251 = scmp.lt.s32.totalorder %s10, 4
      %p252 = pnand %p250, %p251
      %p253 = pneg %p252
      // Predicated region
      $region52: #{autoencoder_forward.10} parent=5 // pred_check
        _
      $region53: #{autoencoder_forward.10} parent=5 // pred_check_branch
        %255 = sbr.rel (%p252) target = $region55
      $region54: #{autoencoder_forward.10} parent=5 // pred_region
        %s256 = ssub.s32 %s10, 1
        %s257 = sand.u32 %s23, 1
        %s258 = sand.u32 %s23, 1
        %s259 = smul.addr %s258, 288
        %s260 = scalar_lea.vmem [#allocation2], %s259
        // Predicated region
        $region56: #{autoencoder_forward.10} parent=54 // pred_check
          %p261 = pneg %p36
        $region57: #{autoencoder_forward.10} parent=54 // pred_check_branch
          %263 = sbr.rel (%p261) target = $region59
        $region58: #{autoencoder_forward.10} parent=54 // pred_region
          _
        $region59: #{autoencoder_forward.10} parent=54 // pred_fallthru
          _
        %s264 = sand.u32 %s23, 1
        %s265 = sand.u32 %s23, 1
        %s266 = smul.addr %s265, 288
        %s267 = scalar_lea.vmem [#allocation2], %s266
        %p268 = pneg %p36
        %p269 = pneg %p33
        %p270 = pneg %p57
        %p271 = pneg %p54
        %p272 = pneg %p78
        %p273 = pneg %p75
        %p274 = pneg %p99
        %p275 = pneg %p96
        %p276 = pneg %p125
        %p277 = pneg %p122
        %s278 = smul.u32 4, %s15
        %p279 = scmp.lt.s32.totalorder %s278, 11
        %s280 = scalar_select %p279, %s278, 11
        %s281 = smul.addr %s280, 8
        %s282 = scalar_lea.vmem %s4, %s281
        %s283 = smul.u32 4, %s15
        %s284 = smul.u32 4, %s15
        %p285 = scmp.lt.s32.totalorder %s284, 11
        %s286 = scalar_select %p285, %s284, 11
        %s287 = smul.addr %s286, 8
        %s288 = scalar_lea.vmem %s4, %s287
        %s289 = smul.u32 4, %s15
        %v290 = vld [vmem:[%s1] sm:$0xff]
        %v291 = vld [vmem:[%s260] sm:$0xff]
        %v292 = vld [vmem:[%s260 + $0x8] sm:$0xff]
        %v293 = vld [vmem:[%s260 + $0x10] sm:$0xff]
        %v294 = vld [vmem:[%s260 + $0x18] sm:$0xff]
        %v295 = vld [vmem:[%s260 + $0x20] sm:$0xff]
        %v296 = vld [vmem:[%s260 + $0x28] sm:$0xff]
        %v297 = vld [vmem:[%s260 + $0x30] sm:$0xff]
        %v298 = vld [vmem:[%s260 + $0x38] sm:$0xff]
        %v299 = vld [vmem:[%s260 + $0x40] sm:$0xff]
        %v300 = vld [vmem:[%s260 + $0x48] sm:$0xff]
        %v301 = vld [vmem:[%s260 + $0x50] sm:$0xff]
        %v302 = vld [vmem:[%s260 + $0x58] sm:$0xff]
        %v303 = vld [vmem:[%s260 + $0x60] sm:$0xff]
        %v304 = vld [vmem:[%s260 + $0x68] sm:$0xff]
        %v305 = vld [vmem:[%s260 + $0x70] sm:$0xff]
        %v306 = vld [vmem:[%s260 + $0x78] sm:$0xff]
        %v307 = vld [vmem:[%s260 + $0x80] sm:$0xff]
        %v308 = vld [vmem:[%s260 + $0x88] sm:$0xff]
        %v309 = vld [vmem:[%s260 + $0x90] sm:$0xff]
        %v310 = vld [vmem:[%s260 + $0x98] sm:$0xff]
        %v311 = vld [vmem:[%s260 + $0xa0] sm:$0xff]
        %v312 = vld [vmem:[%s260 + $0xa8] sm:$0xff]
        %v313 = vld [vmem:[%s260 + $0xb0] sm:$0xff]
        %v314 = vld [vmem:[%s260 + $0xb8] sm:$0xff]
        %v315 = vld [vmem:[%s260 + $0xc0] sm:$0xff]
        %v316 = vld [vmem:[%s260 + $0xc8] sm:$0xff]
        %v317 = vld [vmem:[%s260 + $0xd0] sm:$0xff]
        %v318 = vld [vmem:[%s260 + $0xd8] sm:$0xff]
        %v319 = vld [vmem:[%s260 + $0xe0] sm:$0xff]
        %v320 = vld [vmem:[%s260 + $0xe8] sm:$0xff]
        %v321 = vld [vmem:[%s260 + $0xf0] sm:$0xff]
        %v322 = vld [vmem:[%s260 + $0xf8] sm:$0xff]
        %v323 = vld [vmem:[%s260 + $0x100] sm:$0xff]
        %v324 = vld [vmem:[%s260 + $0x108] sm:$0xff]
        %v325 = vld [vmem:[%s260 + $0x110] sm:$0xff]
        %v326 = vld [vmem:[%s260 + $0x118] sm:$0xff]
        %vm327 = vcmask 588800
        %v329 = vsel %vm327, %v290, 0
        %331 = vmatprep.subr.mxu0 0.0
        %332 = vmatpush1.msra.mxu0 0.0
        %333 = vmatprep.subr.mxu0 0.0
        %334 = vmatpush1.msra.mxu0 0.0
        %335 = vmatprep.subr.mxu0 0.0
        %336 = vmatpush1.msra.mxu0 0.0
        %337 = vmatprep.subr.mxu0 0.0
        %338 = vmatpush1.msra.mxu0 0.0
        %339 = vmatprep.subr.mxu0 0.0
        %340 = vmatpush1.msra.mxu0 0.0
        %341 = vmatprep.subr.mxu0 0.0
        %342 = vmatpush1.msra.mxu0 0.0
        %343 = vmatprep.subr.mxu0 0.0
        %344 = vmatpush1.msra.mxu0 0.0
        %345 = vmatprep.subr.mxu0 %v324
        %346 = vmatpush1.msra.mxu0 %v323
        %347 = vmatprep.subr.mxu0 %v320
        %348 = vmatpush1.msra.mxu0 %v319
        %349 = vmatprep.subr.mxu0 %v316
        %350 = vmatpush1.msra.mxu0 %v315
        %351 = vmatprep.subr.mxu0 %v312
        %352 = vmatpush1.msra.mxu0 %v311
        %353 = vmatprep.subr.mxu0 %v308
        %354 = vmatpush1.msra.mxu0 %v307
        %355 = vmatprep.subr.mxu0 %v304
        %356 = vmatpush1.msra.mxu0 %v303
        %357 = vmatprep.subr.mxu0 %v300
        %358 = vmatpush1.msra.mxu0 %v299
        %359 = vmatprep.subr.mxu0 %v296
        %360 = vmatpush1.msra.mxu0 %v295
        %361 = vmatprep.subr.mxu0 %v292
        %362 = vmatpush1.msra.mxu0 %v291
        %363 = vmatprep.subr.mxu0 0.0
        %364 = vmatpush2.msra.mxu0 0.0
        %365 = vmatprep.subr.mxu0 0.0
        %366 = vmatpush2.msra.mxu0 0.0
        %367 = vmatprep.subr.mxu0 0.0
        %368 = vmatpush2.msra.mxu0 0.0
        %369 = vmatprep.subr.mxu0 0.0
        %370 = vmatpush2.msra.mxu0 0.0
        %371 = vmatprep.subr.mxu0 0.0
        %372 = vmatpush2.msra.mxu0 0.0
        %373 = vmatprep.subr.mxu0 0.0
        %374 = vmatpush2.msra.mxu0 0.0
        %375 = vmatprep.subr.mxu0 0.0
        %376 = vmatpush2.msra.mxu0 0.0
        %377 = vmatprep.subr.mxu0 0.0
        %378 = vmatpush2.msra.mxu0 0.0
        %379 = vmatprep.subr.mxu0 0.0
        %380 = vmatpush2.msra.mxu0 0.0
        %381 = vmatprep.subr.mxu0 0.0
        %382 = vmatpush2.msra.mxu0 0.0
        %383 = vmatprep.subr.mxu0 0.0
        %384 = vmatpush2.msra.mxu0 0.0
        %385 = vmatprep.subr.mxu0 0.0
        %386 = vmatpush2.msra.mxu0 0.0
        %387 = vmatprep.subr.mxu0 0.0
        %388 = vmatpush2.msra.mxu0 0.0
        %389 = vmatprep.subr.mxu0 0.0
        %390 = vmatpush2.msra.mxu0 0.0
        %391 = vmatprep.subr.mxu0 0.0
        %392 = vmatpush2.msra.mxu0 0.0
        %393 = vmatprep.subr.mxu0 0.0
        %394 = vmatpush2.msra.mxu0 0.0
        %395 = vmatprep.mubr.f32.mxu0 0.0
        %396 = vmatmul.mubr.f32.gmra.mxu0 %v329
        %v397 = vpop.f32.mrf.mxu0
        %v398 = vadd.f32 0.0, %v397
        %v399 = vpop.f32.mrf.mxu0
        %v400 = vadd.f32 0.0, %v399
        %401 = vdwg.mxu0
        %402 = vmatprep.subr.mxu0 0.0
        %403 = vmatpush1.msra.mxu0 0.0
        %404 = vmatprep.subr.mxu0 0.0
        %405 = vmatpush1.msra.mxu0 0.0
        %406 = vmatprep.subr.mxu0 0.0
        %407 = vmatpush1.msra.mxu0 0.0
        %408 = vmatprep.subr.mxu0 0.0
        %409 = vmatpush1.msra.mxu0 0.0
        %410 = vmatprep.subr.mxu0 0.0
        %411 = vmatpush1.msra.mxu0 0.0
        %412 = vmatprep.subr.mxu0 0.0
        %413 = vmatpush1.msra.mxu0 0.0
        %414 = vmatprep.subr.mxu0 0.0
        %415 = vmatpush1.msra.mxu0 0.0
        %416 = vmatprep.subr.mxu0 %v326
        %417 = vmatpush1.msra.mxu0 %v325
        %418 = vmatprep.subr.mxu0 %v322
        %419 = vmatpush1.msra.mxu0 %v321
        %420 = vmatprep.subr.mxu0 %v318
        %421 = vmatpush1.msra.mxu0 %v317
        %422 = vmatprep.subr.mxu0 %v314
        %423 = vmatpush1.msra.mxu0 %v313
        %424 = vmatprep.subr.mxu0 %v310
        %425 = vmatpush1.msra.mxu0 %v309
        %426 = vmatprep.subr.mxu0 %v306
        %427 = vmatpush1.msra.mxu0 %v305
        %428 = vmatprep.subr.mxu0 %v302
        %429 = vmatpush1.msra.mxu0 %v301
        %430 = vmatprep.subr.mxu0 %v298
        %431 = vmatpush1.msra.mxu0 %v297
        %432 = vmatprep.subr.mxu0 %v294
        %433 = vmatpush1.msra.mxu0 %v293
        %434 = vmatprep.subr.mxu0 0.0
        %435 = vmatpush2.msra.mxu0 0.0
        %436 = vmatprep.subr.mxu0 0.0
        %437 = vmatpush2.msra.mxu0 0.0
        %438 = vmatprep.subr.mxu0 0.0
        %439 = vmatpush2.msra.mxu0 0.0
        %440 = vmatprep.subr.mxu0 0.0
        %441 = vmatpush2.msra.mxu0 0.0
        %442 = vmatprep.subr.mxu0 0.0
        %443 = vmatpush2.msra.mxu0 0.0
        %444 = vmatprep.subr.mxu0 0.0
        %445 = vmatpush2.msra.mxu0 0.0
        %446 = vmatprep.subr.mxu0 0.0
        %447 = vmatpush2.msra.mxu0 0.0
        %448 = vmatprep.subr.mxu0 0.0
        %449 = vmatpush2.msra.mxu0 0.0
        %450 = vmatprep.subr.mxu0 0.0
        %451 = vmatpush2.msra.mxu0 0.0
        %452 = vmatprep.subr.mxu0 0.0
        %453 = vmatpush2.msra.mxu0 0.0
        %454 = vmatprep.subr.mxu0 0.0
        %455 = vmatpush2.msra.mxu0 0.0
        %456 = vmatprep.subr.mxu0 0.0
        %457 = vmatpush2.msra.mxu0 0.0
        %458 = vmatprep.subr.mxu0 0.0
        %459 = vmatpush2.msra.mxu0 0.0
        %460 = vmatprep.subr.mxu0 0.0
        %461 = vmatpush2.msra.mxu0 0.0
        %462 = vmatprep.subr.mxu0 0.0
        %463 = vmatpush2.msra.mxu0 0.0
        %464 = vmatprep.subr.mxu0 0.0
        %465 = vmatpush2.msra.mxu0 0.0
        %466 = vmatprep.mubr.f32.mxu0 0.0
        %467 = vmatmul.mubr.f32.gmra.mxu0 %v329
        %v468 = vpop.f32.mrf.mxu0
        %v469 = vadd.f32 0.0, %v468
        %v470 = vpop.f32.mrf.mxu0
        %v471 = vadd.f32 0.0, %v470
        %472 = vdwg.mxu0
        %v473 = vld [vmem:[%s2] sm:$0xff]
        %475 = vset.pattern.permute.xlu0 0
        %476 = vperm.xlu0 %475, %v473
        %v477 = vpop.permute.xlu0 %476
        %v479 = vmul.f32 %v398, %v477
        %v480 = vmul.f32 %v400, %v477
        %v481 = vmul.f32 %v469, %v477
        %v482 = vmul.f32 %v471, %v477
        %v483 = vld [vmem:[%s3] sm:$0xff]
        %485 = vset.pattern.permute.xlu0 0
        %486 = vperm.xlu0 %485, %v483
        %v487 = vpop.permute.xlu0 %486
        %v489 = vadd.f32 %v479, %v487
        %v490 = vadd.f32 %v480, %v487
        %v491 = vadd.f32 %v481, %v487
        %v492 = vadd.f32 %v482, %v487
        %v493 = vsub.f32 0.0, %v489
        %v494 = vsub.f32 0.0, %v490
        %v495 = vsub.f32 0.0, %v491
        %v496 = vsub.f32 0.0, %v492
        %v497 = vmul.f32 %v493, 1.442695
        %v498 = vpow.pop %v497
        %v499 = vmul.f32 %v494, 1.442695
        %v500 = vpow.pop %v499
        %v501 = vmul.f32 %v495, 1.442695
        %v502 = vpow.pop %v501
        %v503 = vmul.f32 %v496, 1.442695
        %v504 = vpow.pop %v503
        %v505 = vadd.f32 %v498, 1.0
        %v506 = vadd.f32 %v500, 1.0
        %v507 = vadd.f32 %v502, 1.0
        %v508 = vadd.f32 %v504, 1.0
        %v509 = vrcp.pop %v505
        %v510 = vmul.f32 1.0, %v509
        %v511 = vrcp.pop %v506
        %v512 = vmul.f32 1.0, %v511
        %v513 = vrcp.pop %v507
        %v514 = vmul.f32 1.0, %v513
        %v515 = vrcp.pop %v508
        %v516 = vmul.f32 1.0, %v515
        %v517 = vmul.f32 %v489, %v510
        %v518 = vmul.f32 %v490, %v512
        %v519 = vmul.f32 %v491, %v514
        %v520 = vmul.f32 %v492, %v516
        %521 = vst [vmem:[%s288] sm:$0xff] %v517
        %522 = vst [vmem:[%s288 + $0x8] sm:$0xff] %v518
        %523 = vst [vmem:[%s288 + $0x10] sm:$0xff] %v519
        %524 = vst [vmem:[%s288 + $0x18] sm:$0xff] %v520
        %s525 = smul.u32 4, %s15
        %p526 = scmp.lt.s32.totalorder %s525, 11
        %s527 = scalar_select %p526, %s525, 11
        %s528 = smul.addr %s527, 8
        %s529 = scalar_lea.vmem %s4, %s528
        // Predicated region
        $region60: #{autoencoder_forward.10} parent=54 // pred_check
          %p530 = pneg %p122
        $region61: #{autoencoder_forward.10} parent=54 // pred_check_branch
          %532 = sbr.rel (%p530) target = $region63
        $region62: #{autoencoder_forward.10} parent=54 // pred_region
          %s533 = smul.u32 4, %s15
        $region63: #{autoencoder_forward.10} parent=54 // pred_fallthru
          _
      $region55: #{autoencoder_forward.10} parent=5 // pred_fallthru
        _
      %p534 = scmp.le.s32.totalorder 2, %s10
      // Predicated region
      $region64: #{autoencoder_forward.10} parent=5 // pred_check
        %p535 = pneg %p534
      $region65: #{autoencoder_forward.10} parent=5 // pred_check_branch
        %537 = sbr.rel (%p535) target = $region67
      $region66: #{autoencoder_forward.10} parent=5 // pred_region
        %s538 = ssub.s32 %s10, 2
        // Predicated region
        $region68: #{autoencoder_forward.10} parent=66 // pred_check
          %p539 = pneg %p128
        $region69: #{autoencoder_forward.10} parent=66 // pred_check_branch
          %541 = sbr.rel (%p539) target = $region71
        $region70: #{autoencoder_forward.10} parent=66 // pred_region
          %s542 = smul.u32 4, %s16
          %p543 = scmp.lt.s32.totalorder %s542, 11
          %s544 = scalar_select %p543, %s542, 11
          %s545 = smul.addr %s544, 8
          %s546 = scalar_lea.vmem %s4, %s545
        $region71: #{autoencoder_forward.10} parent=66 // pred_fallthru
          _
      $region67: #{autoencoder_forward.10} parent=5 // pred_fallthru
        _
    $region6: #{autoencoder_forward.10} parent=1 // loop_footer
      %s14 = sadd.s32 1, %s10
    $region7: #{autoencoder_forward.10} parent=1 // loop_footer_branch
      %9 = sbr.rel target = $region3
    $region8: #{autoencoder_forward.10} parent=1 // loop_exit
      _

// kernel: autoencoder_forward.11
$region0: #{autoencoder_forward.11}
  #allocation0 [shape = 'u32[]', space=smem, size = 0x4, offset = 0x4, fixed_abs, tag = 'smem constant byte address 0x4 - core index']
  #allocation1 [shape = 'u32[144,128]{1,0:T(1,128)}', space=vmem, size = 0x12000, scoped, tag = 'internal scratch']
  %s0 = inlined_call_operand.vmem [shape: f32[36,2048], index: 0, kind: input, shape index: {}]
  %s1 = inlined_call_operand.vmem [shape: f32[8,36], index: 1, kind: input, shape index: {}]
  %s2 = inlined_call_operand.vmem [shape: f32[8,1], index: 2, kind: input, shape index: {}]
  %s3 = inlined_call_operand.vmem [shape: f32[8,1], index: 3, kind: input, shape index: {}]
  %s4 = inlined_call_operand.vmem [shape: f32[8,2048], index: 4, kind: output, shape index: {}]
  %s5 = sld [smem:[#allocation0]]
  $region72: #{autoencoder_forward.11} parent=0
    _
  %s7 = ssub.s32 1, %s5
  %s8 = scalar_select 0, %s7, %s5
  $region1: #{autoencoder_forward.11} parent=0
    #allocation2 [shape = 'u8[163840]{0}', space=vmem, size = 0x28000, scoped, tag = 'input window, operand 0']
    loop: start=0, step=1, limit=6
    $region2: #{autoencoder_forward.11} parent=1 // loop_pre_header
      _
    $region3: #{autoencoder_forward.11} parent=1 // loop_header
      %s10 = sphi 0, %s14
      %p11 = scmp.ge.s32.totalorder %s10, 6
      %s20 = sphi 0, %s22
      %s23 = sphi 0, %s20
      %s24 = sphi 0, %s23
      %s40 = sphi 0, %s24
      %s44 = sphi 0, %s44
      %s46 = sphi 0, %s44
      %s47 = sphi 0, %s46
      %s61 = sphi 0, %s47
      %s65 = sphi 0, %s65
      %s67 = sphi 0, %s65
      %s68 = sphi 0, %s67
      %s82 = sphi 0, %s68
      %s86 = sphi 0, %s86
      %s88 = sphi 0, %s86
      %s89 = sphi 0, %s88
      %s103 = sphi 0, %s89
      %s109 = sphi 0, %s111
      %s112 = sphi 0, %s109
      %s113 = sphi 0, %s112
      %s129 = sphi 0, %s113
    $region4: #{autoencoder_forward.11} parent=1 // loop_header_branch
      %13 = sbr.rel (%p11) target = $region8
    $region5: #{autoencoder_forward.11} parent=1 // loop_body
      %s15 = ssub.s32 %s10, 1
      %s16 = ssub.s32 %s10, 2
      %s17 = sadd.s32 %s10, 1
      %s18 = ssub.s32 %s10, %s17
      %p19 = scmp.eq.s32.totalorder %s18, 0
      %s21 = sadd.s32 %s20, 1
      %s22 = scalar_select %p19, %s20, %s21
      %p25 = pneg %p19
      %p26 = scmp.eq.s32.totalorder %s10, 3
      %p27 = por %p25, %p26
      %p28 = scmp.ne.s32.totalorder %s20, %s23
      %p29 = scmp.eq.s32.totalorder %s10, 0
      %p30 = por %p28, %p29
      %p31 = scmp.ne.s32.totalorder %s20, %s23
      %p32 = scmp.eq.s32.totalorder %s15, 3
      %p33 = por %p31, %p32
      %p34 = scmp.ne.s32.totalorder %s23, %s24
      %p35 = scmp.eq.s32.totalorder %s15, 0
      %p36 = por %p34, %p35
      %p37 = scmp.ne.s32.totalorder %s23, %s24
      %p38 = scmp.eq.s32.totalorder %s16, 3
      %p39 = por %p37, %p38
      %p41 = scmp.ne.s32.totalorder %s24, %s40
      %p42 = scmp.eq.s32.totalorder %s16, 0
      %p43 = por %p41, %p42
      %s45 = sadd.s32 %s44, 1
      %p48 = scmp.eq.s32.totalorder %s10, 3
      %p49 = scmp.ne.s32.totalorder %s44, %s46
      %p50 = scmp.eq.s32.totalorder %s10, 0
      %p51 = por %p49, %p50
      %p52 = scmp.ne.s32.totalorder %s44, %s46
      %p53 = scmp.eq.s32.totalorder %s15, 3
      %p54 = por %p52, %p53
      %p55 = scmp.ne.s32.totalorder %s46, %s47
      %p56 = scmp.eq.s32.totalorder %s15, 0
      %p57 = por %p55, %p56
      %p58 = scmp.ne.s32.totalorder %s46, %s47
      %p59 = scmp.eq.s32.totalorder %s16, 3
      %p60 = por %p58, %p59
      %p62 = scmp.ne.s32.totalorder %s47, %s61
      %p63 = scmp.eq.s32.totalorder %s16, 0
      %p64 = por %p62, %p63
      %s66 = sadd.s32 %s65, 1
      %p69 = scmp.eq.s32.totalorder %s10, 3
      %p70 = scmp.ne.s32.totalorder %s65, %s67
      %p71 = scmp.eq.s32.totalorder %s10, 0
      %p72 = por %p70, %p71
      %p73 = scmp.ne.s32.totalorder %s65, %s67
      %p74 = scmp.eq.s32.totalorder %s15, 3
      %p75 = por %p73, %p74
      %p76 = scmp.ne.s32.totalorder %s67, %s68
      %p77 = scmp.eq.s32.totalorder %s15, 0
      %p78 = por %p76, %p77
      %p79 = scmp.ne.s32.totalorder %s67, %s68
      %p80 = scmp.eq.s32.totalorder %s16, 3
      %p81 = por %p79, %p80
      %p83 = scmp.ne.s32.totalorder %s68, %s82
      %p84 = scmp.eq.s32.totalorder %s16, 0
      %p85 = por %p83, %p84
      %s87 = sadd.s32 %s86, 1
      %p90 = scmp.eq.s32.totalorder %s10, 3
      %p91 = scmp.ne.s32.totalorder %s86, %s88
      %p92 = scmp.eq.s32.totalorder %s10, 0
      %p93 = por %p91, %p92
      %p94 = scmp.ne.s32.totalorder %s86, %s88
      %p95 = scmp.eq.s32.totalorder %s15, 3
      %p96 = por %p94, %p95
      %p97 = scmp.ne.s32.totalorder %s88, %s89
      %p98 = scmp.eq.s32.totalorder %s15, 0
      %p99 = por %p97, %p98
      %p100 = scmp.ne.s32.totalorder %s88, %s89
      %p101 = scmp.eq.s32.totalorder %s16, 3
      %p102 = por %p100, %p101
      %p104 = scmp.ne.s32.totalorder %s89, %s103
      %p105 = scmp.eq.s32.totalorder %s16, 0
      %p106 = por %p104, %p105
      %s107 = ssub.s32 %s10, %s17
      %p108 = scmp.eq.s32.totalorder %s107, 0
      %s110 = sadd.s32 %s109, 1
      %s111 = scalar_select %p108, %s109, %s110
      %p114 = pneg %p108
      %p115 = scmp.eq.s32.totalorder %s10, 3
      %p116 = por %p114, %p115
      %p117 = scmp.ne.s32.totalorder %s109, %s112
      %p118 = scmp.eq.s32.totalorder %s10, 0
      %p119 = por %p117, %p118
      %p120 = scmp.ne.s32.totalorder %s109, %s112
      %p121 = scmp.eq.s32.totalorder %s15, 3
      %p122 = por %p120, %p121
      %p123 = scmp.ne.s32.totalorder %s112, %s113
      %p124 = scmp.eq.s32.totalorder %s15, 0
      %p125 = por %p123, %p124
      %p126 = scmp.ne.s32.totalorder %s112, %s113
      %p127 = scmp.eq.s32.totalorder %s16, 3
      %p128 = por %p126, %p127
      %p130 = scmp.ne.s32.totalorder %s113, %s129
      %p131 = scmp.eq.s32.totalorder %s16, 0
      %p132 = por %p130, %p131
      %p133 = scmp.le.s32.totalorder 1, %s10
      %p134 = scmp.lt.s32.totalorder %s10, 5
      %p135 = pnand %p133, %p134
      %p136 = pneg %p135
      // Predicated region
      $region9: #{autoencoder_forward.11} parent=5 // pred_check
        _
      $region10: #{autoencoder_forward.11} parent=5 // pred_check_branch
        %138 = sbr.rel (%p135) target = $region12
      $region11: #{autoencoder_forward.11} parent=5 // pred_region
        %s139 = ssub.s32 %s10, 1
        // Predicated region
        $region13: #{autoencoder_forward.11} parent=11 // pred_check
          %p140 = pneg %p57
        $region14: #{autoencoder_forward.11} parent=11 // pred_check_branch
          %142 = sbr.rel (%p140) target = $region16
        $region15: #{autoencoder_forward.11} parent=11 // pred_region
          _
        $region16: #{autoencoder_forward.11} parent=11 // pred_fallthru
          _
        // Predicated region
        $region17: #{autoencoder_forward.11} parent=11 // pred_check
          %p143 = pneg %p78
        $region18: #{autoencoder_forward.11} parent=11 // pred_check_branch
          %145 = sbr.rel (%p143) target = $region20
        $region19: #{autoencoder_forward.11} parent=11 // pred_region
          _
        $region20: #{autoencoder_forward.11} parent=11 // pred_fallthru
          _
        // Predicated region
        $region21: #{autoencoder_forward.11} parent=11 // pred_check
          %p146 = pneg %p99
        $region22: #{autoencoder_forward.11} parent=11 // pred_check_branch
          %148 = sbr.rel (%p146) target = $region24
        $region23: #{autoencoder_forward.11} parent=11 // pred_region
          _
        $region24: #{autoencoder_forward.11} parent=11 // pred_fallthru
          _
      $region12: #{autoencoder_forward.11} parent=5 // pred_fallthru
        _
      %p149 = scmp.lt.s32.totalorder %s10, 4
      // Predicated region
      $region25: #{autoencoder_forward.11} parent=5 // pred_check
        %p150 = pneg %p149
      $region26: #{autoencoder_forward.11} parent=5 // pred_check_branch
        %152 = sbr.rel (%p150) target = $region28
      $region27: #{autoencoder_forward.11} parent=5 // pred_region
        // Predicated region
        $region29: #{autoencoder_forward.11} parent=27 // pred_check
          %p153 = pneg %p30
        $region30: #{autoencoder_forward.11} parent=27 // pred_check_branch
          %155 = sbr.rel (%p153) target = $region32
        $region31: #{autoencoder_forward.11} parent=27 // pred_region
          %s156 = sand.u32 %s20, 1
          %s157 = sand.u32 %s20, 1
          %s158 = smul.addr %s157, 160
          %s159 = scalar_lea.vmem [#allocation2], %s158
          %s160 = smul.u32 4, %s10
          %s161 = smul.addr %s160, 8
          %s162 = scalar_lea.vmem %s0, %s161
          // Predicated region
          $region33: #{autoencoder_forward.11} parent=31 // pred_check
            _
          $region34: #{autoencoder_forward.11} parent=31 // pred_check_branch
            %164 = sbr.rel (0) target = $region36
          $region35: #{autoencoder_forward.11} parent=31 // pred_region
            // Predicated region
            $region37: #{autoencoder_forward.11} parent=35 // pred_check
              _
            $region38: #{autoencoder_forward.11} parent=35 // pred_check_branch
              %166 = sbr.rel (0) target = $region40
            $region39: #{autoencoder_forward.11} parent=35 // pred_region
              loop: start=0, step=1, limit=1
              $region41: #{autoencoder_forward.11} parent=39 // loop_pre_header
                _
              $region42: #{autoencoder_forward.11} parent=39 // loop_header
                %s168 = sphi 0, %s172
                %p169 = scmp.ge.s32.totalorder %s168, 1
                %s173 = sphi %s162, %s162
                %s174 = sphi %s159, %s159
              $region43: #{autoencoder_forward.11} parent=39 // loop_header_branch
                %171 = sbr.rel (%p169) target = $region47
              $region44: #{autoencoder_forward.11} parent=39 // loop_body
                %v175 = vld [vmem:[%s173] sm:$0xff]
                %176 = vst [vmem:[%s174] sm:$0xff] %v175
                %v177 = vld [vmem:[%s173 + $0x8] sm:$0xff]
                %178 = vst [vmem:[%s174 + $0x8] sm:$0xff] %v177
                %v179 = vld [vmem:[%s173 + $0x10] sm:$0xff]
                %180 = vst [vmem:[%s174 + $0x10] sm:$0xff] %v179
                %v181 = vld [vmem:[%s173 + $0x18] sm:$0xff]
                %182 = vst [vmem:[%s174 + $0x18] sm:$0xff] %v181
                %v183 = vld [vmem:[%s173 + $0x80] sm:$0xff]
                %184 = vst [vmem:[%s174 + $0x20] sm:$0xff] %v183
                %v185 = vld [vmem:[%s173 + $0x88] sm:$0xff]
                %186 = vst [vmem:[%s174 + $0x28] sm:$0xff] %v185
                %v187 = vld [vmem:[%s173 + $0x90] sm:$0xff]
                %188 = vst [vmem:[%s174 + $0x30] sm:$0xff] %v187
                %v189 = vld [vmem:[%s173 + $0x98] sm:$0xff]
                %190 = vst [vmem:[%s174 + $0x38] sm:$0xff] %v189
                %v191 = vld [vmem:[%s173 + $0x100] sm:$0xff]
                %192 = vst [vmem:[%s174 + $0x40] sm:$0xff] %v191
                %v193 = vld [vmem:[%s173 + $0x108] sm:$0xff]
                %194 = vst [vmem:[%s174 + $0x48] sm:$0xff] %v193
                %v195 = vld [vmem:[%s173 + $0x110] sm:$0xff]
                %196 = vst [vmem:[%s174 + $0x50] sm:$0xff] %v195
                %v197 = vld [vmem:[%s173 + $0x118] sm:$0xff]
                %198 = vst [vmem:[%s174 + $0x58] sm:$0xff] %v197
                %v199 = vld [vmem:[%s173 + $0x180] sm:$0xff]
                %200 = vst [vmem:[%s174 + $0x60] sm:$0xff] %v199
                %v201 = vld [vmem:[%s173 + $0x188] sm:$0xff]
                %202 = vst [vmem:[%s174 + $0x68] sm:$0xff] %v201
                %v203 = vld [vmem:[%s173 + $0x190] sm:$0xff]
                %204 = vst [vmem:[%s174 + $0x70] sm:$0xff] %v203
                %v205 = vld [vmem:[%s173 + $0x198] sm:$0xff]
                %206 = vst [vmem:[%s174 + $0x78] sm:$0xff] %v205
                %v207 = vld [vmem:[%s173 + $0x200] sm:$0xff]
                %208 = vst [vmem:[%s174 + $0x80] sm:$0xff] %v207
                %v209 = vld [vmem:[%s173 + $0x208] sm:$0xff]
                %210 = vst [vmem:[%s174 + $0x88] sm:$0xff] %v209
                %v211 = vld [vmem:[%s173 + $0x210] sm:$0xff]
                %212 = vst [vmem:[%s174 + $0x90] sm:$0xff] %v211
                %v213 = vld [vmem:[%s173 + $0x218] sm:$0xff]
                %214 = vst [vmem:[%s174 + $0x98] sm:$0xff] %v213
              $region45: #{autoencoder_forward.11} parent=39 // loop_footer
                %s172 = sadd.s32 1, %s168
              $region46: #{autoencoder_forward.11} parent=39 // loop_footer_branch
                %167 = sbr.rel target = $region42
              $region47: #{autoencoder_forward.11} parent=39 // loop_exit
                _
            $region40: #{autoencoder_forward.11} parent=35 // pred_fallthru
              _
            // Predicated region
            $region48: #{autoencoder_forward.11} parent=35 // pred_check
              _
            $region49: #{autoencoder_forward.11} parent=35 // pred_check_branch
              %216 = sbr.rel target = $region51
            $region50: #{autoencoder_forward.11} parent=35 // pred_region
              _
            $region51: #{autoencoder_forward.11} parent=35 // pred_fallthru
              _
          $region36: #{autoencoder_forward.11} parent=31 // pred_fallthru
            _
          %217 = vnop
        $region32: #{autoencoder_forward.11} parent=27 // pred_fallthru
          _
      $region28: #{autoencoder_forward.11} parent=5 // pred_fallthru
        _
      %p218 = scmp.le.s32.totalorder 1, %s10
      %p219 = scmp.lt.s32.totalorder %s10, 5
      %p220 = pnand %p218, %p219
      %p221 = pneg %p220
      // Predicated region
      $region52: #{autoencoder_forward.11} parent=5 // pred_check
        _
      $region53: #{autoencoder_forward.11} parent=5 // pred_check_branch
        %223 = sbr.rel (%p220) target = $region55
      $region54: #{autoencoder_forward.11} parent=5 // pred_region
        %s224 = ssub.s32 %s10, 1
        %s225 = sand.u32 %s23, 1
        %s226 = sand.u32 %s23, 1
        %s227 = smul.addr %s226, 160
        %s228 = scalar_lea.vmem [#allocation2], %s227
        // Predicated region
        $region56: #{autoencoder_forward.11} parent=54 // pred_check
          %p229 = pneg %p36
        $region57: #{autoencoder_forward.11} parent=54 // pred_check_branch
          %231 = sbr.rel (%p229) target = $region59
        $region58: #{autoencoder_forward.11} parent=54 // pred_region
          _
        $region59: #{autoencoder_forward.11} parent=54 // pred_fallthru
          _
        %s232 = sand.u32 %s23, 1
        %s233 = sand.u32 %s23, 1
        %s234 = smul.addr %s233, 160
        %s235 = scalar_lea.vmem [#allocation2], %s234
        %p236 = pneg %p36
        %p237 = pneg %p33
        %p238 = pneg %p57
        %p239 = pneg %p54
        %p240 = pneg %p78
        %p241 = pneg %p75
        %p242 = pneg %p99
        %p243 = pneg %p96
        %p244 = pneg %p125
        %p245 = pneg %p122
        %s246 = smul.u32 4, %s15
        %p247 = scmp.lt.s32.totalorder %s246, 15
        %s248 = scalar_select %p247, %s246, 15
        %s249 = smul.addr %s248, 8
        %s250 = scalar_lea.vmem %s4, %s249
        %s251 = smul.u32 4, %s15
        %s252 = smul.u32 4, %s15
        %p253 = scmp.lt.s32.totalorder %s252, 15
        %s254 = scalar_select %p253, %s252, 15
        %s255 = smul.addr %s254, 8
        %s256 = scalar_lea.vmem %s4, %s255
        %s257 = smul.u32 4, %s15
        %v258 = vld [vmem:[%s1] sm:$0xff]
        %v259 = vld [vmem:[%s228] sm:$0xff]
        %v260 = vld [vmem:[%s228 + $0x8] sm:$0xff]
        %v261 = vld [vmem:[%s228 + $0x10] sm:$0xff]
        %v262 = vld [vmem:[%s228 + $0x18] sm:$0xff]
        %v263 = vld [vmem:[%s228 + $0x20] sm:$0xff]
        %v264 = vld [vmem:[%s228 + $0x28] sm:$0xff]
        %v265 = vld [vmem:[%s228 + $0x30] sm:$0xff]
        %v266 = vld [vmem:[%s228 + $0x38] sm:$0xff]
        %v267 = vld [vmem:[%s228 + $0x40] sm:$0xff]
        %v268 = vld [vmem:[%s228 + $0x48] sm:$0xff]
        %v269 = vld [vmem:[%s228 + $0x50] sm:$0xff]
        %v270 = vld [vmem:[%s228 + $0x58] sm:$0xff]
        %v271 = vld [vmem:[%s228 + $0x60] sm:$0xff]
        %v272 = vld [vmem:[%s228 + $0x68] sm:$0xff]
        %v273 = vld [vmem:[%s228 + $0x70] sm:$0xff]
        %v274 = vld [vmem:[%s228 + $0x78] sm:$0xff]
        %v275 = vld [vmem:[%s228 + $0x80] sm:$0xf]
        %v276 = vld [vmem:[%s228 + $0x88] sm:$0xf]
        %v277 = vld [vmem:[%s228 + $0x90] sm:$0xf]
        %v278 = vld [vmem:[%s228 + $0x98] sm:$0xf]
        %vm279 = vcmask 293888
        %v281 = vsel %vm279, %v258, 0
        %vm283 = vcmask 1043456
        %v285 = vsel %vm283, %v275, 0
        %v288 = vsel %vm283, %v276, 0
        %v291 = vsel %vm283, %v277, 0
        %v294 = vsel %vm283, %v278, 0
        %296 = vmatprep.subr.mxu0 0.0
        %297 = vmatpush1.msra.mxu0 0.0
        %298 = vmatprep.subr.mxu0 0.0
        %299 = vmatpush1.msra.mxu0 0.0
        %300 = vmatprep.subr.mxu0 0.0
        %301 = vmatpush1.msra.mxu0 0.0
        %302 = vmatprep.subr.mxu0 0.0
        %303 = vmatpush1.msra.mxu0 0.0
        %304 = vmatprep.subr.mxu0 0.0
        %305 = vmatpush1.msra.mxu0 0.0
        %306 = vmatprep.subr.mxu0 0.0
        %307 = vmatpush1.msra.mxu0 0.0
        %308 = vmatprep.subr.mxu0 0.0
        %309 = vmatpush1.msra.mxu0 0.0
        %310 = vmatprep.subr.mxu0 0.0
        %311 = vmatpush1.msra.mxu0 0.0
        %312 = vmatprep.subr.mxu0 0.0
        %313 = vmatpush1.msra.mxu0 0.0
        %314 = vmatprep.subr.mxu0 0.0
        %315 = vmatpush1.msra.mxu0 0.0
        %316 = vmatprep.subr.mxu0 0.0
        %317 = vmatpush1.msra.mxu0 0.0
        %318 = vmatprep.subr.mxu0 %v288
        %319 = vmatpush1.msra.mxu0 %v285
        %320 = vmatprep.subr.mxu0 %v272
        %321 = vmatpush1.msra.mxu0 %v271
        %322 = vmatprep.subr.mxu0 %v268
        %323 = vmatpush1.msra.mxu0 %v267
        %324 = vmatprep.subr.mxu0 %v264
        %325 = vmatpush1.msra.mxu0 %v263
        %326 = vmatprep.subr.mxu0 %v260
        %327 = vmatpush1.msra.mxu0 %v259
        %328 = vmatprep.subr.mxu0 0.0
        %329 = vmatpush2.msra.mxu0 0.0
        %330 = vmatprep.subr.mxu0 0.0
        %331 = vmatpush2.msra.mxu0 0.0
        %332 = vmatprep.subr.mxu0 0.0
        %333 = vmatpush2.msra.mxu0 0.0
        %334 = vmatprep.subr.mxu0 0.0
        %335 = vmatpush2.msra.mxu0 0.0
        %336 = vmatprep.subr.mxu0 0.0
        %337 = vmatpush2.msra.mxu0 0.0
        %338 = vmatprep.subr.mxu0 0.0
        %339 = vmatpush2.msra.mxu0 0.0
        %340 = vmatprep.subr.mxu0 0.0
        %341 = vmatpush2.msra.mxu0 0.0
        %342 = vmatprep.subr.mxu0 0.0
        %343 = vmatpush2.msra.mxu0 0.0
        %344 = vmatprep.subr.mxu0 0.0
        %345 = vmatpush2.msra.mxu0 0.0
        %346 = vmatprep.subr.mxu0 0.0
        %347 = vmatpush2.msra.mxu0 0.0
        %348 = vmatprep.subr.mxu0 0.0
        %349 = vmatpush2.msra.mxu0 0.0
        %350 = vmatprep.subr.mxu0 0.0
        %351 = vmatpush2.msra.mxu0 0.0
        %352 = vmatprep.subr.mxu0 0.0
        %353 = vmatpush2.msra.mxu0 0.0
        %354 = vmatprep.subr.mxu0 0.0
        %355 = vmatpush2.msra.mxu0 0.0
        %356 = vmatprep.subr.mxu0 0.0
        %357 = vmatpush2.msra.mxu0 0.0
        %358 = vmatprep.subr.mxu0 0.0
        %359 = vmatpush2.msra.mxu0 0.0
        %360 = vmatprep.mubr.f32.mxu0 0.0
        %361 = vmatmul.mubr.f32.gmra.mxu0 %v281
        %v362 = vpop.f32.mrf.mxu0
        %v363 = vadd.f32 0.0, %v362
        %v364 = vpop.f32.mrf.mxu0
        %v365 = vadd.f32 0.0, %v364
        %366 = vdwg.mxu0
        %367 = vmatprep.subr.mxu0 0.0
        %368 = vmatpush1.msra.mxu0 0.0
        %369 = vmatprep.subr.mxu0 0.0
        %370 = vmatpush1.msra.mxu0 0.0
        %371 = vmatprep.subr.mxu0 0.0
        %372 = vmatpush1.msra.mxu0 0.0
        %373 = vmatprep.subr.mxu0 0.0
        %374 = vmatpush1.msra.mxu0 0.0
        %375 = vmatprep.subr.mxu0 0.0
        %376 = vmatpush1.msra.mxu0 0.0
        %377 = vmatprep.subr.mxu0 0.0
        %378 = vmatpush1.msra.mxu0 0.0
        %379 = vmatprep.subr.mxu0 0.0
        %380 = vmatpush1.msra.mxu0 0.0
        %381 = vmatprep.subr.mxu0 0.0
        %382 = vmatpush1.msra.mxu0 0.0
        %383 = vmatprep.subr.mxu0 0.0
        %384 = vmatpush1.msra.mxu0 0.0
        %385 = vmatprep.subr.mxu0 0.0
        %386 = vmatpush1.msra.mxu0 0.0
        %387 = vmatprep.subr.mxu0 0.0
        %388 = vmatpush1.msra.mxu0 0.0
        %389 = vmatprep.subr.mxu0 %v294
        %390 = vmatpush1.msra.mxu0 %v291
        %391 = vmatprep.subr.mxu0 %v274
        %392 = vmatpush1.msra.mxu0 %v273
        %393 = vmatprep.subr.mxu0 %v270
        %394 = vmatpush1.msra.mxu0 %v269
        %395 = vmatprep.subr.mxu0 %v266
        %396 = vmatpush1.msra.mxu0 %v265
        %397 = vmatprep.subr.mxu0 %v262
        %398 = vmatpush1.msra.mxu0 %v261
        %399 = vmatprep.subr.mxu0 0.0
        %400 = vmatpush2.msra.mxu0 0.0
        %401 = vmatprep.subr.mxu0 0.0
        %402 = vmatpush2.msra.mxu0 0.0
        %403 = vmatprep.subr.mxu0 0.0
        %404 = vmatpush2.msra.mxu0 0.0
        %405 = vmatprep.subr.mxu0 0.0
        %406 = vmatpush2.msra.mxu0 0.0
        %407 = vmatprep.subr.mxu0 0.0
        %408 = vmatpush2.msra.mxu0 0.0
        %409 = vmatprep.subr.mxu0 0.0
        %410 = vmatpush2.msra.mxu0 0.0
        %411 = vmatprep.subr.mxu0 0.0
        %412 = vmatpush2.msra.mxu0 0.0
        %413 = vmatprep.subr.mxu0 0.0
        %414 = vmatpush2.msra.mxu0 0.0
        %415 = vmatprep.subr.mxu0 0.0
        %416 = vmatpush2.msra.mxu0 0.0
        %417 = vmatprep.subr.mxu0 0.0
        %418 = vmatpush2.msra.mxu0 0.0
        %419 = vmatprep.subr.mxu0 0.0
        %420 = vmatpush2.msra.mxu0 0.0
        %421 = vmatprep.subr.mxu0 0.0
        %422 = vmatpush2.msra.mxu0 0.0
        %423 = vmatprep.subr.mxu0 0.0
        %424 = vmatpush2.msra.mxu0 0.0
        %425 = vmatprep.subr.mxu0 0.0
        %426 = vmatpush2.msra.mxu0 0.0
        %427 = vmatprep.subr.mxu0 0.0
        %428 = vmatpush2.msra.mxu0 0.0
        %429 = vmatprep.subr.mxu0 0.0
        %430 = vmatpush2.msra.mxu0 0.0
        %431 = vmatprep.mubr.f32.mxu0 0.0
        %432 = vmatmul.mubr.f32.gmra.mxu0 %v281
        %v433 = vpop.f32.mrf.mxu0
        %v434 = vadd.f32 0.0, %v433
        %v435 = vpop.f32.mrf.mxu0
        %v436 = vadd.f32 0.0, %v435
        %437 = vdwg.mxu0
        %v438 = vld [vmem:[%s2] sm:$0xff]
        %440 = vset.pattern.permute.xlu0 0
        %441 = vperm.xlu0 %440, %v438
        %v442 = vpop.permute.xlu0 %441
        %v444 = vmul.f32 %v363, %v442
        %v445 = vmul.f32 %v365, %v442
        %v446 = vmul.f32 %v434, %v442
        %v447 = vmul.f32 %v436, %v442
        %v448 = vld [vmem:[%s3] sm:$0xff]
        %450 = vset.pattern.permute.xlu0 0
        %451 = vperm.xlu0 %450, %v448
        %v452 = vpop.permute.xlu0 %451
        %v454 = vadd.f32 %v444, %v452
        %v455 = vadd.f32 %v445, %v452
        %v456 = vadd.f32 %v446, %v452
        %v457 = vadd.f32 %v447, %v452
        %v458 = vsub.f32 0.0, %v454
        %v459 = vsub.f32 0.0, %v455
        %v460 = vsub.f32 0.0, %v456
        %v461 = vsub.f32 0.0, %v457
        %v462 = vmul.f32 %v458, 1.442695
        %v463 = vpow.pop %v462
        %v464 = vmul.f32 %v459, 1.442695
        %v465 = vpow.pop %v464
        %v466 = vmul.f32 %v460, 1.442695
        %v467 = vpow.pop %v466
        %v468 = vmul.f32 %v461, 1.442695
        %v469 = vpow.pop %v468
        %v470 = vadd.f32 %v463, 1.0
        %v471 = vadd.f32 %v465, 1.0
        %v472 = vadd.f32 %v467, 1.0
        %v473 = vadd.f32 %v469, 1.0
        %v474 = vrcp.pop %v470
        %v475 = vmul.f32 1.0, %v474
        %v476 = vrcp.pop %v471
        %v477 = vmul.f32 1.0, %v476
        %v478 = vrcp.pop %v472
        %v479 = vmul.f32 1.0, %v478
        %v480 = vrcp.pop %v473
        %v481 = vmul.f32 1.0, %v480
        %482 = vst [vmem:[%s256] sm:$0xff] %v475
        %483 = vst [vmem:[%s256 + $0x8] sm:$0xff] %v477
        %484 = vst [vmem:[%s256 + $0x10] sm:$0xff] %v479
        %485 = vst [vmem:[%s256 + $0x18] sm:$0xff] %v481
        %s486 = smul.u32 4, %s15
        %p487 = scmp.lt.s32.totalorder %s486, 15
        %s488 = scalar_select %p487, %s486, 15
        %s489 = smul.addr %s488, 8
        %s490 = scalar_lea.vmem %s4, %s489
        // Predicated region
        $region60: #{autoencoder_forward.11} parent=54 // pred_check
          %p491 = pneg %p122
        $region61: #{autoencoder_forward.11} parent=54 // pred_check_branch
          %493 = sbr.rel (%p491) target = $region63
        $region62: #{autoencoder_forward.11} parent=54 // pred_region
          %s494 = smul.u32 4, %s15
        $region63: #{autoencoder_forward.11} parent=54 // pred_fallthru
          _
      $region55: #{autoencoder_forward.11} parent=5 // pred_fallthru
        _
      %p495 = scmp.le.s32.totalorder 2, %s10
      // Predicated region
      $region64: #{autoencoder_forward.11} parent=5 // pred_check
        %p496 = pneg %p495
      $region65: #{autoencoder_forward.11} parent=5 // pred_check_branch
        %498 = sbr.rel (%p496) target = $region67
      $region66: #{autoencoder_forward.11} parent=5 // pred_region
        %s499 = ssub.s32 %s10, 2
        // Predicated region
        $region68: #{autoencoder_forward.11} parent=66 // pred_check
          %p500 = pneg %p128
        $region69: #{autoencoder_forward.11} parent=66 // pred_check_branch
          %502 = sbr.rel (%p500) target = $region71
        $region70: #{autoencoder_forward.11} parent=66 // pred_region
          %s503 = smul.u32 4, %s16
          %p504 = scmp.lt.s32.totalorder %s503, 15
          %s505 = scalar_select %p504, %s503, 15
          %s506 = smul.addr %s505, 8
          %s507 = scalar_lea.vmem %s4, %s506
        $region71: #{autoencoder_forward.11} parent=66 // pred_fallthru
          _
      $region67: #{autoencoder_forward.11} parent=5 // pred_fallthru
        _
    $region6: #{autoencoder_forward.11} parent=1 // loop_footer
      %s14 = sadd.s32 1, %s10
    $region7: #{autoencoder_forward.11} parent=1 // loop_footer_branch
      %9 = sbr.rel target = $region3
    $region8: #{autoencoder_forward.11} parent=1 // loop_exit
      _

</llo_original>
